<compile_context>
chip_gen: v6e
topology: v6e:2x2x1
jax: 0.10.0
libtpu: 0.0.40
codegen_flags: <defaults>
</compile_context>

<pallas_src>
import math
from functools import partial

import jax
import jax.numpy as jnp
from jax.experimental import pallas as pl
from jax.experimental.pallas import tpu as pltpu

# ---- problem sizes (consistent with the module) ----
D_MODEL = 32
N_HEADS = 4
SAMPLE_SIZE = 16
PATCH_SIZE = 2
H_TOK = SAMPLE_SIZE // PATCH_SIZE      # 8
W_TOK = SAMPLE_SIZE // PATCH_SIZE      # 8
N_TOK = H_TOK * W_TOK                  # 64 tokens
KERNEL_SIZE = 7
BATCH = 2
D_AUG = 40                             # D + 1 (ones column) padded up to a multiple of 8


# ---------------- host-side constant construction (run once) ----------------
def block_diag_neighborhood_bias(batch, h, w, kernel, dtype=jnp.float32):
    """Additive (B*N, B*N) mask: 0 where key is inside the query's clamped kxk
    window AND in the same batch element, -1e30 otherwise."""
    k2 = kernel // 2
    yi, xi = jnp.arange(h), jnp.arange(w)
    sy = jnp.clip(yi - k2, 0, h - kernel)                    # window start per query row
    sx = jnp.clip(xi - k2, 0, w - kernel)                    # window start per query col
    vy = (yi[None, :] >= sy[:, None]) & (yi[None, :] < sy[:, None] + kernel)   # (Hq, Hk)
    vx = (xi[None, :] >= sx[:, None]) & (xi[None, :] < sx[:, None] + kernel)   # (Wq, Wk)
    valid = (vy[:, None, :, None] & vx[None, :, None, :]).reshape(h * w, h * w)
    n = h * w
    bid = jnp.arange(batch * n) // n
    same_batch = bid[:, None] == bid[None, :]
    valid_full = jnp.tile(valid, (batch, batch)) & same_batch
    return jnp.where(valid_full, 0.0, -1e30).astype(dtype)


def pack_params(p, *, n_heads, d_model, d_aug):
    """Fold per-head weight products so no kernel matmul has an 8-wide dim.

    With x' = [x | 1 | 0-pad] of width d_aug:
      scores_h = x' @ A_h @ x'^T        A_h = Aq_h @ Ak_h^T          (d_aug, d_aug)
      out     += (p_h @ x') @ C_h       C_h = Av_h @ Wo_h            (d_aug, d_model)
    where A{q,k,v}_h stack [W^T ; b ; 0-pad] along the input axis and the
    attention scale is folded into Aq.
    """
    d = d_model
    dh = d // n_heads
    scale = 1.0 / math.sqrt(dh)
    wqkv, bqkv = p["qkv_w"], p["qkv_b"]                      # (3d, d), (3d,)

    def head_wT(base):                                       # (n_heads, d, dh)
        return jnp.transpose(wqkv[base:base + d].reshape(n_heads, dh, d), (0, 2, 1))

    def head_b(base):                                        # (n_heads, 1, dh)
        return bqkv[base:base + d].reshape(n_heads, 1, dh)

    def augment(wT, b):                                      # (n_heads, d_aug, dh)
        pad = jnp.zeros((n_heads, d_aug - d - 1, dh), wT.dtype)
        return jnp.concatenate([wT, b, pad], axis=1)

    aq = augment(head_wT(0) * scale, head_b(0) * scale)
    ak = augment(head_wT(d), head_b(d))
    av = augment(head_wT(2 * d), head_b(2 * d))

    A = jnp.einsum("hik,hjk->hij", aq, ak)                   # (H, d_aug, d_aug)
    woT_h = p["proj_w"].T.reshape(n_heads, dh, d)            # (H, dh, d)
    C = jnp.einsum("hik,hkj->hij", av, woT_h)                # (H, d_aug, d)
    bo = p["proj_b"].reshape(1, d)                           # (1, d)
    return A, C, bo


# ---------------- Pallas kernel ----------------
def neighbour_attn_kernel(x_ref, bias_ref, a_ref, c_ref, bo_ref, o_ref, *, n_heads):
    x_aug = x_ref[...]                   # (B*N, D_AUG) f32, [x | 1 | 0]
    bias = bias_ref[...]                 # (B*N, B*N) block-diag neighbourhood mask
    acc = jnp.zeros((x_aug.shape[0], o_ref.shape[-1]), jnp.float32)

    # Keep the head loop unrolled: independent per-head chains let the scheduler
    # interleave MXU (score / pv), EUP (exp, recip) and XLU (max / sum) work.
    for h in range(n_heads):
        t = jnp.dot(x_aug, a_ref[h], preferred_element_type=jnp.float32)       # (BN, D_AUG)
        # NT dot_general: s = (x' A_h) x'^T  -- no explicit transpose materialised.
        s = jax.lax.dot_general(t, x_aug, (((1,), (1,)), ((), ())),
                                preferred_element_type=jnp.float32) + bias      # (BN, BN)
        s = s - jnp.max(s, axis=-1, keepdims=True)          # every row has >=49 valid keys
        p = jnp.exp(s)
        p = p * pl.reciprocal(jnp.sum(p, axis=-1, keepdims=True), approx=True)  # EUP vrcp
        pv = jnp.dot(p, x_aug, preferred_element_type=jnp.float32)              # (BN, D_AUG)
        acc = acc + jnp.dot(pv, c_ref[h], preferred_element_type=jnp.float32)   # (BN, D)

    o_ref[...] = (acc + bo_ref[...]).astype(o_ref.dtype)


# ---------------- builder: fold constants once, jit the per-call path ----------------
def make_neighbour_attn(params, *, n_heads=N_HEADS, h=H_TOK, w=W_TOK,
                        kernel=KERNEL_SIZE, batch=BATCH, d_model=D_MODEL, d_aug=D_AUG):
    A, C, bo = pack_params(params, n_heads=n_heads, d_model=d_model, d_aug=d_aug)
    bias = block_diag_neighborhood_bias(batch, h, w, kernel)
    n = h * w
    bn = batch * n

    cost = pl.CostEstimate(
        flops=2 * n_heads * (bn * d_aug * d_aug + 2 * bn * bn * d_aug + bn * d_aug * d_model),
        transcendentals=n_heads * bn * bn,
        bytes_accessed=4 * (bn * d_aug + bn * bn + n_heads * d_aug * (d_aug + d_model)
                            + bn * d_model),
    )

    attn_call = pl.pallas_call(
        partial(neighbour_attn_kernel, n_heads=n_heads),
        out_shape=jax.ShapeDtypeStruct((bn, d_model), jnp.float32),
        grid=(1,),                                          # single step; batch folded in rows
        in_specs=[
            pl.BlockSpec((bn, d_aug), lambda i: (0, 0)),            # augmented activations
            pl.BlockSpec((bn, bn), lambda i: (0, 0)),               # block-diag neighbourhood mask
            pl.BlockSpec((n_heads, d_aug, d_aug), lambda i: (0, 0, 0)),   # folded score weights A_h
            pl.BlockSpec((n_heads, d_aug, d_model), lambda i: (0, 0, 0)), # folded value/out weights C_h
            pl.BlockSpec((1, d_model), lambda i: (0, 0)),           # output bias
        ],
        out_specs=pl.BlockSpec((bn, d_model), lambda i: (0, 0)),
        compiler_params=pltpu.CompilerParams(dimension_semantics=("arbitrary",)),
        cost_estimate=cost,
    )

    @jax.jit
    def apply(x):
        B, N, D = x.shape
        x2 = x.reshape(B * N, D).astype(jnp.float32)
        aug = jnp.concatenate(
            [x2,
             jnp.ones((B * N, 1), jnp.float32),
             jnp.zeros((B * N, d_aug - D - 1), jnp.float32)], axis=-1)
        out = attn_call(aug, bias, A, C, bo)
        return out.reshape(B, N, D).astype(x.dtype)

    return apply


# ---------------- pure-JAX reference (same math, no Pallas) ----------------
def neighborhood_bias_single(h, w, kernel, dtype=jnp.float32):
    k2 = kernel // 2
    yi, xi = jnp.arange(h), jnp.arange(w)
    sy = jnp.clip(yi - k2, 0, h - kernel)
    sx = jnp.clip(xi - k2, 0, w - kernel)
    vy = (yi[None, :] >= sy[:, None]) & (yi[None, :] < sy[:, None] + kernel)
    vx = (xi[None, :] >= sx[:, None]) & (xi[None, :] < sx[:, None] + kernel)
    valid = (vy[:, None, :, None] & vx[None, :, None, :]).reshape(h * w, h * w)
    return jnp.where(valid, 0.0, -1e30).astype(dtype)


def neighbour_attn_ref(x, params, *, n_heads=N_HEADS, h=H_TOK, w=W_TOK, kernel=KERNEL_SIZE):
    B, N, D = x.shape
    dh = D // n_heads
    scale = 1.0 / math.sqrt(dh)
    qkv = x @ params["qkv_w"].T + params["qkv_b"]             # (B, N, 3D)
    q, k, v = jnp.split(qkv, 3, axis=-1)

    def split_heads(t):
        return t.reshape(B, N, n_heads, dh).transpose(0, 2, 1, 3)   # (B, H, N, dh)

    q, k, v = map(split_heads, (q, k, v))
    bias = neighborhood_bias_single(h, w, kernel)
    s = jnp.einsum("bhqd,bhkd->bhqk", q, k) * scale + bias
    p = jax.nn.softmax(s, axis=-1)
    o = jnp.einsum("bhqk,bhkd->bhqd", p, v)
    o = o.transpose(0, 2, 1, 3).reshape(B, N, D)
    return o @ params["proj_w"].T + params["proj_b"]


# ---------------- deterministic parameter init ----------------
def init_params(key, d):
    def linear(key, fan_out, fan_in):
        kw, kb = jax.random.split(key)
        bound = 1.0 / math.sqrt(fan_in)
        wt = jax.random.uniform(kw, (fan_out, fan_in), jnp.float32, -bound, bound)
        bs = jax.random.uniform(kb, (fan_out,), jnp.float32, -bound, bound)
        return wt, bs

    k1, k2 = jax.random.split(key)
    p = {}
    p["qkv_w"], p["qkv_b"] = linear(k1, 3 * d, d)    # fused qkv projection
    p["proj_w"], p["proj_b"] = linear(k2, d, d)      # output projection
    return p


if __name__ == "__main__":
    key = jax.random.PRNGKey(0)
    kx, kp = jax.random.split(key)
    x = jax.random.normal(kx, (BATCH, N_TOK, D_MODEL), jnp.float32)
    params = init_params(kp, D_MODEL)

    attn = make_neighbour_attn(params)               # host packing / mask built once here
    out = jax.block_until_ready(attn(x))

    ref = neighbour_attn_ref(x, params)
    assert out.shape == x.shape and out.dtype == x.dtype
    err = jnp.max(jnp.abs(out - ref))
    # Tolerance covers approx reciprocal (EUP vrcp) and host-folded weight-product
    # summation-order differences; all matmuls still accumulate in f32.
    assert jnp.allclose(out, ref, atol=5e-3, rtol=5e-3), f"max err {err}"
    print("KERNEL_OK")
</pallas_src>

<mosaic_0001>
module attributes {stable_mosaic.version = 11 : i64} {
  func.func @neighbour_attn_kernel(%arg0: i32, %arg1: memref<128x40xf32, #tpu.memory_space<vmem>>, %arg2: memref<128x128xf32, #tpu.memory_space<vmem>>, %arg3: memref<4x40x40xf32, #tpu.memory_space<vmem>>, %arg4: memref<4x40x32xf32, #tpu.memory_space<vmem>>, %arg5: memref<1x32xf32, #tpu.memory_space<vmem>>, %arg6: memref<128x32xf32, #tpu.memory_space<vmem>>) attributes {dimension_semantics = [#tpu.dimension_semantics<arbitrary>], iteration_bounds = array<i64: 1>, scalar_prefetch = 0 : i64, scratch_operands = 0 : i64, tpu.core_type = #tpu.core_type<tc>, window_params = [{pipeline_mode = #tpu.pipeline_mode<synchronous>, transform_indices = @transform_0, window_bounds = array<i64: 128, 40>}, {pipeline_mode = #tpu.pipeline_mode<synchronous>, transform_indices = @transform_1, window_bounds = array<i64: 128, 128>}, {pipeline_mode = #tpu.pipeline_mode<synchronous>, transform_indices = @transform_2, window_bounds = array<i64: 4, 40, 40>}, {pipeline_mode = #tpu.pipeline_mode<synchronous>, transform_indices = @transform_3, window_bounds = array<i64: 4, 40, 32>}, {pipeline_mode = #tpu.pipeline_mode<synchronous>, transform_indices = @transform_4, window_bounds = array<i64: 1, 32>}, {pipeline_mode = #tpu.pipeline_mode<synchronous>, transform_indices = @transform_5, window_bounds = array<i64: 128, 32>}]} {
    %c0 = arith.constant 0 : index
    %c0_0 = arith.constant 0 : index
    %0 = vector.load %arg1[%c0, %c0_0] : memref<128x40xf32, #tpu.memory_space<vmem>>, vector<128x40xf32>
    %c0_1 = arith.constant 0 : index
    %c0_2 = arith.constant 0 : index
    %1 = vector.load %arg2[%c0_1, %c0_2] : memref<128x128xf32, #tpu.memory_space<vmem>>, vector<128x128xf32>
    %cst = arith.constant 0.000000e+00 : f32
    %2 = vector.broadcast %cst : f32 to vector<128x32xf32>
    %c0_3 = arith.constant 0 : index
    %c0_4 = arith.constant 0 : index
    %c0_5 = arith.constant 0 : index
    %3 = vector.load %arg3[%c0_3, %c0_4, %c0_5] : memref<4x40x40xf32, #tpu.memory_space<vmem>>, vector<1x40x40xf32>
    %4 = vector.shape_cast %3 : vector<1x40x40xf32> to vector<40x40xf32>
    %cst_6 = arith.constant dense<0.000000e+00> : vector<128x40xf32>
    %5 = tpu.matmul %0, %4, %cst_6 {dimension_numbers = #tpu.dot_dimension_numbers<[1], [0], [0], [1], [0, 0, 1, 1], [], []>} : vector<128x40xf32>, vector<40x40xf32>, vector<128x40xf32> -> vector<128x40xf32>
    %cst_7 = arith.constant dense<0.000000e+00> : vector<128x128xf32>
    %6 = tpu.matmul %5, %0, %cst_7 {dimension_numbers = #tpu.dot_dimension_numbers<[1], [1], [0], [0], [0, 0, 1, 0], [], []>} : vector<128x40xf32>, vector<128x40xf32>, vector<128x128xf32> -> vector<128x128xf32>
    %7 = arith.addf %6, %1 : vector<128x128xf32>
    %cst_8 = arith.constant dense<0xFF800000> : vector<128xf32>
    %8 = vector.multi_reduction <maximumf>, %7, %cst_8 [1] : vector<128x128xf32> to vector<128xf32>
    %9 = vector.shape_cast %8 : vector<128xf32> to vector<128x1xf32>
    %10 = vector.broadcast %9 : vector<128x1xf32> to vector<128x128xf32>
    %11 = arith.subf %7, %10 : vector<128x128xf32>
    %12 = math.exp %11 : vector<128x128xf32>
    %cst_9 = arith.constant dense<0.000000e+00> : vector<128xf32>
    %13 = vector.multi_reduction <add>, %12, %cst_9 [1] : vector<128x128xf32> to vector<128xf32>
    %14 = vector.shape_cast %13 : vector<128xf32> to vector<128x1xf32>
    %15 = tpu.reciprocal %14 {approx = true} : vector<128x1xf32> -> vector<128x1xf32>
    %16 = vector.broadcast %15 : vector<128x1xf32> to vector<128x128xf32>
    %17 = arith.mulf %12, %16 : vector<128x128xf32>
    %cst_10 = arith.constant dense<0.000000e+00> : vector<128x40xf32>
    %18 = tpu.matmul %17, %0, %cst_10 {dimension_numbers = #tpu.dot_dimension_numbers<[1], [0], [0], [1], [0, 0, 1, 1], [], []>} : vector<128x128xf32>, vector<128x40xf32>, vector<128x40xf32> -> vector<128x40xf32>
    %c0_11 = arith.constant 0 : index
    %c0_12 = arith.constant 0 : index
    %c0_13 = arith.constant 0 : index
    %19 = vector.load %arg4[%c0_11, %c0_12, %c0_13] : memref<4x40x32xf32, #tpu.memory_space<vmem>>, vector<1x40x32xf32>
    %20 = vector.shape_cast %19 : vector<1x40x32xf32> to vector<40x32xf32>
    %cst_14 = arith.constant dense<0.000000e+00> : vector<128x32xf32>
    %21 = tpu.matmul %18, %20, %cst_14 {dimension_numbers = #tpu.dot_dimension_numbers<[1], [0], [0], [1], [0, 0, 1, 1], [], []>} : vector<128x40xf32>, vector<40x32xf32>, vector<128x32xf32> -> vector<128x32xf32>
    %22 = arith.addf %2, %21 : vector<128x32xf32>
    %c1 = arith.constant 1 : index
    %c0_15 = arith.constant 0 : index
    %c0_16 = arith.constant 0 : index
    %23 = vector.load %arg3[%c1, %c0_15, %c0_16] : memref<4x40x40xf32, #tpu.memory_space<vmem>>, vector<1x40x40xf32>
    %24 = vector.shape_cast %23 : vector<1x40x40xf32> to vector<40x40xf32>
    %cst_17 = arith.constant dense<0.000000e+00> : vector<128x40xf32>
    %25 = tpu.matmul %0, %24, %cst_17 {dimension_numbers = #tpu.dot_dimension_numbers<[1], [0], [0], [1], [0, 0, 1, 1], [], []>} : vector<128x40xf32>, vector<40x40xf32>, vector<128x40xf32> -> vector<128x40xf32>
    %cst_18 = arith.constant dense<0.000000e+00> : vector<128x128xf32>
    %26 = tpu.matmul %25, %0, %cst_18 {dimension_numbers = #tpu.dot_dimension_numbers<[1], [1], [0], [0], [0, 0, 1, 0], [], []>} : vector<128x40xf32>, vector<128x40xf32>, vector<128x128xf32> -> vector<128x128xf32>
    %27 = arith.addf %26, %1 : vector<128x128xf32>
    %cst_19 = arith.constant dense<0xFF800000> : vector<128xf32>
    %28 = vector.multi_reduction <maximumf>, %27, %cst_19 [1] : vector<128x128xf32> to vector<128xf32>
    %29 = vector.shape_cast %28 : vector<128xf32> to vector<128x1xf32>
    %30 = vector.broadcast %29 : vector<128x1xf32> to vector<128x128xf32>
    %31 = arith.subf %27, %30 : vector<128x128xf32>
    %32 = math.exp %31 : vector<128x128xf32>
    %cst_20 = arith.constant dense<0.000000e+00> : vector<128xf32>
    %33 = vector.multi_reduction <add>, %32, %cst_20 [1] : vector<128x128xf32> to vector<128xf32>
    %34 = vector.shape_cast %33 : vector<128xf32> to vector<128x1xf32>
    %35 = tpu.reciprocal %34 {approx = true} : vector<128x1xf32> -> vector<128x1xf32>
    %36 = vector.broadcast %35 : vector<128x1xf32> to vector<128x128xf32>
    %37 = arith.mulf %32, %36 : vector<128x128xf32>
    %cst_21 = arith.constant dense<0.000000e+00> : vector<128x40xf32>
    %38 = tpu.matmul %37, %0, %cst_21 {dimension_numbers = #tpu.dot_dimension_numbers<[1], [0], [0], [1], [0, 0, 1, 1], [], []>} : vector<128x128xf32>, vector<128x40xf32>, vector<128x40xf32> -> vector<128x40xf32>
    %c1_22 = arith.constant 1 : index
    %c0_23 = arith.constant 0 : index
    %c0_24 = arith.constant 0 : index
    %39 = vector.load %arg4[%c1_22, %c0_23, %c0_24] : memref<4x40x32xf32, #tpu.memory_space<vmem>>, vector<1x40x32xf32>
    %40 = vector.shape_cast %39 : vector<1x40x32xf32> to vector<40x32xf32>
    %cst_25 = arith.constant dense<0.000000e+00> : vector<128x32xf32>
    %41 = tpu.matmul %38, %40, %cst_25 {dimension_numbers = #tpu.dot_dimension_numbers<[1], [0], [0], [1], [0, 0, 1, 1], [], []>} : vector<128x40xf32>, vector<40x32xf32>, vector<128x32xf32> -> vector<128x32xf32>
    %42 = arith.addf %22, %41 : vector<128x32xf32>
    %c2 = arith.constant 2 : index
    %c0_26 = arith.constant 0 : index
    %c0_27 = arith.constant 0 : index
    %43 = vector.load %arg3[%c2, %c0_26, %c0_27] : memref<4x40x40xf32, #tpu.memory_space<vmem>>, vector<1x40x40xf32>
    %44 = vector.shape_cast %43 : vector<1x40x40xf32> to vector<40x40xf32>
    %cst_28 = arith.constant dense<0.000000e+00> : vector<128x40xf32>
    %45 = tpu.matmul %0, %44, %cst_28 {dimension_numbers = #tpu.dot_dimension_numbers<[1], [0], [0], [1], [0, 0, 1, 1], [], []>} : vector<128x40xf32>, vector<40x40xf32>, vector<128x40xf32> -> vector<128x40xf32>
    %cst_29 = arith.constant dense<0.000000e+00> : vector<128x128xf32>
    %46 = tpu.matmul %45, %0, %cst_29 {dimension_numbers = #tpu.dot_dimension_numbers<[1], [1], [0], [0], [0, 0, 1, 0], [], []>} : vector<128x40xf32>, vector<128x40xf32>, vector<128x128xf32> -> vector<128x128xf32>
    %47 = arith.addf %46, %1 : vector<128x128xf32>
    %cst_30 = arith.constant dense<0xFF800000> : vector<128xf32>
    %48 = vector.multi_reduction <maximumf>, %47, %cst_30 [1] : vector<128x128xf32> to vector<128xf32>
    %49 = vector.shape_cast %48 : vector<128xf32> to vector<128x1xf32>
    %50 = vector.broadcast %49 : vector<128x1xf32> to vector<128x128xf32>
    %51 = arith.subf %47, %50 : vector<128x128xf32>
    %52 = math.exp %51 : vector<128x128xf32>
    %cst_31 = arith.constant dense<0.000000e+00> : vector<128xf32>
    %53 = vector.multi_reduction <add>, %52, %cst_31 [1] : vector<128x128xf32> to vector<128xf32>
    %54 = vector.shape_cast %53 : vector<128xf32> to vector<128x1xf32>
    %55 = tpu.reciprocal %54 {approx = true} : vector<128x1xf32> -> vector<128x1xf32>
    %56 = vector.broadcast %55 : vector<128x1xf32> to vector<128x128xf32>
    %57 = arith.mulf %52, %56 : vector<128x128xf32>
    %cst_32 = arith.constant dense<0.000000e+00> : vector<128x40xf32>
    %58 = tpu.matmul %57, %0, %cst_32 {dimension_numbers = #tpu.dot_dimension_numbers<[1], [0], [0], [1], [0, 0, 1, 1], [], []>} : vector<128x128xf32>, vector<128x40xf32>, vector<128x40xf32> -> vector<128x40xf32>
    %c2_33 = arith.constant 2 : index
    %c0_34 = arith.constant 0 : index
    %c0_35 = arith.constant 0 : index
    %59 = vector.load %arg4[%c2_33, %c0_34, %c0_35] : memref<4x40x32xf32, #tpu.memory_space<vmem>>, vector<1x40x32xf32>
    %60 = vector.shape_cast %59 : vector<1x40x32xf32> to vector<40x32xf32>
    %cst_36 = arith.constant dense<0.000000e+00> : vector<128x32xf32>
    %61 = tpu.matmul %58, %60, %cst_36 {dimension_numbers = #tpu.dot_dimension_numbers<[1], [0], [0], [1], [0, 0, 1, 1], [], []>} : vector<128x40xf32>, vector<40x32xf32>, vector<128x32xf32> -> vector<128x32xf32>
    %62 = arith.addf %42, %61 : vector<128x32xf32>
    %c3 = arith.constant 3 : index
    %c0_37 = arith.constant 0 : index
    %c0_38 = arith.constant 0 : index
    %63 = vector.load %arg3[%c3, %c0_37, %c0_38] : memref<4x40x40xf32, #tpu.memory_space<vmem>>, vector<1x40x40xf32>
    %64 = vector.shape_cast %63 : vector<1x40x40xf32> to vector<40x40xf32>
    %cst_39 = arith.constant dense<0.000000e+00> : vector<128x40xf32>
    %65 = tpu.matmul %0, %64, %cst_39 {dimension_numbers = #tpu.dot_dimension_numbers<[1], [0], [0], [1], [0, 0, 1, 1], [], []>} : vector<128x40xf32>, vector<40x40xf32>, vector<128x40xf32> -> vector<128x40xf32>
    %cst_40 = arith.constant dense<0.000000e+00> : vector<128x128xf32>
    %66 = tpu.matmul %65, %0, %cst_40 {dimension_numbers = #tpu.dot_dimension_numbers<[1], [1], [0], [0], [0, 0, 1, 0], [], []>} : vector<128x40xf32>, vector<128x40xf32>, vector<128x128xf32> -> vector<128x128xf32>
    %67 = arith.addf %66, %1 : vector<128x128xf32>
    %cst_41 = arith.constant dense<0xFF800000> : vector<128xf32>
    %68 = vector.multi_reduction <maximumf>, %67, %cst_41 [1] : vector<128x128xf32> to vector<128xf32>
    %69 = vector.shape_cast %68 : vector<128xf32> to vector<128x1xf32>
    %70 = vector.broadcast %69 : vector<128x1xf32> to vector<128x128xf32>
    %71 = arith.subf %67, %70 : vector<128x128xf32>
    %72 = math.exp %71 : vector<128x128xf32>
    %cst_42 = arith.constant dense<0.000000e+00> : vector<128xf32>
    %73 = vector.multi_reduction <add>, %72, %cst_42 [1] : vector<128x128xf32> to vector<128xf32>
    %74 = vector.shape_cast %73 : vector<128xf32> to vector<128x1xf32>
    %75 = tpu.reciprocal %74 {approx = true} : vector<128x1xf32> -> vector<128x1xf32>
    %76 = vector.broadcast %75 : vector<128x1xf32> to vector<128x128xf32>
    %77 = arith.mulf %72, %76 : vector<128x128xf32>
    %cst_43 = arith.constant dense<0.000000e+00> : vector<128x40xf32>
    %78 = tpu.matmul %77, %0, %cst_43 {dimension_numbers = #tpu.dot_dimension_numbers<[1], [0], [0], [1], [0, 0, 1, 1], [], []>} : vector<128x128xf32>, vector<128x40xf32>, vector<128x40xf32> -> vector<128x40xf32>
    %c3_44 = arith.constant 3 : index
    %c0_45 = arith.constant 0 : index
    %c0_46 = arith.constant 0 : index
    %79 = vector.load %arg4[%c3_44, %c0_45, %c0_46] : memref<4x40x32xf32, #tpu.memory_space<vmem>>, vector<1x40x32xf32>
    %80 = vector.shape_cast %79 : vector<1x40x32xf32> to vector<40x32xf32>
    %cst_47 = arith.constant dense<0.000000e+00> : vector<128x32xf32>
    %81 = tpu.matmul %78, %80, %cst_47 {dimension_numbers = #tpu.dot_dimension_numbers<[1], [0], [0], [1], [0, 0, 1, 1], [], []>} : vector<128x40xf32>, vector<40x32xf32>, vector<128x32xf32> -> vector<128x32xf32>
    %82 = arith.addf %62, %81 : vector<128x32xf32>
    %c0_48 = arith.constant 0 : index
    %c0_49 = arith.constant 0 : index
    %83 = vector.load %arg5[%c0_48, %c0_49] : memref<1x32xf32, #tpu.memory_space<vmem>>, vector<1x32xf32>
    %84 = vector.broadcast %83 : vector<1x32xf32> to vector<128x32xf32>
    %85 = arith.addf %82, %84 : vector<128x32xf32>
    %c0_50 = arith.constant 0 : index
    %c0_51 = arith.constant 0 : index
    %86 = vector.load %arg6[%c0_50, %c0_51] : memref<128x32xf32, #tpu.memory_space<vmem>>, vector<128x32xf32>
    tpu.vector_store %arg6[%c0_50, %c0_51], %85 {strides = array<i32>} : memref<128x32xf32, #tpu.memory_space<vmem>>, vector<128x32xf32>,
    return
  }
  func.func @transform_0(%arg0: i32) -> (i32, i32) {
    %c0_i32 = arith.constant 0 : i32
    %c0_i32_0 = arith.constant 0 : i32
    %c0_i32_1 = arith.constant 0 : i32
    return %c0_i32, %c0_i32_0 : i32, i32
  }
  func.func @transform_1(%arg0: i32) -> (i32, i32) {
    %c0_i32 = arith.constant 0 : i32
    %c0_i32_0 = arith.constant 0 : i32
    %c0_i32_1 = arith.constant 0 : i32
    return %c0_i32, %c0_i32_0 : i32, i32
  }
  func.func @transform_2(%arg0: i32) -> (i32, i32, i32) {
    %c0_i32 = arith.constant 0 : i32
    %c0_i32_0 = arith.constant 0 : i32
    %c0_i32_1 = arith.constant 0 : i32
    %c0_i32_2 = arith.constant 0 : i32
    return %c0_i32, %c0_i32_0, %c0_i32_1 : i32, i32, i32
  }
  func.func @transform_3(%arg0: i32) -> (i32, i32, i32) {
    %c0_i32 = arith.constant 0 : i32
    %c0_i32_0 = arith.constant 0 : i32
    %c0_i32_1 = arith.constant 0 : i32
    %c0_i32_2 = arith.constant 0 : i32
    return %c0_i32, %c0_i32_0, %c0_i32_1 : i32, i32, i32
  }
  func.func @transform_4(%arg0: i32) -> (i32, i32) {
    %c0_i32 = arith.constant 0 : i32
    %c0_i32_0 = arith.constant 0 : i32
    %c0_i32_1 = arith.constant 0 : i32
    return %c0_i32, %c0_i32_0 : i32, i32
  }
  func.func @transform_5(%arg0: i32) -> (i32, i32) {
    %c0_i32 = arith.constant 0 : i32
    %c0_i32_0 = arith.constant 0 : i32
    %c0_i32_1 = arith.constant 0 : i32
    return %c0_i32, %c0_i32_0 : i32, i32
  }
}

</mosaic_0001>

<llo_original>
// kernel: apply.1
$region0: #{apply.1}
  #allocation0 [shape = 'u32[]', space=smem, size = 0x4, offset = 0x4, fixed_abs, tag = 'smem constant byte address 0x4 - core index']
  #allocation1 [shape = 'u32[144,128]{1,0:T(1,128)}', space=vmem, size = 0x12000, scoped, tag = 'internal scratch']
  %s0 = inlined_call_operand.vmem [shape: f32[128,40], index: 0, kind: input, shape index: {}]
  %s1 = inlined_call_operand.vmem [shape: f32[128,128], index: 1, kind: input, shape index: {}]
  %s2 = inlined_call_operand.vmem [shape: f32[4,40,40], index: 2, kind: input, shape index: {}]
  %s3 = inlined_call_operand.vmem [shape: f32[4,40,32], index: 3, kind: input, shape index: {}]
  %s4 = inlined_call_operand.vmem [shape: f32[1,32], index: 4, kind: input, shape index: {}]
  %s5 = inlined_call_operand.vmem [shape: f32[128,32], index: 5, kind: output, shape index: {}]
  %s6 = sld [smem:[#allocation0]]
  $region30: #{apply.1} parent=0
    _
  %s8 = ssub.s32 1, %s6
  %s9 = scalar_select 0, %s8, %s6
  // Predicated region
  $region2: #{apply.1} parent=0 // pred_check
    _
  $region3: #{apply.1} parent=0 // pred_check_branch
    %11 = sbr.rel (0) target = $region5
  $region4: #{apply.1} parent=0 // pred_region
    _
  $region5: #{apply.1} parent=0 // pred_fallthru
    _
  // Predicated region
  $region6: #{apply.1} parent=0 // pred_check
    _
  $region7: #{apply.1} parent=0 // pred_check_branch
    %13 = sbr.rel (0) target = $region9
  $region8: #{apply.1} parent=0 // pred_region
    _
  $region9: #{apply.1} parent=0 // pred_fallthru
    _
  // Predicated region
  $region10: #{apply.1} parent=0 // pred_check
    _
  $region11: #{apply.1} parent=0 // pred_check_branch
    %15 = sbr.rel (0) target = $region13
  $region12: #{apply.1} parent=0 // pred_region
    _
  $region13: #{apply.1} parent=0 // pred_fallthru
    _
  // Predicated region
  $region14: #{apply.1} parent=0 // pred_check
    _
  $region15: #{apply.1} parent=0 // pred_check_branch
    %17 = sbr.rel (0) target = $region17
  $region16: #{apply.1} parent=0 // pred_region
    _
  $region17: #{apply.1} parent=0 // pred_fallthru
    _
  // Predicated region
  $region18: #{apply.1} parent=0 // pred_check
    _
  $region19: #{apply.1} parent=0 // pred_check_branch
    %19 = sbr.rel (0) target = $region21
  $region20: #{apply.1} parent=0 // pred_region
    _
  $region21: #{apply.1} parent=0 // pred_fallthru
    _
  %v20 = vld [vmem:[%s0] sm:$0xff]
  %v21 = vld [vmem:[%s0 + $0x8] sm:$0xff]
  %v22 = vld [vmem:[%s0 + $0x10] sm:$0xff]
  %v23 = vld [vmem:[%s0 + $0x18] sm:$0xff]
  %v24 = vld [vmem:[%s0 + $0x20] sm:$0xff]
  %v25 = vld [vmem:[%s0 + $0x28] sm:$0xff]
  %v26 = vld [vmem:[%s0 + $0x30] sm:$0xff]
  %v27 = vld [vmem:[%s0 + $0x38] sm:$0xff]
  %v28 = vld [vmem:[%s0 + $0x40] sm:$0xff]
  %v29 = vld [vmem:[%s0 + $0x48] sm:$0xff]
  %v30 = vld [vmem:[%s0 + $0x50] sm:$0xff]
  %v31 = vld [vmem:[%s0 + $0x58] sm:$0xff]
  %v32 = vld [vmem:[%s0 + $0x60] sm:$0xff]
  %v33 = vld [vmem:[%s0 + $0x68] sm:$0xff]
  %v34 = vld [vmem:[%s0 + $0x70] sm:$0xff]
  %v35 = vld [vmem:[%s0 + $0x78] sm:$0xff]
  %v36 = vld [vmem:[%s1] sm:$0xff]
  %v37 = vld [vmem:[%s1 + $0x8] sm:$0xff]
  %v38 = vld [vmem:[%s1 + $0x10] sm:$0xff]
  %v39 = vld [vmem:[%s1 + $0x18] sm:$0xff]
  %v40 = vld [vmem:[%s1 + $0x20] sm:$0xff]
  %v41 = vld [vmem:[%s1 + $0x28] sm:$0xff]
  %v42 = vld [vmem:[%s1 + $0x30] sm:$0xff]
  %v43 = vld [vmem:[%s1 + $0x38] sm:$0xff]
  %v44 = vld [vmem:[%s1 + $0x40] sm:$0xff]
  %v45 = vld [vmem:[%s1 + $0x48] sm:$0xff]
  %v46 = vld [vmem:[%s1 + $0x50] sm:$0xff]
  %v47 = vld [vmem:[%s1 + $0x58] sm:$0xff]
  %v48 = vld [vmem:[%s1 + $0x60] sm:$0xff]
  %v49 = vld [vmem:[%s1 + $0x68] sm:$0xff]
  %v50 = vld [vmem:[%s1 + $0x70] sm:$0xff]
  %v51 = vld [vmem:[%s1 + $0x78] sm:$0xff]
  %v52 = vld [vmem:[%s2] sm:$0xff]
  %v53 = vld [vmem:[%s2 + $0x8] sm:$0xff]
  %v54 = vld [vmem:[%s2 + $0x10] sm:$0xff]
  %v55 = vld [vmem:[%s2 + $0x18] sm:$0xff]
  %v56 = vld [vmem:[%s2 + $0x20] sm:$0xff]
  %vm57 = vcmask 326656
  %v59 = vsel %vm57, %v20, 0
  %v62 = vsel %vm57, %v21, 0
  %v65 = vsel %vm57, %v22, 0
  %v68 = vsel %vm57, %v23, 0
  %v71 = vsel %vm57, %v24, 0
  %v74 = vsel %vm57, %v25, 0
  %v77 = vsel %vm57, %v26, 0
  %v80 = vsel %vm57, %v27, 0
  %v83 = vsel %vm57, %v28, 0
  %v86 = vsel %vm57, %v29, 0
  %v89 = vsel %vm57, %v30, 0
  %v92 = vsel %vm57, %v31, 0
  %v95 = vsel %vm57, %v32, 0
  %v98 = vsel %vm57, %v33, 0
  %v101 = vsel %vm57, %v34, 0
  %v104 = vsel %vm57, %v35, 0
  %106 = vmatprep.subr.mxu0 0.0
  %107 = vmatpush1.msra.mxu0 0.0
  %108 = vmatprep.subr.mxu0 0.0
  %109 = vmatpush1.msra.mxu0 0.0
  %110 = vmatprep.subr.mxu0 0.0
  %111 = vmatpush1.msra.mxu0 0.0
  %112 = vmatprep.subr.mxu0 0.0
  %113 = vmatpush1.msra.mxu0 0.0
  %114 = vmatprep.subr.mxu0 0.0
  %115 = vmatpush1.msra.mxu0 0.0
  %116 = vmatprep.subr.mxu0 0.0
  %117 = vmatpush1.msra.mxu0 0.0
  %118 = vmatprep.subr.mxu0 0.0
  %119 = vmatpush1.msra.mxu0 0.0
  %120 = vmatprep.subr.mxu0 0.0
  %121 = vmatpush1.msra.mxu0 0.0
  %122 = vmatprep.subr.mxu0 0.0
  %123 = vmatpush1.msra.mxu0 0.0
  %124 = vmatprep.subr.mxu0 0.0
  %125 = vmatpush1.msra.mxu0 0.0
  %126 = vmatprep.subr.mxu0 0.0
  %127 = vmatpush1.msra.mxu0 0.0
  %128 = vmatprep.subr.mxu0 0.0
  %129 = vmatpush1.msra.mxu0 %v56
  %130 = vmatprep.subr.mxu0 0.0
  %131 = vmatpush1.msra.mxu0 %v55
  %132 = vmatprep.subr.mxu0 0.0
  %133 = vmatpush1.msra.mxu0 %v54
  %134 = vmatprep.subr.mxu0 0.0
  %135 = vmatpush1.msra.mxu0 %v53
  %136 = vmatprep.subr.mxu0 0.0
  %137 = vmatpush1.msra.mxu0 %v52
  %138 = vmatprep.subr.mxu0 0.0
  %139 = vmatpush2.msra.mxu0 0.0
  %140 = vmatprep.subr.mxu0 0.0
  %141 = vmatpush2.msra.mxu0 0.0
  %142 = vmatprep.subr.mxu0 0.0
  %143 = vmatpush2.msra.mxu0 0.0
  %144 = vmatprep.subr.mxu0 0.0
  %145 = vmatpush2.msra.mxu0 0.0
  %146 = vmatprep.subr.mxu0 0.0
  %147 = vmatpush2.msra.mxu0 0.0
  %148 = vmatprep.subr.mxu0 0.0
  %149 = vmatpush2.msra.mxu0 0.0
  %150 = vmatprep.subr.mxu0 0.0
  %151 = vmatpush2.msra.mxu0 0.0
  %152 = vmatprep.subr.mxu0 0.0
  %153 = vmatpush2.msra.mxu0 0.0
  %154 = vmatprep.subr.mxu0 0.0
  %155 = vmatpush2.msra.mxu0 0.0
  %156 = vmatprep.subr.mxu0 0.0
  %157 = vmatpush2.msra.mxu0 0.0
  %158 = vmatprep.subr.mxu0 0.0
  %159 = vmatpush2.msra.mxu0 0.0
  %160 = vmatprep.subr.mxu0 0.0
  %161 = vmatpush2.msra.mxu0 0.0
  %162 = vmatprep.subr.mxu0 0.0
  %163 = vmatpush2.msra.mxu0 0.0
  %164 = vmatprep.subr.mxu0 0.0
  %165 = vmatpush2.msra.mxu0 0.0
  %166 = vmatprep.subr.mxu0 0.0
  %167 = vmatpush2.msra.mxu0 0.0
  %168 = vmatprep.subr.mxu0 0.0
  %169 = vmatpush2.msra.mxu0 0.0
  %170 = vmatprep.mubr.f32.mxu0 0.0
  %171 = vmatmul.mubr.f32.gmra.mxu0 %v59
  %v172 = vpop.f32.mrf.mxu0
  %v173 = vadd.f32 0.0, %v172
  %v174 = vpop.f32.mrf.mxu0
  %175 = vmatprep.mubr.f32.mxu0 0.0
  %176 = vmatmul.mubr.f32.gmra.mxu0 %v62
  %v177 = vpop.f32.mrf.mxu0
  %v178 = vadd.f32 0.0, %v177
  %v179 = vpop.f32.mrf.mxu0
  %180 = vmatprep.mubr.f32.mxu0 0.0
  %181 = vmatmul.mubr.f32.gmra.mxu0 %v65
  %v182 = vpop.f32.mrf.mxu0
  %v183 = vadd.f32 0.0, %v182
  %v184 = vpop.f32.mrf.mxu0
  %185 = vmatprep.mubr.f32.mxu0 0.0
  %186 = vmatmul.mubr.f32.gmra.mxu0 %v68
  %v187 = vpop.f32.mrf.mxu0
  %v188 = vadd.f32 0.0, %v187
  %v189 = vpop.f32.mrf.mxu0
  %190 = vmatprep.mubr.f32.mxu0 0.0
  %191 = vmatmul.mubr.f32.gmra.mxu0 %v71
  %v192 = vpop.f32.mrf.mxu0
  %v193 = vadd.f32 0.0, %v192
  %v194 = vpop.f32.mrf.mxu0
  %195 = vmatprep.mubr.f32.mxu0 0.0
  %196 = vmatmul.mubr.f32.gmra.mxu0 %v74
  %v197 = vpop.f32.mrf.mxu0
  %v198 = vadd.f32 0.0, %v197
  %v199 = vpop.f32.mrf.mxu0
  %200 = vmatprep.mubr.f32.mxu0 0.0
  %201 = vmatmul.mubr.f32.gmra.mxu0 %v77
  %v202 = vpop.f32.mrf.mxu0
  %v203 = vadd.f32 0.0, %v202
  %v204 = vpop.f32.mrf.mxu0
  %205 = vmatprep.mubr.f32.mxu0 0.0
  %206 = vmatmul.mubr.f32.gmra.mxu0 %v80
  %v207 = vpop.f32.mrf.mxu0
  %v208 = vadd.f32 0.0, %v207
  %v209 = vpop.f32.mrf.mxu0
  %210 = vmatprep.mubr.f32.mxu0 0.0
  %211 = vmatmul.mubr.f32.gmra.mxu0 %v83
  %v212 = vpop.f32.mrf.mxu0
  %v213 = vadd.f32 0.0, %v212
  %v214 = vpop.f32.mrf.mxu0
  %215 = vmatprep.mubr.f32.mxu0 0.0
  %216 = vmatmul.mubr.f32.gmra.mxu0 %v86
  %v217 = vpop.f32.mrf.mxu0
  %v218 = vadd.f32 0.0, %v217
  %v219 = vpop.f32.mrf.mxu0
  %220 = vmatprep.mubr.f32.mxu0 0.0
  %221 = vmatmul.mubr.f32.gmra.mxu0 %v89
  %v222 = vpop.f32.mrf.mxu0
  %v223 = vadd.f32 0.0, %v222
  %v224 = vpop.f32.mrf.mxu0
  %225 = vmatprep.mubr.f32.mxu0 0.0
  %226 = vmatmul.mubr.f32.gmra.mxu0 %v92
  %v227 = vpop.f32.mrf.mxu0
  %v228 = vadd.f32 0.0, %v227
  %v229 = vpop.f32.mrf.mxu0
  %230 = vmatprep.mubr.f32.mxu0 0.0
  %231 = vmatmul.mubr.f32.gmra.mxu0 %v95
  %v232 = vpop.f32.mrf.mxu0
  %v233 = vadd.f32 0.0, %v232
  %v234 = vpop.f32.mrf.mxu0
  %235 = vmatprep.mubr.f32.mxu0 0.0
  %236 = vmatmul.mubr.f32.gmra.mxu0 %v98
  %v237 = vpop.f32.mrf.mxu0
  %v238 = vadd.f32 0.0, %v237
  %v239 = vpop.f32.mrf.mxu0
  %240 = vmatprep.mubr.f32.mxu0 0.0
  %241 = vmatmul.mubr.f32.gmra.mxu0 %v101
  %v242 = vpop.f32.mrf.mxu0
  %v243 = vadd.f32 0.0, %v242
  %v244 = vpop.f32.mrf.mxu0
  %245 = vmatprep.mubr.f32.mxu0 0.0
  %246 = vmatmul.mubr.f32.gmra.mxu0 %v104
  %v247 = vpop.f32.mrf.mxu0
  %v248 = vadd.f32 0.0, %v247
  %v249 = vpop.f32.mrf.mxu0
  %250 = vdwg.mxu0
  %v252 = vsel %vm57, %v173, 0
  %v255 = vsel %vm57, %v178, 0
  %v258 = vsel %vm57, %v183, 0
  %v261 = vsel %vm57, %v188, 0
  %v264 = vsel %vm57, %v193, 0
  %v267 = vsel %vm57, %v198, 0
  %v270 = vsel %vm57, %v203, 0
  %v273 = vsel %vm57, %v208, 0
  %v276 = vsel %vm57, %v213, 0
  %v279 = vsel %vm57, %v218, 0
  %v282 = vsel %vm57, %v223, 0
  %v285 = vsel %vm57, %v228, 0
  %v288 = vsel %vm57, %v233, 0
  %v291 = vsel %vm57, %v238, 0
  %v294 = vsel %vm57, %v243, 0
  %v297 = vsel %vm57, %v248, 0
  %299 = vmatprep.subr.mxu0 0.0
  %300 = vmatpush1.xpose.msra.mxu0 %v104
  %301 = vmatprep.subr.mxu0 0.0
  %302 = vmatpush1.xpose.msra.mxu0 %v101
  %303 = vmatprep.subr.mxu0 0.0
  %304 = vmatpush1.xpose.msra.mxu0 %v98
  %305 = vmatprep.subr.mxu0 0.0
  %306 = vmatpush1.xpose.msra.mxu0 %v95
  %307 = vmatprep.subr.mxu0 0.0
  %308 = vmatpush1.xpose.msra.mxu0 %v92
  %309 = vmatprep.subr.mxu0 0.0
  %310 = vmatpush1.xpose.msra.mxu0 %v89
  %311 = vmatprep.subr.mxu0 0.0
  %312 = vmatpush1.xpose.msra.mxu0 %v86
  %313 = vmatprep.subr.mxu0 0.0
  %314 = vmatpush1.xpose.msra.mxu0 %v83
  %315 = vmatprep.subr.mxu0 0.0
  %316 = vmatpush1.xpose.msra.mxu0 %v80
  %317 = vmatprep.subr.mxu0 0.0
  %318 = vmatpush1.xpose.msra.mxu0 %v77
  %319 = vmatprep.subr.mxu0 0.0
  %320 = vmatpush1.xpose.msra.mxu0 %v74
  %321 = vmatprep.subr.mxu0 0.0
  %322 = vmatpush1.xpose.msra.mxu0 %v71
  %323 = vmatprep.subr.mxu0 0.0
  %324 = vmatpush1.xpose.msra.mxu0 %v68
  %325 = vmatprep.subr.mxu0 0.0
  %326 = vmatpush1.xpose.msra.mxu0 %v65
  %327 = vmatprep.subr.mxu0 0.0
  %328 = vmatpush1.xpose.msra.mxu0 %v62
  %329 = vmatprep.subr.mxu0 0.0
  %330 = vmatpush1.xpose.msra.mxu0 %v59
  %331 = vmatprep.subr.mxu0 0.0
  %332 = vmatpush2.xpose.msra.mxu0 0.0
  %333 = vmatprep.subr.mxu0 0.0
  %334 = vmatpush2.xpose.msra.mxu0 0.0
  %335 = vmatprep.subr.mxu0 0.0
  %336 = vmatpush2.xpose.msra.mxu0 0.0
  %337 = vmatprep.subr.mxu0 0.0
  %338 = vmatpush2.xpose.msra.mxu0 0.0
  %339 = vmatprep.subr.mxu0 0.0
  %340 = vmatpush2.xpose.msra.mxu0 0.0
  %341 = vmatprep.subr.mxu0 0.0
  %342 = vmatpush2.xpose.msra.mxu0 0.0
  %343 = vmatprep.subr.mxu0 0.0
  %344 = vmatpush2.xpose.msra.mxu0 0.0
  %345 = vmatprep.subr.mxu0 0.0
  %346 = vmatpush2.xpose.msra.mxu0 0.0
  %347 = vmatprep.subr.mxu0 0.0
  %348 = vmatpush2.xpose.msra.mxu0 0.0
  %349 = vmatprep.subr.mxu0 0.0
  %350 = vmatpush2.xpose.msra.mxu0 0.0
  %351 = vmatprep.subr.mxu0 0.0
  %352 = vmatpush2.xpose.msra.mxu0 0.0
  %353 = vmatprep.subr.mxu0 0.0
  %354 = vmatpush2.xpose.msra.mxu0 0.0
  %355 = vmatprep.subr.mxu0 0.0
  %356 = vmatpush2.xpose.msra.mxu0 0.0
  %357 = vmatprep.subr.mxu0 0.0
  %358 = vmatpush2.xpose.msra.mxu0 0.0
  %359 = vmatprep.subr.mxu0 0.0
  %360 = vmatpush2.xpose.msra.mxu0 0.0
  %361 = vmatprep.subr.mxu0 0.0
  %362 = vmatpush2.xpose.msra.mxu0 0.0
  %363 = vmatprep.mubr.f32.mxu0 0.0
  %364 = vmatmul.mubr.f32.gmra.mxu0 %v252
  %v365 = vpop.f32.mrf.mxu0
  %v366 = vadd.f32 %v36, %v365
  %v367 = vpop.f32.mrf.mxu0
  %368 = vmatprep.mubr.f32.mxu0 0.0
  %369 = vmatmul.mubr.f32.gmra.mxu0 %v255
  %v370 = vpop.f32.mrf.mxu0
  %v371 = vadd.f32 %v37, %v370
  %v372 = vpop.f32.mrf.mxu0
  %373 = vmatprep.mubr.f32.mxu0 0.0
  %374 = vmatmul.mubr.f32.gmra.mxu0 %v258
  %v375 = vpop.f32.mrf.mxu0
  %v376 = vadd.f32 %v38, %v375
  %v377 = vpop.f32.mrf.mxu0
  %378 = vmatprep.mubr.f32.mxu0 0.0
  %379 = vmatmul.mubr.f32.gmra.mxu0 %v261
  %v380 = vpop.f32.mrf.mxu0
  %v381 = vadd.f32 %v39, %v380
  %v382 = vpop.f32.mrf.mxu0
  %383 = vmatprep.mubr.f32.mxu0 0.0
  %384 = vmatmul.mubr.f32.gmra.mxu0 %v264
  %v385 = vpop.f32.mrf.mxu0
  %v386 = vadd.f32 %v40, %v385
  %v387 = vpop.f32.mrf.mxu0
  %388 = vmatprep.mubr.f32.mxu0 0.0
  %389 = vmatmul.mubr.f32.gmra.mxu0 %v267
  %v390 = vpop.f32.mrf.mxu0
  %v391 = vadd.f32 %v41, %v390
  %v392 = vpop.f32.mrf.mxu0
  %393 = vmatprep.mubr.f32.mxu0 0.0
  %394 = vmatmul.mubr.f32.gmra.mxu0 %v270
  %v395 = vpop.f32.mrf.mxu0
  %v396 = vadd.f32 %v42, %v395
  %v397 = vpop.f32.mrf.mxu0
  %398 = vmatprep.mubr.f32.mxu0 0.0
  %399 = vmatmul.mubr.f32.gmra.mxu0 %v273
  %v400 = vpop.f32.mrf.mxu0
  %v401 = vadd.f32 %v43, %v400
  %v402 = vpop.f32.mrf.mxu0
  %403 = vmatprep.mubr.f32.mxu0 0.0
  %404 = vmatmul.mubr.f32.gmra.mxu0 %v276
  %v405 = vpop.f32.mrf.mxu0
  %v406 = vadd.f32 %v44, %v405
  %v407 = vpop.f32.mrf.mxu0
  %408 = vmatprep.mubr.f32.mxu0 0.0
  %409 = vmatmul.mubr.f32.gmra.mxu0 %v279
  %v410 = vpop.f32.mrf.mxu0
  %v411 = vadd.f32 %v45, %v410
  %v412 = vpop.f32.mrf.mxu0
  %413 = vmatprep.mubr.f32.mxu0 0.0
  %414 = vmatmul.mubr.f32.gmra.mxu0 %v282
  %v415 = vpop.f32.mrf.mxu0
  %v416 = vadd.f32 %v46, %v415
  %v417 = vpop.f32.mrf.mxu0
  %418 = vmatprep.mubr.f32.mxu0 0.0
  %419 = vmatmul.mubr.f32.gmra.mxu0 %v285
  %v420 = vpop.f32.mrf.mxu0
  %v421 = vadd.f32 %v47, %v420
  %v422 = vpop.f32.mrf.mxu0
  %423 = vmatprep.mubr.f32.mxu0 0.0
  %424 = vmatmul.mubr.f32.gmra.mxu0 %v288
  %v425 = vpop.f32.mrf.mxu0
  %v426 = vadd.f32 %v48, %v425
  %v427 = vpop.f32.mrf.mxu0
  %428 = vmatprep.mubr.f32.mxu0 0.0
  %429 = vmatmul.mubr.f32.gmra.mxu0 %v291
  %v430 = vpop.f32.mrf.mxu0
  %v431 = vadd.f32 %v49, %v430
  %v432 = vpop.f32.mrf.mxu0
  %433 = vmatprep.mubr.f32.mxu0 0.0
  %434 = vmatmul.mubr.f32.gmra.mxu0 %v294
  %v435 = vpop.f32.mrf.mxu0
  %v436 = vadd.f32 %v50, %v435
  %v437 = vpop.f32.mrf.mxu0
  %438 = vmatprep.mubr.f32.mxu0 0.0
  %439 = vmatmul.mubr.f32.gmra.mxu0 %v297
  %v440 = vpop.f32.mrf.mxu0
  %v441 = vadd.f32 %v51, %v440
  %v442 = vpop.f32.mrf.mxu0
  %443 = vdwg.mxu0
  %444 = vmax.xlane.f32.xlu0 %v366
  %v445 = vpop.xlane.xlu0 %444
  %446 = vmax.xlane.f32.xlu0 %v371
  %v447 = vpop.xlane.xlu0 %446
  %448 = vmax.xlane.f32.xlu0 %v376
  %v449 = vpop.xlane.xlu0 %448
  %450 = vmax.xlane.f32.xlu0 %v381
  %v451 = vpop.xlane.xlu0 %450
  %452 = vmax.xlane.f32.xlu0 %v386
  %v453 = vpop.xlane.xlu0 %452
  %454 = vmax.xlane.f32.xlu0 %v391
  %v455 = vpop.xlane.xlu0 %454
  %456 = vmax.xlane.f32.xlu0 %v396
  %v457 = vpop.xlane.xlu0 %456
  %458 = vmax.xlane.f32.xlu0 %v401
  %v459 = vpop.xlane.xlu0 %458
  %460 = vmax.xlane.f32.xlu0 %v406
  %v461 = vpop.xlane.xlu0 %460
  %462 = vmax.xlane.f32.xlu0 %v411
  %v463 = vpop.xlane.xlu0 %462
  %464 = vmax.xlane.f32.xlu0 %v416
  %v465 = vpop.xlane.xlu0 %464
  %466 = vmax.xlane.f32.xlu0 %v421
  %v467 = vpop.xlane.xlu0 %466
  %468 = vmax.xlane.f32.xlu0 %v426
  %v469 = vpop.xlane.xlu0 %468
  %470 = vmax.xlane.f32.xlu0 %v431
  %v471 = vpop.xlane.xlu0 %470
  %472 = vmax.xlane.f32.xlu0 %v436
  %v473 = vpop.xlane.xlu0 %472
  %474 = vmax.xlane.f32.xlu0 %v441
  %v475 = vpop.xlane.xlu0 %474
  %v476 = vsub.f32 %v366, %v445
  %v477 = vsub.f32 %v371, %v447
  %v478 = vsub.f32 %v376, %v449
  %v479 = vsub.f32 %v381, %v451
  %v480 = vsub.f32 %v386, %v453
  %v481 = vsub.f32 %v391, %v455
  %v482 = vsub.f32 %v396, %v457
  %v483 = vsub.f32 %v401, %v459
  %v484 = vsub.f32 %v406, %v461
  %v485 = vsub.f32 %v411, %v463
  %v486 = vsub.f32 %v416, %v465
  %v487 = vsub.f32 %v421, %v467
  %v488 = vsub.f32 %v426, %v469
  %v489 = vsub.f32 %v431, %v471
  %v490 = vsub.f32 %v436, %v473
  %v491 = vsub.f32 %v441, %v475
  %v492 = vmul.f32 %v476, 1.442695
  %v493 = vpow.pop %v492
  %v494 = vmul.f32 %v477, 1.442695
  %v495 = vpow.pop %v494
  %v496 = vmul.f32 %v478, 1.442695
  %v497 = vpow.pop %v496
  %v498 = vmul.f32 %v479, 1.442695
  %v499 = vpow.pop %v498
  %v500 = vmul.f32 %v480, 1.442695
  %v501 = vpow.pop %v500
  %v502 = vmul.f32 %v481, 1.442695
  %v503 = vpow.pop %v502
  %v504 = vmul.f32 %v482, 1.442695
  %v505 = vpow.pop %v504
  %v506 = vmul.f32 %v483, 1.442695
  %v507 = vpow.pop %v506
  %v508 = vmul.f32 %v484, 1.442695
  %v509 = vpow.pop %v508
  %v510 = vmul.f32 %v485, 1.442695
  %v511 = vpow.pop %v510
  %v512 = vmul.f32 %v486, 1.442695
  %v513 = vpow.pop %v512
  %v514 = vmul.f32 %v487, 1.442695
  %v515 = vpow.pop %v514
  %v516 = vmul.f32 %v488, 1.442695
  %v517 = vpow.pop %v516
  %v518 = vmul.f32 %v489, 1.442695
  %v519 = vpow.pop %v518
  %v520 = vmul.f32 %v490, 1.442695
  %v521 = vpow.pop %v520
  %v522 = vmul.f32 %v491, 1.442695
  %v523 = vpow.pop %v522
  %524 = vadd.xlane.f32.xlu0 %v493
  %v525 = vpop.xlane.xlu0 %524
  %526 = vadd.xlane.f32.xlu0 %v495
  %v527 = vpop.xlane.xlu0 %526
  %528 = vadd.xlane.f32.xlu0 %v497
  %v529 = vpop.xlane.xlu0 %528
  %530 = vadd.xlane.f32.xlu0 %v499
  %v531 = vpop.xlane.xlu0 %530
  %532 = vadd.xlane.f32.xlu0 %v501
  %v533 = vpop.xlane.xlu0 %532
  %534 = vadd.xlane.f32.xlu0 %v503
  %v535 = vpop.xlane.xlu0 %534
  %536 = vadd.xlane.f32.xlu0 %v505
  %v537 = vpop.xlane.xlu0 %536
  %538 = vadd.xlane.f32.xlu0 %v507
  %v539 = vpop.xlane.xlu0 %538
  %540 = vadd.xlane.f32.xlu0 %v509
  %v541 = vpop.xlane.xlu0 %540
  %542 = vadd.xlane.f32.xlu0 %v511
  %v543 = vpop.xlane.xlu0 %542
  %544 = vadd.xlane.f32.xlu0 %v513
  %v545 = vpop.xlane.xlu0 %544
  %546 = vadd.xlane.f32.xlu0 %v515
  %v547 = vpop.xlane.xlu0 %546
  %548 = vadd.xlane.f32.xlu0 %v517
  %v549 = vpop.xlane.xlu0 %548
  %550 = vadd.xlane.f32.xlu0 %v519
  %v551 = vpop.xlane.xlu0 %550
  %552 = vadd.xlane.f32.xlu0 %v521
  %v553 = vpop.xlane.xlu0 %552
  %554 = vadd.xlane.f32.xlu0 %v523
  %v555 = vpop.xlane.xlu0 %554
  %v556 = vrcp.pop %v525
  %v557 = vrcp.pop %v527
  %v558 = vrcp.pop %v529
  %v559 = vrcp.pop %v531
  %v560 = vrcp.pop %v533
  %v561 = vrcp.pop %v535
  %v562 = vrcp.pop %v537
  %v563 = vrcp.pop %v539
  %v564 = vrcp.pop %v541
  %v565 = vrcp.pop %v543
  %v566 = vrcp.pop %v545
  %v567 = vrcp.pop %v547
  %v568 = vrcp.pop %v549
  %v569 = vrcp.pop %v551
  %v570 = vrcp.pop %v553
  %v571 = vrcp.pop %v555
  %v572 = vmul.f32 %v493, %v556
  %v573 = vmul.f32 %v495, %v557
  %v574 = vmul.f32 %v497, %v558
  %v575 = vmul.f32 %v499, %v559
  %v576 = vmul.f32 %v501, %v560
  %v577 = vmul.f32 %v503, %v561
  %v578 = vmul.f32 %v505, %v562
  %v579 = vmul.f32 %v507, %v563
  %v580 = vmul.f32 %v509, %v564
  %v581 = vmul.f32 %v511, %v565
  %v582 = vmul.f32 %v513, %v566
  %v583 = vmul.f32 %v515, %v567
  %v584 = vmul.f32 %v517, %v568
  %v585 = vmul.f32 %v519, %v569
  %v586 = vmul.f32 %v521, %v570
  %v587 = vmul.f32 %v523, %v571
  %588 = vmatprep.subr.mxu0 0.0
  %589 = vmatpush1.msra.mxu0 %v35
  %590 = vmatprep.subr.mxu0 0.0
  %591 = vmatpush1.msra.mxu0 %v34
  %592 = vmatprep.subr.mxu0 0.0
  %593 = vmatpush1.msra.mxu0 %v33
  %594 = vmatprep.subr.mxu0 0.0
  %595 = vmatpush1.msra.mxu0 %v32
  %596 = vmatprep.subr.mxu0 0.0
  %597 = vmatpush1.msra.mxu0 %v31
  %598 = vmatprep.subr.mxu0 0.0
  %599 = vmatpush1.msra.mxu0 %v30
  %600 = vmatprep.subr.mxu0 0.0
  %601 = vmatpush1.msra.mxu0 %v29
  %602 = vmatprep.subr.mxu0 0.0
  %603 = vmatpush1.msra.mxu0 %v28
  %604 = vmatprep.subr.mxu0 0.0
  %605 = vmatpush1.msra.mxu0 %v27
  %606 = vmatprep.subr.mxu0 0.0
  %607 = vmatpush1.msra.mxu0 %v26
  %608 = vmatprep.subr.mxu0 0.0
  %609 = vmatpush1.msra.mxu0 %v25
  %610 = vmatprep.subr.mxu0 0.0
  %611 = vmatpush1.msra.mxu0 %v24
  %612 = vmatprep.subr.mxu0 0.0
  %613 = vmatpush1.msra.mxu0 %v23
  %614 = vmatprep.subr.mxu0 0.0
  %615 = vmatpush1.msra.mxu0 %v22
  %616 = vmatprep.subr.mxu0 0.0
  %617 = vmatpush1.msra.mxu0 %v21
  %618 = vmatprep.subr.mxu0 0.0
  %619 = vmatpush1.msra.mxu0 %v20
  %620 = vmatprep.subr.mxu0 0.0
  %621 = vmatpush2.msra.mxu0 0.0
  %622 = vmatprep.subr.mxu0 0.0
  %623 = vmatpush2.msra.mxu0 0.0
  %624 = vmatprep.subr.mxu0 0.0
  %625 = vmatpush2.msra.mxu0 0.0
  %626 = vmatprep.subr.mxu0 0.0
  %627 = vmatpush2.msra.mxu0 0.0
  %628 = vmatprep.subr.mxu0 0.0
  %629 = vmatpush2.msra.mxu0 0.0
  %630 = vmatprep.subr.mxu0 0.0
  %631 = vmatpush2.msra.mxu0 0.0
  %632 = vmatprep.subr.mxu0 0.0
  %633 = vmatpush2.msra.mxu0 0.0
  %634 = vmatprep.subr.mxu0 0.0
  %635 = vmatpush2.msra.mxu0 0.0
  %636 = vmatprep.subr.mxu0 0.0
  %637 = vmatpush2.msra.mxu0 0.0
  %638 = vmatprep.subr.mxu0 0.0
  %639 = vmatpush2.msra.mxu0 0.0
  %640 = vmatprep.subr.mxu0 0.0
  %641 = vmatpush2.msra.mxu0 0.0
  %642 = vmatprep.subr.mxu0 0.0
  %643 = vmatpush2.msra.mxu0 0.0
  %644 = vmatprep.subr.mxu0 0.0
  %645 = vmatpush2.msra.mxu0 0.0
  %646 = vmatprep.subr.mxu0 0.0
  %647 = vmatpush2.msra.mxu0 0.0
  %648 = vmatprep.subr.mxu0 0.0
  %649 = vmatpush2.msra.mxu0 0.0
  %650 = vmatprep.subr.mxu0 0.0
  %651 = vmatpush2.msra.mxu0 0.0
  %652 = vmatprep.mubr.f32.mxu0 0.0
  %653 = vmatmul.mubr.f32.gmra.mxu0 %v572
  %v654 = vpop.f32.mrf.mxu0
  %v655 = vadd.f32 0.0, %v654
  %v656 = vpop.f32.mrf.mxu0
  %657 = vmatprep.mubr.f32.mxu0 0.0
  %658 = vmatmul.mubr.f32.gmra.mxu0 %v573
  %v659 = vpop.f32.mrf.mxu0
  %v660 = vadd.f32 0.0, %v659
  %v661 = vpop.f32.mrf.mxu0
  %662 = vmatprep.mubr.f32.mxu0 0.0
  %663 = vmatmul.mubr.f32.gmra.mxu0 %v574
  %v664 = vpop.f32.mrf.mxu0
  %v665 = vadd.f32 0.0, %v664
  %v666 = vpop.f32.mrf.mxu0
  %667 = vmatprep.mubr.f32.mxu0 0.0
  %668 = vmatmul.mubr.f32.gmra.mxu0 %v575
  %v669 = vpop.f32.mrf.mxu0
  %v670 = vadd.f32 0.0, %v669
  %v671 = vpop.f32.mrf.mxu0
  %672 = vmatprep.mubr.f32.mxu0 0.0
  %673 = vmatmul.mubr.f32.gmra.mxu0 %v576
  %v674 = vpop.f32.mrf.mxu0
  %v675 = vadd.f32 0.0, %v674
  %v676 = vpop.f32.mrf.mxu0
  %677 = vmatprep.mubr.f32.mxu0 0.0
  %678 = vmatmul.mubr.f32.gmra.mxu0 %v577
  %v679 = vpop.f32.mrf.mxu0
  %v680 = vadd.f32 0.0, %v679
  %v681 = vpop.f32.mrf.mxu0
  %682 = vmatprep.mubr.f32.mxu0 0.0
  %683 = vmatmul.mubr.f32.gmra.mxu0 %v578
  %v684 = vpop.f32.mrf.mxu0
  %v685 = vadd.f32 0.0, %v684
  %v686 = vpop.f32.mrf.mxu0
  %687 = vmatprep.mubr.f32.mxu0 0.0
  %688 = vmatmul.mubr.f32.gmra.mxu0 %v579
  %v689 = vpop.f32.mrf.mxu0
  %v690 = vadd.f32 0.0, %v689
  %v691 = vpop.f32.mrf.mxu0
  %692 = vmatprep.mubr.f32.mxu0 0.0
  %693 = vmatmul.mubr.f32.gmra.mxu0 %v580
  %v694 = vpop.f32.mrf.mxu0
  %v695 = vadd.f32 0.0, %v694
  %v696 = vpop.f32.mrf.mxu0
  %697 = vmatprep.mubr.f32.mxu0 0.0
  %698 = vmatmul.mubr.f32.gmra.mxu0 %v581
  %v699 = vpop.f32.mrf.mxu0
  %v700 = vadd.f32 0.0, %v699
  %v701 = vpop.f32.mrf.mxu0
  %702 = vmatprep.mubr.f32.mxu0 0.0
  %703 = vmatmul.mubr.f32.gmra.mxu0 %v582
  %v704 = vpop.f32.mrf.mxu0
  %v705 = vadd.f32 0.0, %v704
  %v706 = vpop.f32.mrf.mxu0
  %707 = vmatprep.mubr.f32.mxu0 0.0
  %708 = vmatmul.mubr.f32.gmra.mxu0 %v583
  %v709 = vpop.f32.mrf.mxu0
  %v710 = vadd.f32 0.0, %v709
  %v711 = vpop.f32.mrf.mxu0
  %712 = vmatprep.mubr.f32.mxu0 0.0
  %713 = vmatmul.mubr.f32.gmra.mxu0 %v584
  %v714 = vpop.f32.mrf.mxu0
  %v715 = vadd.f32 0.0, %v714
  %v716 = vpop.f32.mrf.mxu0
  %717 = vmatprep.mubr.f32.mxu0 0.0
  %718 = vmatmul.mubr.f32.gmra.mxu0 %v585
  %v719 = vpop.f32.mrf.mxu0
  %v720 = vadd.f32 0.0, %v719
  %v721 = vpop.f32.mrf.mxu0
  %722 = vmatprep.mubr.f32.mxu0 0.0
  %723 = vmatmul.mubr.f32.gmra.mxu0 %v586
  %v724 = vpop.f32.mrf.mxu0
  %v725 = vadd.f32 0.0, %v724
  %v726 = vpop.f32.mrf.mxu0
  %727 = vmatprep.mubr.f32.mxu0 0.0
  %728 = vmatmul.mubr.f32.gmra.mxu0 %v587
  %v729 = vpop.f32.mrf.mxu0
  %v730 = vadd.f32 0.0, %v729
  %v731 = vpop.f32.mrf.mxu0
  %732 = vdwg.mxu0
  %v733 = vld [vmem:[%s3] sm:$0xff]
  %v734 = vld [vmem:[%s3 + $0x8] sm:$0xff]
  %v735 = vld [vmem:[%s3 + $0x10] sm:$0xff]
  %v736 = vld [vmem:[%s3 + $0x18] sm:$0xff]
  %v737 = vld [vmem:[%s3 + $0x20] sm:$0xff]
  %s738 = scalar_lea.vmem %s2, 40
  %v739 = vld [vmem:[%s738] sm:$0xff]
  %v740 = vld [vmem:[%s738 + $0x8] sm:$0xff]
  %v741 = vld [vmem:[%s738 + $0x10] sm:$0xff]
  %v742 = vld [vmem:[%s738 + $0x18] sm:$0xff]
  %v743 = vld [vmem:[%s738 + $0x20] sm:$0xff]
  %744 = vmatprep.subr.mxu0 0.0
  %745 = vmatpush1.msra.mxu0 0.0
  %746 = vmatprep.subr.mxu0 0.0
  %747 = vmatpush1.msra.mxu0 0.0
  %748 = vmatprep.subr.mxu0 0.0
  %749 = vmatpush1.msra.mxu0 0.0
  %750 = vmatprep.subr.mxu0 0.0
  %751 = vmatpush1.msra.mxu0 0.0
  %752 = vmatprep.subr.mxu0 0.0
  %753 = vmatpush1.msra.mxu0 0.0
  %754 = vmatprep.subr.mxu0 0.0
  %755 = vmatpush1.msra.mxu0 0.0
  %756 = vmatprep.subr.mxu0 0.0
  %757 = vmatpush1.msra.mxu0 0.0
  %758 = vmatprep.subr.mxu0 0.0
  %759 = vmatpush1.msra.mxu0 0.0
  %760 = vmatprep.subr.mxu0 0.0
  %761 = vmatpush1.msra.mxu0 0.0
  %762 = vmatprep.subr.mxu0 0.0
  %763 = vmatpush1.msra.mxu0 0.0
  %764 = vmatprep.subr.mxu0 0.0
  %765 = vmatpush1.msra.mxu0 0.0
  %766 = vmatprep.subr.mxu0 0.0
  %767 = vmatpush1.msra.mxu0 %v743
  %768 = vmatprep.subr.mxu0 0.0
  %769 = vmatpush1.msra.mxu0 %v742
  %770 = vmatprep.subr.mxu0 0.0
  %771 = vmatpush1.msra.mxu0 %v741
  %772 = vmatprep.subr.mxu0 0.0
  %773 = vmatpush1.msra.mxu0 %v740
  %774 = vmatprep.subr.mxu0 0.0
  %775 = vmatpush1.msra.mxu0 %v739
  %776 = vmatprep.subr.mxu0 0.0
  %777 = vmatpush2.msra.mxu0 0.0
  %778 = vmatprep.subr.mxu0 0.0
  %779 = vmatpush2.msra.mxu0 0.0
  %780 = vmatprep.subr.mxu0 0.0
  %781 = vmatpush2.msra.mxu0 0.0
  %782 = vmatprep.subr.mxu0 0.0
  %783 = vmatpush2.msra.mxu0 0.0
  %784 = vmatprep.subr.mxu0 0.0
  %785 = vmatpush2.msra.mxu0 0.0
  %786 = vmatprep.subr.mxu0 0.0
  %787 = vmatpush2.msra.mxu0 0.0
  %788 = vmatprep.subr.mxu0 0.0
  %789 = vmatpush2.msra.mxu0 0.0
  %790 = vmatprep.subr.mxu0 0.0
  %791 = vmatpush2.msra.mxu0 0.0
  %792 = vmatprep.subr.mxu0 0.0
  %793 = vmatpush2.msra.mxu0 0.0
  %794 = vmatprep.subr.mxu0 0.0
  %795 = vmatpush2.msra.mxu0 0.0
  %796 = vmatprep.subr.mxu0 0.0
  %797 = vmatpush2.msra.mxu0 0.0
  %798 = vmatprep.subr.mxu0 0.0
  %799 = vmatpush2.msra.mxu0 0.0
  %800 = vmatprep.subr.mxu0 0.0
  %801 = vmatpush2.msra.mxu0 0.0
  %802 = vmatprep.subr.mxu0 0.0
  %803 = vmatpush2.msra.mxu0 0.0
  %804 = vmatprep.subr.mxu0 0.0
  %805 = vmatpush2.msra.mxu0 0.0
  %806 = vmatprep.subr.mxu0 0.0
  %807 = vmatpush2.msra.mxu0 0.0
  %808 = vmatprep.mubr.f32.mxu0 0.0
  %809 = vmatmul.mubr.f32.gmra.mxu0 %v59
  %v810 = vpop.f32.mrf.mxu0
  %v811 = vadd.f32 0.0, %v810
  %v812 = vpop.f32.mrf.mxu0
  %813 = vmatprep.mubr.f32.mxu0 0.0
  %814 = vmatmul.mubr.f32.gmra.mxu0 %v62
  %v815 = vpop.f32.mrf.mxu0
  %v816 = vadd.f32 0.0, %v815
  %v817 = vpop.f32.mrf.mxu0
  %818 = vmatprep.mubr.f32.mxu0 0.0
  %819 = vmatmul.mubr.f32.gmra.mxu0 %v65
  %v820 = vpop.f32.mrf.mxu0
  %v821 = vadd.f32 0.0, %v820
  %v822 = vpop.f32.mrf.mxu0
  %823 = vmatprep.mubr.f32.mxu0 0.0
  %824 = vmatmul.mubr.f32.gmra.mxu0 %v68
  %v825 = vpop.f32.mrf.mxu0
  %v826 = vadd.f32 0.0, %v825
  %v827 = vpop.f32.mrf.mxu0
  %828 = vmatprep.mubr.f32.mxu0 0.0
  %829 = vmatmul.mubr.f32.gmra.mxu0 %v71
  %v830 = vpop.f32.mrf.mxu0
  %v831 = vadd.f32 0.0, %v830
  %v832 = vpop.f32.mrf.mxu0
  %833 = vmatprep.mubr.f32.mxu0 0.0
  %834 = vmatmul.mubr.f32.gmra.mxu0 %v74
  %v835 = vpop.f32.mrf.mxu0
  %v836 = vadd.f32 0.0, %v835
  %v837 = vpop.f32.mrf.mxu0
  %838 = vmatprep.mubr.f32.mxu0 0.0
  %839 = vmatmul.mubr.f32.gmra.mxu0 %v77
  %v840 = vpop.f32.mrf.mxu0
  %v841 = vadd.f32 0.0, %v840
  %v842 = vpop.f32.mrf.mxu0
  %843 = vmatprep.mubr.f32.mxu0 0.0
  %844 = vmatmul.mubr.f32.gmra.mxu0 %v80
  %v845 = vpop.f32.mrf.mxu0
  %v846 = vadd.f32 0.0, %v845
  %v847 = vpop.f32.mrf.mxu0
  %848 = vmatprep.mubr.f32.mxu0 0.0
  %849 = vmatmul.mubr.f32.gmra.mxu0 %v83
  %v850 = vpop.f32.mrf.mxu0
  %v851 = vadd.f32 0.0, %v850
  %v852 = vpop.f32.mrf.mxu0
  %853 = vmatprep.mubr.f32.mxu0 0.0
  %854 = vmatmul.mubr.f32.gmra.mxu0 %v86
  %v855 = vpop.f32.mrf.mxu0
  %v856 = vadd.f32 0.0, %v855
  %v857 = vpop.f32.mrf.mxu0
  %858 = vmatprep.mubr.f32.mxu0 0.0
  %859 = vmatmul.mubr.f32.gmra.mxu0 %v89
  %v860 = vpop.f32.mrf.mxu0
  %v861 = vadd.f32 0.0, %v860
  %v862 = vpop.f32.mrf.mxu0
  %863 = vmatprep.mubr.f32.mxu0 0.0
  %864 = vmatmul.mubr.f32.gmra.mxu0 %v92
  %v865 = vpop.f32.mrf.mxu0
  %v866 = vadd.f32 0.0, %v865
  %v867 = vpop.f32.mrf.mxu0
  %868 = vmatprep.mubr.f32.mxu0 0.0
  %869 = vmatmul.mubr.f32.gmra.mxu0 %v95
  %v870 = vpop.f32.mrf.mxu0
  %v871 = vadd.f32 0.0, %v870
  %v872 = vpop.f32.mrf.mxu0
  %873 = vmatprep.mubr.f32.mxu0 0.0
  %874 = vmatmul.mubr.f32.gmra.mxu0 %v98
  %v875 = vpop.f32.mrf.mxu0
  %v876 = vadd.f32 0.0, %v875
  %v877 = vpop.f32.mrf.mxu0
  %878 = vmatprep.mubr.f32.mxu0 0.0
  %879 = vmatmul.mubr.f32.gmra.mxu0 %v101
  %v880 = vpop.f32.mrf.mxu0
  %v881 = vadd.f32 0.0, %v880
  %v882 = vpop.f32.mrf.mxu0
  %883 = vmatprep.mubr.f32.mxu0 0.0
  %884 = vmatmul.mubr.f32.gmra.mxu0 %v104
  %v885 = vpop.f32.mrf.mxu0
  %v886 = vadd.f32 0.0, %v885
  %v887 = vpop.f32.mrf.mxu0
  %888 = vdwg.mxu0
  %v890 = vsel %vm57, %v811, 0
  %v893 = vsel %vm57, %v816, 0
  %v896 = vsel %vm57, %v821, 0
  %v899 = vsel %vm57, %v826, 0
  %v902 = vsel %vm57, %v831, 0
  %v905 = vsel %vm57, %v836, 0
  %v908 = vsel %vm57, %v841, 0
  %v911 = vsel %vm57, %v846, 0
  %v914 = vsel %vm57, %v851, 0
  %v917 = vsel %vm57, %v856, 0
  %v920 = vsel %vm57, %v861, 0
  %v923 = vsel %vm57, %v866, 0
  %v926 = vsel %vm57, %v871, 0
  %v929 = vsel %vm57, %v876, 0
  %v932 = vsel %vm57, %v881, 0
  %v935 = vsel %vm57, %v886, 0
  %937 = vmatprep.subr.mxu0 0.0
  %938 = vmatpush1.xpose.msra.mxu0 %v104
  %939 = vmatprep.subr.mxu0 0.0
  %940 = vmatpush1.xpose.msra.mxu0 %v101
  %941 = vmatprep.subr.mxu0 0.0
  %942 = vmatpush1.xpose.msra.mxu0 %v98
  %943 = vmatprep.subr.mxu0 0.0
  %944 = vmatpush1.xpose.msra.mxu0 %v95
  %945 = vmatprep.subr.mxu0 0.0
  %946 = vmatpush1.xpose.msra.mxu0 %v92
  %947 = vmatprep.subr.mxu0 0.0
  %948 = vmatpush1.xpose.msra.mxu0 %v89
  %949 = vmatprep.subr.mxu0 0.0
  %950 = vmatpush1.xpose.msra.mxu0 %v86
  %951 = vmatprep.subr.mxu0 0.0
  %952 = vmatpush1.xpose.msra.mxu0 %v83
  %953 = vmatprep.subr.mxu0 0.0
  %954 = vmatpush1.xpose.msra.mxu0 %v80
  %955 = vmatprep.subr.mxu0 0.0
  %956 = vmatpush1.xpose.msra.mxu0 %v77
  %957 = vmatprep.subr.mxu0 0.0
  %958 = vmatpush1.xpose.msra.mxu0 %v74
  %959 = vmatprep.subr.mxu0 0.0
  %960 = vmatpush1.xpose.msra.mxu0 %v71
  %961 = vmatprep.subr.mxu0 0.0
  %962 = vmatpush1.xpose.msra.mxu0 %v68
  %963 = vmatprep.subr.mxu0 0.0
  %964 = vmatpush1.xpose.msra.mxu0 %v65
  %965 = vmatprep.subr.mxu0 0.0
  %966 = vmatpush1.xpose.msra.mxu0 %v62
  %967 = vmatprep.subr.mxu0 0.0
  %968 = vmatpush1.xpose.msra.mxu0 %v59
  %969 = vmatprep.subr.mxu0 0.0
  %970 = vmatpush2.xpose.msra.mxu0 0.0
  %971 = vmatprep.subr.mxu0 0.0
  %972 = vmatpush2.xpose.msra.mxu0 0.0
  %973 = vmatprep.subr.mxu0 0.0
  %974 = vmatpush2.xpose.msra.mxu0 0.0
  %975 = vmatprep.subr.mxu0 0.0
  %976 = vmatpush2.xpose.msra.mxu0 0.0
  %977 = vmatprep.subr.mxu0 0.0
  %978 = vmatpush2.xpose.msra.mxu0 0.0
  %979 = vmatprep.subr.mxu0 0.0
  %980 = vmatpush2.xpose.msra.mxu0 0.0
  %981 = vmatprep.subr.mxu0 0.0
  %982 = vmatpush2.xpose.msra.mxu0 0.0
  %983 = vmatprep.subr.mxu0 0.0
  %984 = vmatpush2.xpose.msra.mxu0 0.0
  %985 = vmatprep.subr.mxu0 0.0
  %986 = vmatpush2.xpose.msra.mxu0 0.0
  %987 = vmatprep.subr.mxu0 0.0
  %988 = vmatpush2.xpose.msra.mxu0 0.0
  %989 = vmatprep.subr.mxu0 0.0
  %990 = vmatpush2.xpose.msra.mxu0 0.0
  %991 = vmatprep.subr.mxu0 0.0
  %992 = vmatpush2.xpose.msra.mxu0 0.0
  %993 = vmatprep.subr.mxu0 0.0
  %994 = vmatpush2.xpose.msra.mxu0 0.0
  %995 = vmatprep.subr.mxu0 0.0
  %996 = vmatpush2.xpose.msra.mxu0 0.0
  %997 = vmatprep.subr.mxu0 0.0
  %998 = vmatpush2.xpose.msra.mxu0 0.0
  %999 = vmatprep.subr.mxu0 0.0
  %1000 = vmatpush2.xpose.msra.mxu0 0.0
  %1001 = vmatprep.mubr.f32.mxu0 0.0
  %1002 = vmatmul.mubr.f32.gmra.mxu0 %v890
  %v1003 = vpop.f32.mrf.mxu0
  %v1004 = vadd.f32 %v36, %v1003
  %v1005 = vpop.f32.mrf.mxu0
  %1006 = vmatprep.mubr.f32.mxu0 0.0
  %1007 = vmatmul.mubr.f32.gmra.mxu0 %v893
  %v1008 = vpop.f32.mrf.mxu0
  %v1009 = vadd.f32 %v37, %v1008
  %v1010 = vpop.f32.mrf.mxu0
  %1011 = vmatprep.mubr.f32.mxu0 0.0
  %1012 = vmatmul.mubr.f32.gmra.mxu0 %v896
  %v1013 = vpop.f32.mrf.mxu0
  %v1014 = vadd.f32 %v38, %v1013
  %v1015 = vpop.f32.mrf.mxu0
  %1016 = vmatprep.mubr.f32.mxu0 0.0
  %1017 = vmatmul.mubr.f32.gmra.mxu0 %v899
  %v1018 = vpop.f32.mrf.mxu0
  %v1019 = vadd.f32 %v39, %v1018
  %v1020 = vpop.f32.mrf.mxu0
  %1021 = vmatprep.mubr.f32.mxu0 0.0
  %1022 = vmatmul.mubr.f32.gmra.mxu0 %v902
  %v1023 = vpop.f32.mrf.mxu0
  %v1024 = vadd.f32 %v40, %v1023
  %v1025 = vpop.f32.mrf.mxu0
  %1026 = vmatprep.mubr.f32.mxu0 0.0
  %1027 = vmatmul.mubr.f32.gmra.mxu0 %v905
  %v1028 = vpop.f32.mrf.mxu0
  %v1029 = vadd.f32 %v41, %v1028
  %v1030 = vpop.f32.mrf.mxu0
  %1031 = vmatprep.mubr.f32.mxu0 0.0
  %1032 = vmatmul.mubr.f32.gmra.mxu0 %v908
  %v1033 = vpop.f32.mrf.mxu0
  %v1034 = vadd.f32 %v42, %v1033
  %v1035 = vpop.f32.mrf.mxu0
  %1036 = vmatprep.mubr.f32.mxu0 0.0
  %1037 = vmatmul.mubr.f32.gmra.mxu0 %v911
  %v1038 = vpop.f32.mrf.mxu0
  %v1039 = vadd.f32 %v43, %v1038
  %v1040 = vpop.f32.mrf.mxu0
  %1041 = vmatprep.mubr.f32.mxu0 0.0
  %1042 = vmatmul.mubr.f32.gmra.mxu0 %v914
  %v1043 = vpop.f32.mrf.mxu0
  %v1044 = vadd.f32 %v44, %v1043
  %v1045 = vpop.f32.mrf.mxu0
  %1046 = vmatprep.mubr.f32.mxu0 0.0
  %1047 = vmatmul.mubr.f32.gmra.mxu0 %v917
  %v1048 = vpop.f32.mrf.mxu0
  %v1049 = vadd.f32 %v45, %v1048
  %v1050 = vpop.f32.mrf.mxu0
  %1051 = vmatprep.mubr.f32.mxu0 0.0
  %1052 = vmatmul.mubr.f32.gmra.mxu0 %v920
  %v1053 = vpop.f32.mrf.mxu0
  %v1054 = vadd.f32 %v46, %v1053
  %v1055 = vpop.f32.mrf.mxu0
  %1056 = vmatprep.mubr.f32.mxu0 0.0
  %1057 = vmatmul.mubr.f32.gmra.mxu0 %v923
  %v1058 = vpop.f32.mrf.mxu0
  %v1059 = vadd.f32 %v47, %v1058
  %v1060 = vpop.f32.mrf.mxu0
  %1061 = vmatprep.mubr.f32.mxu0 0.0
  %1062 = vmatmul.mubr.f32.gmra.mxu0 %v926
  %v1063 = vpop.f32.mrf.mxu0
  %v1064 = vadd.f32 %v48, %v1063
  %v1065 = vpop.f32.mrf.mxu0
  %1066 = vmatprep.mubr.f32.mxu0 0.0
  %1067 = vmatmul.mubr.f32.gmra.mxu0 %v929
  %v1068 = vpop.f32.mrf.mxu0
  %v1069 = vadd.f32 %v49, %v1068
  %v1070 = vpop.f32.mrf.mxu0
  %1071 = vmatprep.mubr.f32.mxu0 0.0
  %1072 = vmatmul.mubr.f32.gmra.mxu0 %v932
  %v1073 = vpop.f32.mrf.mxu0
  %v1074 = vadd.f32 %v50, %v1073
  %v1075 = vpop.f32.mrf.mxu0
  %1076 = vmatprep.mubr.f32.mxu0 0.0
  %1077 = vmatmul.mubr.f32.gmra.mxu0 %v935
  %v1078 = vpop.f32.mrf.mxu0
  %v1079 = vadd.f32 %v51, %v1078
  %v1080 = vpop.f32.mrf.mxu0
  %1081 = vdwg.mxu0
  %1082 = vmax.xlane.f32.xlu0 %v1004
  %v1083 = vpop.xlane.xlu0 %1082
  %1084 = vmax.xlane.f32.xlu0 %v1009
  %v1085 = vpop.xlane.xlu0 %1084
  %1086 = vmax.xlane.f32.xlu0 %v1014
  %v1087 = vpop.xlane.xlu0 %1086
  %1088 = vmax.xlane.f32.xlu0 %v1019
  %v1089 = vpop.xlane.xlu0 %1088
  %1090 = vmax.xlane.f32.xlu0 %v1024
  %v1091 = vpop.xlane.xlu0 %1090
  %1092 = vmax.xlane.f32.xlu0 %v1029
  %v1093 = vpop.xlane.xlu0 %1092
  %1094 = vmax.xlane.f32.xlu0 %v1034
  %v1095 = vpop.xlane.xlu0 %1094
  %1096 = vmax.xlane.f32.xlu0 %v1039
  %v1097 = vpop.xlane.xlu0 %1096
  %1098 = vmax.xlane.f32.xlu0 %v1044
  %v1099 = vpop.xlane.xlu0 %1098
  %1100 = vmax.xlane.f32.xlu0 %v1049
  %v1101 = vpop.xlane.xlu0 %1100
  %1102 = vmax.xlane.f32.xlu0 %v1054
  %v1103 = vpop.xlane.xlu0 %1102
  %1104 = vmax.xlane.f32.xlu0 %v1059
  %v1105 = vpop.xlane.xlu0 %1104
  %1106 = vmax.xlane.f32.xlu0 %v1064
  %v1107 = vpop.xlane.xlu0 %1106
  %1108 = vmax.xlane.f32.xlu0 %v1069
  %v1109 = vpop.xlane.xlu0 %1108
  %1110 = vmax.xlane.f32.xlu0 %v1074
  %v1111 = vpop.xlane.xlu0 %1110
  %1112 = vmax.xlane.f32.xlu0 %v1079
  %v1113 = vpop.xlane.xlu0 %1112
  %v1114 = vsub.f32 %v1004, %v1083
  %v1115 = vsub.f32 %v1009, %v1085
  %v1116 = vsub.f32 %v1014, %v1087
  %v1117 = vsub.f32 %v1019, %v1089
  %v1118 = vsub.f32 %v1024, %v1091
  %v1119 = vsub.f32 %v1029, %v1093
  %v1120 = vsub.f32 %v1034, %v1095
  %v1121 = vsub.f32 %v1039, %v1097
  %v1122 = vsub.f32 %v1044, %v1099
  %v1123 = vsub.f32 %v1049, %v1101
  %v1124 = vsub.f32 %v1054, %v1103
  %v1125 = vsub.f32 %v1059, %v1105
  %v1126 = vsub.f32 %v1064, %v1107
  %v1127 = vsub.f32 %v1069, %v1109
  %v1128 = vsub.f32 %v1074, %v1111
  %v1129 = vsub.f32 %v1079, %v1113
  %v1130 = vmul.f32 %v1114, 1.442695
  %v1131 = vpow.pop %v1130
  %v1132 = vmul.f32 %v1115, 1.442695
  %v1133 = vpow.pop %v1132
  %v1134 = vmul.f32 %v1116, 1.442695
  %v1135 = vpow.pop %v1134
  %v1136 = vmul.f32 %v1117, 1.442695
  %v1137 = vpow.pop %v1136
  %v1138 = vmul.f32 %v1118, 1.442695
  %v1139 = vpow.pop %v1138
  %v1140 = vmul.f32 %v1119, 1.442695
  %v1141 = vpow.pop %v1140
  %v1142 = vmul.f32 %v1120, 1.442695
  %v1143 = vpow.pop %v1142
  %v1144 = vmul.f32 %v1121, 1.442695
  %v1145 = vpow.pop %v1144
  %v1146 = vmul.f32 %v1122, 1.442695
  %v1147 = vpow.pop %v1146
  %v1148 = vmul.f32 %v1123, 1.442695
  %v1149 = vpow.pop %v1148
  %v1150 = vmul.f32 %v1124, 1.442695
  %v1151 = vpow.pop %v1150
  %v1152 = vmul.f32 %v1125, 1.442695
  %v1153 = vpow.pop %v1152
  %v1154 = vmul.f32 %v1126, 1.442695
  %v1155 = vpow.pop %v1154
  %v1156 = vmul.f32 %v1127, 1.442695
  %v1157 = vpow.pop %v1156
  %v1158 = vmul.f32 %v1128, 1.442695
  %v1159 = vpow.pop %v1158
  %v1160 = vmul.f32 %v1129, 1.442695
  %v1161 = vpow.pop %v1160
  %1162 = vadd.xlane.f32.xlu0 %v1131
  %v1163 = vpop.xlane.xlu0 %1162
  %1164 = vadd.xlane.f32.xlu0 %v1133
  %v1165 = vpop.xlane.xlu0 %1164
  %1166 = vadd.xlane.f32.xlu0 %v1135
  %v1167 = vpop.xlane.xlu0 %1166
  %1168 = vadd.xlane.f32.xlu0 %v1137
  %v1169 = vpop.xlane.xlu0 %1168
  %1170 = vadd.xlane.f32.xlu0 %v1139
  %v1171 = vpop.xlane.xlu0 %1170
  %1172 = vadd.xlane.f32.xlu0 %v1141
  %v1173 = vpop.xlane.xlu0 %1172
  %1174 = vadd.xlane.f32.xlu0 %v1143
  %v1175 = vpop.xlane.xlu0 %1174
  %1176 = vadd.xlane.f32.xlu0 %v1145
  %v1177 = vpop.xlane.xlu0 %1176
  %1178 = vadd.xlane.f32.xlu0 %v1147
  %v1179 = vpop.xlane.xlu0 %1178
  %1180 = vadd.xlane.f32.xlu0 %v1149
  %v1181 = vpop.xlane.xlu0 %1180
  %1182 = vadd.xlane.f32.xlu0 %v1151
  %v1183 = vpop.xlane.xlu0 %1182
  %1184 = vadd.xlane.f32.xlu0 %v1153
  %v1185 = vpop.xlane.xlu0 %1184
  %1186 = vadd.xlane.f32.xlu0 %v1155
  %v1187 = vpop.xlane.xlu0 %1186
  %1188 = vadd.xlane.f32.xlu0 %v1157
  %v1189 = vpop.xlane.xlu0 %1188
  %1190 = vadd.xlane.f32.xlu0 %v1159
  %v1191 = vpop.xlane.xlu0 %1190
  %1192 = vadd.xlane.f32.xlu0 %v1161
  %v1193 = vpop.xlane.xlu0 %1192
  %v1194 = vrcp.pop %v1163
  %v1195 = vrcp.pop %v1165
  %v1196 = vrcp.pop %v1167
  %v1197 = vrcp.pop %v1169
  %v1198 = vrcp.pop %v1171
  %v1199 = vrcp.pop %v1173
  %v1200 = vrcp.pop %v1175
  %v1201 = vrcp.pop %v1177
  %v1202 = vrcp.pop %v1179
  %v1203 = vrcp.pop %v1181
  %v1204 = vrcp.pop %v1183
  %v1205 = vrcp.pop %v1185
  %v1206 = vrcp.pop %v1187
  %v1207 = vrcp.pop %v1189
  %v1208 = vrcp.pop %v1191
  %v1209 = vrcp.pop %v1193
  %v1210 = vmul.f32 %v1131, %v1194
  %v1211 = vmul.f32 %v1133, %v1195
  %v1212 = vmul.f32 %v1135, %v1196
  %v1213 = vmul.f32 %v1137, %v1197
  %v1214 = vmul.f32 %v1139, %v1198
  %v1215 = vmul.f32 %v1141, %v1199
  %v1216 = vmul.f32 %v1143, %v1200
  %v1217 = vmul.f32 %v1145, %v1201
  %v1218 = vmul.f32 %v1147, %v1202
  %v1219 = vmul.f32 %v1149, %v1203
  %v1220 = vmul.f32 %v1151, %v1204
  %v1221 = vmul.f32 %v1153, %v1205
  %v1222 = vmul.f32 %v1155, %v1206
  %v1223 = vmul.f32 %v1157, %v1207
  %v1224 = vmul.f32 %v1159, %v1208
  %v1225 = vmul.f32 %v1161, %v1209
  %1226 = vmatprep.subr.mxu0 0.0
  %1227 = vmatpush1.msra.mxu0 %v35
  %1228 = vmatprep.subr.mxu0 0.0
  %1229 = vmatpush1.msra.mxu0 %v34
  %1230 = vmatprep.subr.mxu0 0.0
  %1231 = vmatpush1.msra.mxu0 %v33
  %1232 = vmatprep.subr.mxu0 0.0
  %1233 = vmatpush1.msra.mxu0 %v32
  %1234 = vmatprep.subr.mxu0 0.0
  %1235 = vmatpush1.msra.mxu0 %v31
  %1236 = vmatprep.subr.mxu0 0.0
  %1237 = vmatpush1.msra.mxu0 %v30
  %1238 = vmatprep.subr.mxu0 0.0
  %1239 = vmatpush1.msra.mxu0 %v29
  %1240 = vmatprep.subr.mxu0 0.0
  %1241 = vmatpush1.msra.mxu0 %v28
  %1242 = vmatprep.subr.mxu0 0.0
  %1243 = vmatpush1.msra.mxu0 %v27
  %1244 = vmatprep.subr.mxu0 0.0
  %1245 = vmatpush1.msra.mxu0 %v26
  %1246 = vmatprep.subr.mxu0 0.0
  %1247 = vmatpush1.msra.mxu0 %v25
  %1248 = vmatprep.subr.mxu0 0.0
  %1249 = vmatpush1.msra.mxu0 %v24
  %1250 = vmatprep.subr.mxu0 0.0
  %1251 = vmatpush1.msra.mxu0 %v23
  %1252 = vmatprep.subr.mxu0 0.0
  %1253 = vmatpush1.msra.mxu0 %v22
  %1254 = vmatprep.subr.mxu0 0.0
  %1255 = vmatpush1.msra.mxu0 %v21
  %1256 = vmatprep.subr.mxu0 0.0
  %1257 = vmatpush1.msra.mxu0 %v20
  %1258 = vmatprep.subr.mxu0 0.0
  %1259 = vmatpush2.msra.mxu0 0.0
  %1260 = vmatprep.subr.mxu0 0.0
  %1261 = vmatpush2.msra.mxu0 0.0
  %1262 = vmatprep.subr.mxu0 0.0
  %1263 = vmatpush2.msra.mxu0 0.0
  %1264 = vmatprep.subr.mxu0 0.0
  %1265 = vmatpush2.msra.mxu0 0.0
  %1266 = vmatprep.subr.mxu0 0.0
  %1267 = vmatpush2.msra.mxu0 0.0
  %1268 = vmatprep.subr.mxu0 0.0
  %1269 = vmatpush2.msra.mxu0 0.0
  %1270 = vmatprep.subr.mxu0 0.0
  %1271 = vmatpush2.msra.mxu0 0.0
  %1272 = vmatprep.subr.mxu0 0.0
  %1273 = vmatpush2.msra.mxu0 0.0
  %1274 = vmatprep.subr.mxu0 0.0
  %1275 = vmatpush2.msra.mxu0 0.0
  %1276 = vmatprep.subr.mxu0 0.0
  %1277 = vmatpush2.msra.mxu0 0.0
  %1278 = vmatprep.subr.mxu0 0.0
  %1279 = vmatpush2.msra.mxu0 0.0
  %1280 = vmatprep.subr.mxu0 0.0
  %1281 = vmatpush2.msra.mxu0 0.0
  %1282 = vmatprep.subr.mxu0 0.0
  %1283 = vmatpush2.msra.mxu0 0.0
  %1284 = vmatprep.subr.mxu0 0.0
  %1285 = vmatpush2.msra.mxu0 0.0
  %1286 = vmatprep.subr.mxu0 0.0
  %1287 = vmatpush2.msra.mxu0 0.0
  %1288 = vmatprep.subr.mxu0 0.0
  %1289 = vmatpush2.msra.mxu0 0.0
  %1290 = vmatprep.mubr.f32.mxu0 0.0
  %1291 = vmatmul.mubr.f32.gmra.mxu0 %v1210
  %v1292 = vpop.f32.mrf.mxu0
  %v1293 = vadd.f32 0.0, %v1292
  %v1294 = vpop.f32.mrf.mxu0
  %1295 = vmatprep.mubr.f32.mxu0 0.0
  %1296 = vmatmul.mubr.f32.gmra.mxu0 %v1211
  %v1297 = vpop.f32.mrf.mxu0
  %v1298 = vadd.f32 0.0, %v1297
  %v1299 = vpop.f32.mrf.mxu0
  %1300 = vmatprep.mubr.f32.mxu0 0.0
  %1301 = vmatmul.mubr.f32.gmra.mxu0 %v1212
  %v1302 = vpop.f32.mrf.mxu0
  %v1303 = vadd.f32 0.0, %v1302
  %v1304 = vpop.f32.mrf.mxu0
  %1305 = vmatprep.mubr.f32.mxu0 0.0
  %1306 = vmatmul.mubr.f32.gmra.mxu0 %v1213
  %v1307 = vpop.f32.mrf.mxu0
  %v1308 = vadd.f32 0.0, %v1307
  %v1309 = vpop.f32.mrf.mxu0
  %1310 = vmatprep.mubr.f32.mxu0 0.0
  %1311 = vmatmul.mubr.f32.gmra.mxu0 %v1214
  %v1312 = vpop.f32.mrf.mxu0
  %v1313 = vadd.f32 0.0, %v1312
  %v1314 = vpop.f32.mrf.mxu0
  %1315 = vmatprep.mubr.f32.mxu0 0.0
  %1316 = vmatmul.mubr.f32.gmra.mxu0 %v1215
  %v1317 = vpop.f32.mrf.mxu0
  %v1318 = vadd.f32 0.0, %v1317
  %v1319 = vpop.f32.mrf.mxu0
  %1320 = vmatprep.mubr.f32.mxu0 0.0
  %1321 = vmatmul.mubr.f32.gmra.mxu0 %v1216
  %v1322 = vpop.f32.mrf.mxu0
  %v1323 = vadd.f32 0.0, %v1322
  %v1324 = vpop.f32.mrf.mxu0
  %1325 = vmatprep.mubr.f32.mxu0 0.0
  %1326 = vmatmul.mubr.f32.gmra.mxu0 %v1217
  %v1327 = vpop.f32.mrf.mxu0
  %v1328 = vadd.f32 0.0, %v1327
  %v1329 = vpop.f32.mrf.mxu0
  %1330 = vmatprep.mubr.f32.mxu0 0.0
  %1331 = vmatmul.mubr.f32.gmra.mxu0 %v1218
  %v1332 = vpop.f32.mrf.mxu0
  %v1333 = vadd.f32 0.0, %v1332
  %v1334 = vpop.f32.mrf.mxu0
  %1335 = vmatprep.mubr.f32.mxu0 0.0
  %1336 = vmatmul.mubr.f32.gmra.mxu0 %v1219
  %v1337 = vpop.f32.mrf.mxu0
  %v1338 = vadd.f32 0.0, %v1337
  %v1339 = vpop.f32.mrf.mxu0
  %1340 = vmatprep.mubr.f32.mxu0 0.0
  %1341 = vmatmul.mubr.f32.gmra.mxu0 %v1220
  %v1342 = vpop.f32.mrf.mxu0
  %v1343 = vadd.f32 0.0, %v1342
  %v1344 = vpop.f32.mrf.mxu0
  %1345 = vmatprep.mubr.f32.mxu0 0.0
  %1346 = vmatmul.mubr.f32.gmra.mxu0 %v1221
  %v1347 = vpop.f32.mrf.mxu0
  %v1348 = vadd.f32 0.0, %v1347
  %v1349 = vpop.f32.mrf.mxu0
  %1350 = vmatprep.mubr.f32.mxu0 0.0
  %1351 = vmatmul.mubr.f32.gmra.mxu0 %v1222
  %v1352 = vpop.f32.mrf.mxu0
  %v1353 = vadd.f32 0.0, %v1352
  %v1354 = vpop.f32.mrf.mxu0
  %1355 = vmatprep.mubr.f32.mxu0 0.0
  %1356 = vmatmul.mubr.f32.gmra.mxu0 %v1223
  %v1357 = vpop.f32.mrf.mxu0
  %v1358 = vadd.f32 0.0, %v1357
  %v1359 = vpop.f32.mrf.mxu0
  %1360 = vmatprep.mubr.f32.mxu0 0.0
  %1361 = vmatmul.mubr.f32.gmra.mxu0 %v1224
  %v1362 = vpop.f32.mrf.mxu0
  %v1363 = vadd.f32 0.0, %v1362
  %v1364 = vpop.f32.mrf.mxu0
  %1365 = vmatprep.mubr.f32.mxu0 0.0
  %1366 = vmatmul.mubr.f32.gmra.mxu0 %v1225
  %v1367 = vpop.f32.mrf.mxu0
  %v1368 = vadd.f32 0.0, %v1367
  %v1369 = vpop.f32.mrf.mxu0
  %1370 = vdwg.mxu0
  %s1371 = scalar_lea.vmem %s3, 40
  %v1372 = vld [vmem:[%s1371] sm:$0xff]
  %v1373 = vld [vmem:[%s1371 + $0x8] sm:$0xff]
  %v1374 = vld [vmem:[%s1371 + $0x10] sm:$0xff]
  %v1375 = vld [vmem:[%s1371 + $0x18] sm:$0xff]
  %v1376 = vld [vmem:[%s1371 + $0x20] sm:$0xff]
  %v1378 = vsel %vm57, %v1293, 0
  %v1381 = vsel %vm57, %v1298, 0
  %v1384 = vsel %vm57, %v1303, 0
  %v1387 = vsel %vm57, %v1308, 0
  %v1390 = vsel %vm57, %v1313, 0
  %v1393 = vsel %vm57, %v1318, 0
  %v1396 = vsel %vm57, %v1323, 0
  %v1399 = vsel %vm57, %v1328, 0
  %v1402 = vsel %vm57, %v1333, 0
  %v1405 = vsel %vm57, %v1338, 0
  %v1408 = vsel %vm57, %v1343, 0
  %v1411 = vsel %vm57, %v1348, 0
  %v1414 = vsel %vm57, %v1353, 0
  %v1417 = vsel %vm57, %v1358, 0
  %v1420 = vsel %vm57, %v1363, 0
  %v1423 = vsel %vm57, %v1368, 0
  %1425 = vmatprep.subr.mxu0 0.0
  %1426 = vmatpush1.msra.mxu0 0.0
  %1427 = vmatprep.subr.mxu0 0.0
  %1428 = vmatpush1.msra.mxu0 0.0
  %1429 = vmatprep.subr.mxu0 0.0
  %1430 = vmatpush1.msra.mxu0 0.0
  %1431 = vmatprep.subr.mxu0 0.0
  %1432 = vmatpush1.msra.mxu0 0.0
  %1433 = vmatprep.subr.mxu0 0.0
  %1434 = vmatpush1.msra.mxu0 0.0
  %1435 = vmatprep.subr.mxu0 0.0
  %1436 = vmatpush1.msra.mxu0 0.0
  %1437 = vmatprep.subr.mxu0 0.0
  %1438 = vmatpush1.msra.mxu0 0.0
  %1439 = vmatprep.subr.mxu0 0.0
  %1440 = vmatpush1.msra.mxu0 0.0
  %1441 = vmatprep.subr.mxu0 0.0
  %1442 = vmatpush1.msra.mxu0 0.0
  %1443 = vmatprep.subr.mxu0 0.0
  %1444 = vmatpush1.msra.mxu0 0.0
  %1445 = vmatprep.subr.mxu0 0.0
  %1446 = vmatpush1.msra.mxu0 0.0
  %1447 = vmatprep.subr.mxu0 0.0
  %1448 = vmatpush1.msra.mxu0 %v1376
  %1449 = vmatprep.subr.mxu0 0.0
  %1450 = vmatpush1.msra.mxu0 %v1375
  %1451 = vmatprep.subr.mxu0 0.0
  %1452 = vmatpush1.msra.mxu0 %v1374
  %1453 = vmatprep.subr.mxu0 0.0
  %1454 = vmatpush1.msra.mxu0 %v1373
  %1455 = vmatprep.subr.mxu0 0.0
  %1456 = vmatpush1.msra.mxu0 %v1372
  %1457 = vmatprep.subr.mxu0 0.0
  %1458 = vmatpush2.msra.mxu0 0.0
  %1459 = vmatprep.subr.mxu0 0.0
  %1460 = vmatpush2.msra.mxu0 0.0
  %1461 = vmatprep.subr.mxu0 0.0
  %1462 = vmatpush2.msra.mxu0 0.0
  %1463 = vmatprep.subr.mxu0 0.0
  %1464 = vmatpush2.msra.mxu0 0.0
  %1465 = vmatprep.subr.mxu0 0.0
  %1466 = vmatpush2.msra.mxu0 0.0
  %1467 = vmatprep.subr.mxu0 0.0
  %1468 = vmatpush2.msra.mxu0 0.0
  %1469 = vmatprep.subr.mxu0 0.0
  %1470 = vmatpush2.msra.mxu0 0.0
  %1471 = vmatprep.subr.mxu0 0.0
  %1472 = vmatpush2.msra.mxu0 0.0
  %1473 = vmatprep.subr.mxu0 0.0
  %1474 = vmatpush2.msra.mxu0 0.0
  %1475 = vmatprep.subr.mxu0 0.0
  %1476 = vmatpush2.msra.mxu0 0.0
  %1477 = vmatprep.subr.mxu0 0.0
  %1478 = vmatpush2.msra.mxu0 0.0
  %1479 = vmatprep.subr.mxu0 0.0
  %1480 = vmatpush2.msra.mxu0 0.0
  %1481 = vmatprep.subr.mxu0 0.0
  %1482 = vmatpush2.msra.mxu0 0.0
  %1483 = vmatprep.subr.mxu0 0.0
  %1484 = vmatpush2.msra.mxu0 0.0
  %1485 = vmatprep.subr.mxu0 0.0
  %1486 = vmatpush2.msra.mxu0 0.0
  %1487 = vmatprep.subr.mxu0 0.0
  %1488 = vmatpush2.msra.mxu0 0.0
  %1489 = vmatprep.mubr.f32.mxu0 0.0
  %1490 = vmatmul.mubr.f32.gmra.mxu0 %v1378
  %v1491 = vpop.f32.mrf.mxu0
  %v1492 = vadd.f32 0.0, %v1491
  %v1493 = vpop.f32.mrf.mxu0
  %1494 = vmatprep.mubr.f32.mxu0 0.0
  %1495 = vmatmul.mubr.f32.gmra.mxu0 %v1381
  %v1496 = vpop.f32.mrf.mxu0
  %v1497 = vadd.f32 0.0, %v1496
  %v1498 = vpop.f32.mrf.mxu0
  %1499 = vmatprep.mubr.f32.mxu0 0.0
  %1500 = vmatmul.mubr.f32.gmra.mxu0 %v1384
  %v1501 = vpop.f32.mrf.mxu0
  %v1502 = vadd.f32 0.0, %v1501
  %v1503 = vpop.f32.mrf.mxu0
  %1504 = vmatprep.mubr.f32.mxu0 0.0
  %1505 = vmatmul.mubr.f32.gmra.mxu0 %v1387
  %v1506 = vpop.f32.mrf.mxu0
  %v1507 = vadd.f32 0.0, %v1506
  %v1508 = vpop.f32.mrf.mxu0
  %1509 = vmatprep.mubr.f32.mxu0 0.0
  %1510 = vmatmul.mubr.f32.gmra.mxu0 %v1390
  %v1511 = vpop.f32.mrf.mxu0
  %v1512 = vadd.f32 0.0, %v1511
  %v1513 = vpop.f32.mrf.mxu0
  %1514 = vmatprep.mubr.f32.mxu0 0.0
  %1515 = vmatmul.mubr.f32.gmra.mxu0 %v1393
  %v1516 = vpop.f32.mrf.mxu0
  %v1517 = vadd.f32 0.0, %v1516
  %v1518 = vpop.f32.mrf.mxu0
  %1519 = vmatprep.mubr.f32.mxu0 0.0
  %1520 = vmatmul.mubr.f32.gmra.mxu0 %v1396
  %v1521 = vpop.f32.mrf.mxu0
  %v1522 = vadd.f32 0.0, %v1521
  %v1523 = vpop.f32.mrf.mxu0
  %1524 = vmatprep.mubr.f32.mxu0 0.0
  %1525 = vmatmul.mubr.f32.gmra.mxu0 %v1399
  %v1526 = vpop.f32.mrf.mxu0
  %v1527 = vadd.f32 0.0, %v1526
  %v1528 = vpop.f32.mrf.mxu0
  %1529 = vmatprep.mubr.f32.mxu0 0.0
  %1530 = vmatmul.mubr.f32.gmra.mxu0 %v1402
  %v1531 = vpop.f32.mrf.mxu0
  %v1532 = vadd.f32 0.0, %v1531
  %v1533 = vpop.f32.mrf.mxu0
  %1534 = vmatprep.mubr.f32.mxu0 0.0
  %1535 = vmatmul.mubr.f32.gmra.mxu0 %v1405
  %v1536 = vpop.f32.mrf.mxu0
  %v1537 = vadd.f32 0.0, %v1536
  %v1538 = vpop.f32.mrf.mxu0
  %1539 = vmatprep.mubr.f32.mxu0 0.0
  %1540 = vmatmul.mubr.f32.gmra.mxu0 %v1408
  %v1541 = vpop.f32.mrf.mxu0
  %v1542 = vadd.f32 0.0, %v1541
  %v1543 = vpop.f32.mrf.mxu0
  %1544 = vmatprep.mubr.f32.mxu0 0.0
  %1545 = vmatmul.mubr.f32.gmra.mxu0 %v1411
  %v1546 = vpop.f32.mrf.mxu0
  %v1547 = vadd.f32 0.0, %v1546
  %v1548 = vpop.f32.mrf.mxu0
  %1549 = vmatprep.mubr.f32.mxu0 0.0
  %1550 = vmatmul.mubr.f32.gmra.mxu0 %v1414
  %v1551 = vpop.f32.mrf.mxu0
  %v1552 = vadd.f32 0.0, %v1551
  %v1553 = vpop.f32.mrf.mxu0
  %1554 = vmatprep.mubr.f32.mxu0 0.0
  %1555 = vmatmul.mubr.f32.gmra.mxu0 %v1417
  %v1556 = vpop.f32.mrf.mxu0
  %v1557 = vadd.f32 0.0, %v1556
  %v1558 = vpop.f32.mrf.mxu0
  %1559 = vmatprep.mubr.f32.mxu0 0.0
  %1560 = vmatmul.mubr.f32.gmra.mxu0 %v1420
  %v1561 = vpop.f32.mrf.mxu0
  %v1562 = vadd.f32 0.0, %v1561
  %v1563 = vpop.f32.mrf.mxu0
  %1564 = vmatprep.mubr.f32.mxu0 0.0
  %1565 = vmatmul.mubr.f32.gmra.mxu0 %v1423
  %v1566 = vpop.f32.mrf.mxu0
  %v1567 = vadd.f32 0.0, %v1566
  %v1568 = vpop.f32.mrf.mxu0
  %1569 = vdwg.mxu0
  %v1571 = vsel %vm57, %v655, 0
  %v1574 = vsel %vm57, %v660, 0
  %v1577 = vsel %vm57, %v665, 0
  %v1580 = vsel %vm57, %v670, 0
  %v1583 = vsel %vm57, %v675, 0
  %v1586 = vsel %vm57, %v680, 0
  %v1589 = vsel %vm57, %v685, 0
  %v1592 = vsel %vm57, %v690, 0
  %v1595 = vsel %vm57, %v695, 0
  %v1598 = vsel %vm57, %v700, 0
  %v1601 = vsel %vm57, %v705, 0
  %v1604 = vsel %vm57, %v710, 0
  %v1607 = vsel %vm57, %v715, 0
  %v1610 = vsel %vm57, %v720, 0
  %v1613 = vsel %vm57, %v725, 0
  %v1616 = vsel %vm57, %v730, 0
  %1618 = vmatprep.subr.mxu0 0.0
  %1619 = vmatpush1.msra.mxu0 0.0
  %1620 = vmatprep.subr.mxu0 0.0
  %1621 = vmatpush1.msra.mxu0 0.0
  %1622 = vmatprep.subr.mxu0 0.0
  %1623 = vmatpush1.msra.mxu0 0.0
  %1624 = vmatprep.subr.mxu0 0.0
  %1625 = vmatpush1.msra.mxu0 0.0
  %1626 = vmatprep.subr.mxu0 0.0
  %1627 = vmatpush1.msra.mxu0 0.0
  %1628 = vmatprep.subr.mxu0 0.0
  %1629 = vmatpush1.msra.mxu0 0.0
  %1630 = vmatprep.subr.mxu0 0.0
  %1631 = vmatpush1.msra.mxu0 0.0
  %1632 = vmatprep.subr.mxu0 0.0
  %1633 = vmatpush1.msra.mxu0 0.0
  %1634 = vmatprep.subr.mxu0 0.0
  %1635 = vmatpush1.msra.mxu0 0.0
  %1636 = vmatprep.subr.mxu0 0.0
  %1637 = vmatpush1.msra.mxu0 0.0
  %1638 = vmatprep.subr.mxu0 0.0
  %1639 = vmatpush1.msra.mxu0 0.0
  %1640 = vmatprep.subr.mxu0 0.0
  %1641 = vmatpush1.msra.mxu0 %v737
  %1642 = vmatprep.subr.mxu0 0.0
  %1643 = vmatpush1.msra.mxu0 %v736
  %1644 = vmatprep.subr.mxu0 0.0
  %1645 = vmatpush1.msra.mxu0 %v735
  %1646 = vmatprep.subr.mxu0 0.0
  %1647 = vmatpush1.msra.mxu0 %v734
  %1648 = vmatprep.subr.mxu0 0.0
  %1649 = vmatpush1.msra.mxu0 %v733
  %1650 = vmatprep.subr.mxu0 0.0
  %1651 = vmatpush2.msra.mxu0 0.0
  %1652 = vmatprep.subr.mxu0 0.0
  %1653 = vmatpush2.msra.mxu0 0.0
  %1654 = vmatprep.subr.mxu0 0.0
  %1655 = vmatpush2.msra.mxu0 0.0
  %1656 = vmatprep.subr.mxu0 0.0
  %1657 = vmatpush2.msra.mxu0 0.0
  %1658 = vmatprep.subr.mxu0 0.0
  %1659 = vmatpush2.msra.mxu0 0.0
  %1660 = vmatprep.subr.mxu0 0.0
  %1661 = vmatpush2.msra.mxu0 0.0
  %1662 = vmatprep.subr.mxu0 0.0
  %1663 = vmatpush2.msra.mxu0 0.0
  %1664 = vmatprep.subr.mxu0 0.0
  %1665 = vmatpush2.msra.mxu0 0.0
  %1666 = vmatprep.subr.mxu0 0.0
  %1667 = vmatpush2.msra.mxu0 0.0
  %1668 = vmatprep.subr.mxu0 0.0
  %1669 = vmatpush2.msra.mxu0 0.0
  %1670 = vmatprep.subr.mxu0 0.0
  %1671 = vmatpush2.msra.mxu0 0.0
  %1672 = vmatprep.subr.mxu0 0.0
  %1673 = vmatpush2.msra.mxu0 0.0
  %1674 = vmatprep.subr.mxu0 0.0
  %1675 = vmatpush2.msra.mxu0 0.0
  %1676 = vmatprep.subr.mxu0 0.0
  %1677 = vmatpush2.msra.mxu0 0.0
  %1678 = vmatprep.subr.mxu0 0.0
  %1679 = vmatpush2.msra.mxu0 0.0
  %1680 = vmatprep.subr.mxu0 0.0
  %1681 = vmatpush2.msra.mxu0 0.0
  %1682 = vmatprep.mubr.f32.mxu0 0.0
  %1683 = vmatmul.mubr.f32.gmra.mxu0 %v1571
  %v1684 = vpop.f32.mrf.mxu0
  %v1685 = vadd.f32 %v1492, %v1684
  %v1686 = vpop.f32.mrf.mxu0
  %1687 = vmatprep.mubr.f32.mxu0 0.0
  %1688 = vmatmul.mubr.f32.gmra.mxu0 %v1574
  %v1689 = vpop.f32.mrf.mxu0
  %v1690 = vadd.f32 %v1497, %v1689
  %v1691 = vpop.f32.mrf.mxu0
  %1692 = vmatprep.mubr.f32.mxu0 0.0
  %1693 = vmatmul.mubr.f32.gmra.mxu0 %v1577
  %v1694 = vpop.f32.mrf.mxu0
  %v1695 = vadd.f32 %v1502, %v1694
  %v1696 = vpop.f32.mrf.mxu0
  %1697 = vmatprep.mubr.f32.mxu0 0.0
  %1698 = vmatmul.mubr.f32.gmra.mxu0 %v1580
  %v1699 = vpop.f32.mrf.mxu0
  %v1700 = vadd.f32 %v1507, %v1699
  %v1701 = vpop.f32.mrf.mxu0
  %1702 = vmatprep.mubr.f32.mxu0 0.0
  %1703 = vmatmul.mubr.f32.gmra.mxu0 %v1583
  %v1704 = vpop.f32.mrf.mxu0
  %v1705 = vadd.f32 %v1512, %v1704
  %v1706 = vpop.f32.mrf.mxu0
  %1707 = vmatprep.mubr.f32.mxu0 0.0
  %1708 = vmatmul.mubr.f32.gmra.mxu0 %v1586
  %v1709 = vpop.f32.mrf.mxu0
  %v1710 = vadd.f32 %v1517, %v1709
  %v1711 = vpop.f32.mrf.mxu0
  %1712 = vmatprep.mubr.f32.mxu0 0.0
  %1713 = vmatmul.mubr.f32.gmra.mxu0 %v1589
  %v1714 = vpop.f32.mrf.mxu0
  %v1715 = vadd.f32 %v1522, %v1714
  %v1716 = vpop.f32.mrf.mxu0
  %1717 = vmatprep.mubr.f32.mxu0 0.0
  %1718 = vmatmul.mubr.f32.gmra.mxu0 %v1592
  %v1719 = vpop.f32.mrf.mxu0
  %v1720 = vadd.f32 %v1527, %v1719
  %v1721 = vpop.f32.mrf.mxu0
  %1722 = vmatprep.mubr.f32.mxu0 0.0
  %1723 = vmatmul.mubr.f32.gmra.mxu0 %v1595
  %v1724 = vpop.f32.mrf.mxu0
  %v1725 = vadd.f32 %v1532, %v1724
  %v1726 = vpop.f32.mrf.mxu0
  %1727 = vmatprep.mubr.f32.mxu0 0.0
  %1728 = vmatmul.mubr.f32.gmra.mxu0 %v1598
  %v1729 = vpop.f32.mrf.mxu0
  %v1730 = vadd.f32 %v1537, %v1729
  %v1731 = vpop.f32.mrf.mxu0
  %1732 = vmatprep.mubr.f32.mxu0 0.0
  %1733 = vmatmul.mubr.f32.gmra.mxu0 %v1601
  %v1734 = vpop.f32.mrf.mxu0
  %v1735 = vadd.f32 %v1542, %v1734
  %v1736 = vpop.f32.mrf.mxu0
  %1737 = vmatprep.mubr.f32.mxu0 0.0
  %1738 = vmatmul.mubr.f32.gmra.mxu0 %v1604
  %v1739 = vpop.f32.mrf.mxu0
  %v1740 = vadd.f32 %v1547, %v1739
  %v1741 = vpop.f32.mrf.mxu0
  %1742 = vmatprep.mubr.f32.mxu0 0.0
  %1743 = vmatmul.mubr.f32.gmra.mxu0 %v1607
  %v1744 = vpop.f32.mrf.mxu0
  %v1745 = vadd.f32 %v1552, %v1744
  %v1746 = vpop.f32.mrf.mxu0
  %1747 = vmatprep.mubr.f32.mxu0 0.0
  %1748 = vmatmul.mubr.f32.gmra.mxu0 %v1610
  %v1749 = vpop.f32.mrf.mxu0
  %v1750 = vadd.f32 %v1557, %v1749
  %v1751 = vpop.f32.mrf.mxu0
  %1752 = vmatprep.mubr.f32.mxu0 0.0
  %1753 = vmatmul.mubr.f32.gmra.mxu0 %v1613
  %v1754 = vpop.f32.mrf.mxu0
  %v1755 = vadd.f32 %v1562, %v1754
  %v1756 = vpop.f32.mrf.mxu0
  %1757 = vmatprep.mubr.f32.mxu0 0.0
  %1758 = vmatmul.mubr.f32.gmra.mxu0 %v1616
  %v1759 = vpop.f32.mrf.mxu0
  %v1760 = vadd.f32 %v1567, %v1759
  %v1761 = vpop.f32.mrf.mxu0
  %1762 = vdwg.mxu0
  %s1763 = scalar_lea.vmem %s2, 80
  %v1764 = vld [vmem:[%s1763] sm:$0xff]
  %v1765 = vld [vmem:[%s1763 + $0x8] sm:$0xff]
  %v1766 = vld [vmem:[%s1763 + $0x10] sm:$0xff]
  %v1767 = vld [vmem:[%s1763 + $0x18] sm:$0xff]
  %v1768 = vld [vmem:[%s1763 + $0x20] sm:$0xff]
  %1769 = vmatprep.subr.mxu0 0.0
  %1770 = vmatpush1.msra.mxu0 0.0
  %1771 = vmatprep.subr.mxu0 0.0
  %1772 = vmatpush1.msra.mxu0 0.0
  %1773 = vmatprep.subr.mxu0 0.0
  %1774 = vmatpush1.msra.mxu0 0.0
  %1775 = vmatprep.subr.mxu0 0.0
  %1776 = vmatpush1.msra.mxu0 0.0
  %1777 = vmatprep.subr.mxu0 0.0
  %1778 = vmatpush1.msra.mxu0 0.0
  %1779 = vmatprep.subr.mxu0 0.0
  %1780 = vmatpush1.msra.mxu0 0.0
  %1781 = vmatprep.subr.mxu0 0.0
  %1782 = vmatpush1.msra.mxu0 0.0
  %1783 = vmatprep.subr.mxu0 0.0
  %1784 = vmatpush1.msra.mxu0 0.0
  %1785 = vmatprep.subr.mxu0 0.0
  %1786 = vmatpush1.msra.mxu0 0.0
  %1787 = vmatprep.subr.mxu0 0.0
  %1788 = vmatpush1.msra.mxu0 0.0
  %1789 = vmatprep.subr.mxu0 0.0
  %1790 = vmatpush1.msra.mxu0 0.0
  %1791 = vmatprep.subr.mxu0 0.0
  %1792 = vmatpush1.msra.mxu0 %v1768
  %1793 = vmatprep.subr.mxu0 0.0
  %1794 = vmatpush1.msra.mxu0 %v1767
  %1795 = vmatprep.subr.mxu0 0.0
  %1796 = vmatpush1.msra.mxu0 %v1766
  %1797 = vmatprep.subr.mxu0 0.0
  %1798 = vmatpush1.msra.mxu0 %v1765
  %1799 = vmatprep.subr.mxu0 0.0
  %1800 = vmatpush1.msra.mxu0 %v1764
  %1801 = vmatprep.subr.mxu0 0.0
  %1802 = vmatpush2.msra.mxu0 0.0
  %1803 = vmatprep.subr.mxu0 0.0
  %1804 = vmatpush2.msra.mxu0 0.0
  %1805 = vmatprep.subr.mxu0 0.0
  %1806 = vmatpush2.msra.mxu0 0.0
  %1807 = vmatprep.subr.mxu0 0.0
  %1808 = vmatpush2.msra.mxu0 0.0
  %1809 = vmatprep.subr.mxu0 0.0
  %1810 = vmatpush2.msra.mxu0 0.0
  %1811 = vmatprep.subr.mxu0 0.0
  %1812 = vmatpush2.msra.mxu0 0.0
  %1813 = vmatprep.subr.mxu0 0.0
  %1814 = vmatpush2.msra.mxu0 0.0
  %1815 = vmatprep.subr.mxu0 0.0
  %1816 = vmatpush2.msra.mxu0 0.0
  %1817 = vmatprep.subr.mxu0 0.0
  %1818 = vmatpush2.msra.mxu0 0.0
  %1819 = vmatprep.subr.mxu0 0.0
  %1820 = vmatpush2.msra.mxu0 0.0
  %1821 = vmatprep.subr.mxu0 0.0
  %1822 = vmatpush2.msra.mxu0 0.0
  %1823 = vmatprep.subr.mxu0 0.0
  %1824 = vmatpush2.msra.mxu0 0.0
  %1825 = vmatprep.subr.mxu0 0.0
  %1826 = vmatpush2.msra.mxu0 0.0
  %1827 = vmatprep.subr.mxu0 0.0
  %1828 = vmatpush2.msra.mxu0 0.0
  %1829 = vmatprep.subr.mxu0 0.0
  %1830 = vmatpush2.msra.mxu0 0.0
  %1831 = vmatprep.subr.mxu0 0.0
  %1832 = vmatpush2.msra.mxu0 0.0
  %1833 = vmatprep.mubr.f32.mxu0 0.0
  %1834 = vmatmul.mubr.f32.gmra.mxu0 %v59
  %v1835 = vpop.f32.mrf.mxu0
  %v1836 = vadd.f32 0.0, %v1835
  %v1837 = vpop.f32.mrf.mxu0
  %1838 = vmatprep.mubr.f32.mxu0 0.0
  %1839 = vmatmul.mubr.f32.gmra.mxu0 %v62
  %v1840 = vpop.f32.mrf.mxu0
  %v1841 = vadd.f32 0.0, %v1840
  %v1842 = vpop.f32.mrf.mxu0
  %1843 = vmatprep.mubr.f32.mxu0 0.0
  %1844 = vmatmul.mubr.f32.gmra.mxu0 %v65
  %v1845 = vpop.f32.mrf.mxu0
  %v1846 = vadd.f32 0.0, %v1845
  %v1847 = vpop.f32.mrf.mxu0
  %1848 = vmatprep.mubr.f32.mxu0 0.0
  %1849 = vmatmul.mubr.f32.gmra.mxu0 %v68
  %v1850 = vpop.f32.mrf.mxu0
  %v1851 = vadd.f32 0.0, %v1850
  %v1852 = vpop.f32.mrf.mxu0
  %1853 = vmatprep.mubr.f32.mxu0 0.0
  %1854 = vmatmul.mubr.f32.gmra.mxu0 %v71
  %v1855 = vpop.f32.mrf.mxu0
  %v1856 = vadd.f32 0.0, %v1855
  %v1857 = vpop.f32.mrf.mxu0
  %1858 = vmatprep.mubr.f32.mxu0 0.0
  %1859 = vmatmul.mubr.f32.gmra.mxu0 %v74
  %v1860 = vpop.f32.mrf.mxu0
  %v1861 = vadd.f32 0.0, %v1860
  %v1862 = vpop.f32.mrf.mxu0
  %1863 = vmatprep.mubr.f32.mxu0 0.0
  %1864 = vmatmul.mubr.f32.gmra.mxu0 %v77
  %v1865 = vpop.f32.mrf.mxu0
  %v1866 = vadd.f32 0.0, %v1865
  %v1867 = vpop.f32.mrf.mxu0
  %1868 = vmatprep.mubr.f32.mxu0 0.0
  %1869 = vmatmul.mubr.f32.gmra.mxu0 %v80
  %v1870 = vpop.f32.mrf.mxu0
  %v1871 = vadd.f32 0.0, %v1870
  %v1872 = vpop.f32.mrf.mxu0
  %1873 = vmatprep.mubr.f32.mxu0 0.0
  %1874 = vmatmul.mubr.f32.gmra.mxu0 %v83
  %v1875 = vpop.f32.mrf.mxu0
  %v1876 = vadd.f32 0.0, %v1875
  %v1877 = vpop.f32.mrf.mxu0
  %1878 = vmatprep.mubr.f32.mxu0 0.0
  %1879 = vmatmul.mubr.f32.gmra.mxu0 %v86
  %v1880 = vpop.f32.mrf.mxu0
  %v1881 = vadd.f32 0.0, %v1880
  %v1882 = vpop.f32.mrf.mxu0
  %1883 = vmatprep.mubr.f32.mxu0 0.0
  %1884 = vmatmul.mubr.f32.gmra.mxu0 %v89
  %v1885 = vpop.f32.mrf.mxu0
  %v1886 = vadd.f32 0.0, %v1885
  %v1887 = vpop.f32.mrf.mxu0
  %1888 = vmatprep.mubr.f32.mxu0 0.0
  %1889 = vmatmul.mubr.f32.gmra.mxu0 %v92
  %v1890 = vpop.f32.mrf.mxu0
  %v1891 = vadd.f32 0.0, %v1890
  %v1892 = vpop.f32.mrf.mxu0
  %1893 = vmatprep.mubr.f32.mxu0 0.0
  %1894 = vmatmul.mubr.f32.gmra.mxu0 %v95
  %v1895 = vpop.f32.mrf.mxu0
  %v1896 = vadd.f32 0.0, %v1895
  %v1897 = vpop.f32.mrf.mxu0
  %1898 = vmatprep.mubr.f32.mxu0 0.0
  %1899 = vmatmul.mubr.f32.gmra.mxu0 %v98
  %v1900 = vpop.f32.mrf.mxu0
  %v1901 = vadd.f32 0.0, %v1900
  %v1902 = vpop.f32.mrf.mxu0
  %1903 = vmatprep.mubr.f32.mxu0 0.0
  %1904 = vmatmul.mubr.f32.gmra.mxu0 %v101
  %v1905 = vpop.f32.mrf.mxu0
  %v1906 = vadd.f32 0.0, %v1905
  %v1907 = vpop.f32.mrf.mxu0
  %1908 = vmatprep.mubr.f32.mxu0 0.0
  %1909 = vmatmul.mubr.f32.gmra.mxu0 %v104
  %v1910 = vpop.f32.mrf.mxu0
  %v1911 = vadd.f32 0.0, %v1910
  %v1912 = vpop.f32.mrf.mxu0
  %1913 = vdwg.mxu0
  %v1915 = vsel %vm57, %v1836, 0
  %v1918 = vsel %vm57, %v1841, 0
  %v1921 = vsel %vm57, %v1846, 0
  %v1924 = vsel %vm57, %v1851, 0
  %v1927 = vsel %vm57, %v1856, 0
  %v1930 = vsel %vm57, %v1861, 0
  %v1933 = vsel %vm57, %v1866, 0
  %v1936 = vsel %vm57, %v1871, 0
  %v1939 = vsel %vm57, %v1876, 0
  %v1942 = vsel %vm57, %v1881, 0
  %v1945 = vsel %vm57, %v1886, 0
  %v1948 = vsel %vm57, %v1891, 0
  %v1951 = vsel %vm57, %v1896, 0
  %v1954 = vsel %vm57, %v1901, 0
  %v1957 = vsel %vm57, %v1906, 0
  %v1960 = vsel %vm57, %v1911, 0
  %1962 = vmatprep.subr.mxu0 0.0
  %1963 = vmatpush1.xpose.msra.mxu0 %v104
  %1964 = vmatprep.subr.mxu0 0.0
  %1965 = vmatpush1.xpose.msra.mxu0 %v101
  %1966 = vmatprep.subr.mxu0 0.0
  %1967 = vmatpush1.xpose.msra.mxu0 %v98
  %1968 = vmatprep.subr.mxu0 0.0
  %1969 = vmatpush1.xpose.msra.mxu0 %v95
  %1970 = vmatprep.subr.mxu0 0.0
  %1971 = vmatpush1.xpose.msra.mxu0 %v92
  %1972 = vmatprep.subr.mxu0 0.0
  %1973 = vmatpush1.xpose.msra.mxu0 %v89
  %1974 = vmatprep.subr.mxu0 0.0
  %1975 = vmatpush1.xpose.msra.mxu0 %v86
  %1976 = vmatprep.subr.mxu0 0.0
  %1977 = vmatpush1.xpose.msra.mxu0 %v83
  %1978 = vmatprep.subr.mxu0 0.0
  %1979 = vmatpush1.xpose.msra.mxu0 %v80
  %1980 = vmatprep.subr.mxu0 0.0
  %1981 = vmatpush1.xpose.msra.mxu0 %v77
  %1982 = vmatprep.subr.mxu0 0.0
  %1983 = vmatpush1.xpose.msra.mxu0 %v74
  %1984 = vmatprep.subr.mxu0 0.0
  %1985 = vmatpush1.xpose.msra.mxu0 %v71
  %1986 = vmatprep.subr.mxu0 0.0
  %1987 = vmatpush1.xpose.msra.mxu0 %v68
  %1988 = vmatprep.subr.mxu0 0.0
  %1989 = vmatpush1.xpose.msra.mxu0 %v65
  %1990 = vmatprep.subr.mxu0 0.0
  %1991 = vmatpush1.xpose.msra.mxu0 %v62
  %1992 = vmatprep.subr.mxu0 0.0
  %1993 = vmatpush1.xpose.msra.mxu0 %v59
  %1994 = vmatprep.subr.mxu0 0.0
  %1995 = vmatpush2.xpose.msra.mxu0 0.0
  %1996 = vmatprep.subr.mxu0 0.0
  %1997 = vmatpush2.xpose.msra.mxu0 0.0
  %1998 = vmatprep.subr.mxu0 0.0
  %1999 = vmatpush2.xpose.msra.mxu0 0.0
  %2000 = vmatprep.subr.mxu0 0.0
  %2001 = vmatpush2.xpose.msra.mxu0 0.0
  %2002 = vmatprep.subr.mxu0 0.0
  %2003 = vmatpush2.xpose.msra.mxu0 0.0
  %2004 = vmatprep.subr.mxu0 0.0
  %2005 = vmatpush2.xpose.msra.mxu0 0.0
  %2006 = vmatprep.subr.mxu0 0.0
  %2007 = vmatpush2.xpose.msra.mxu0 0.0
  %2008 = vmatprep.subr.mxu0 0.0
  %2009 = vmatpush2.xpose.msra.mxu0 0.0
  %2010 = vmatprep.subr.mxu0 0.0
  %2011 = vmatpush2.xpose.msra.mxu0 0.0
  %2012 = vmatprep.subr.mxu0 0.0
  %2013 = vmatpush2.xpose.msra.mxu0 0.0
  %2014 = vmatprep.subr.mxu0 0.0
  %2015 = vmatpush2.xpose.msra.mxu0 0.0
  %2016 = vmatprep.subr.mxu0 0.0
  %2017 = vmatpush2.xpose.msra.mxu0 0.0
  %2018 = vmatprep.subr.mxu0 0.0
  %2019 = vmatpush2.xpose.msra.mxu0 0.0
  %2020 = vmatprep.subr.mxu0 0.0
  %2021 = vmatpush2.xpose.msra.mxu0 0.0
  %2022 = vmatprep.subr.mxu0 0.0
  %2023 = vmatpush2.xpose.msra.mxu0 0.0
  %2024 = vmatprep.subr.mxu0 0.0
  %2025 = vmatpush2.xpose.msra.mxu0 0.0
  %2026 = vmatprep.mubr.f32.mxu0 0.0
  %2027 = vmatmul.mubr.f32.gmra.mxu0 %v1915
  %v2028 = vpop.f32.mrf.mxu0
  %v2029 = vadd.f32 %v36, %v2028
  %v2030 = vpop.f32.mrf.mxu0
  %2031 = vmatprep.mubr.f32.mxu0 0.0
  %2032 = vmatmul.mubr.f32.gmra.mxu0 %v1918
  %v2033 = vpop.f32.mrf.mxu0
  %v2034 = vadd.f32 %v37, %v2033
  %v2035 = vpop.f32.mrf.mxu0
  %2036 = vmatprep.mubr.f32.mxu0 0.0
  %2037 = vmatmul.mubr.f32.gmra.mxu0 %v1921
  %v2038 = vpop.f32.mrf.mxu0
  %v2039 = vadd.f32 %v38, %v2038
  %v2040 = vpop.f32.mrf.mxu0
  %2041 = vmatprep.mubr.f32.mxu0 0.0
  %2042 = vmatmul.mubr.f32.gmra.mxu0 %v1924
  %v2043 = vpop.f32.mrf.mxu0
  %v2044 = vadd.f32 %v39, %v2043
  %v2045 = vpop.f32.mrf.mxu0
  %2046 = vmatprep.mubr.f32.mxu0 0.0
  %2047 = vmatmul.mubr.f32.gmra.mxu0 %v1927
  %v2048 = vpop.f32.mrf.mxu0
  %v2049 = vadd.f32 %v40, %v2048
  %v2050 = vpop.f32.mrf.mxu0
  %2051 = vmatprep.mubr.f32.mxu0 0.0
  %2052 = vmatmul.mubr.f32.gmra.mxu0 %v1930
  %v2053 = vpop.f32.mrf.mxu0
  %v2054 = vadd.f32 %v41, %v2053
  %v2055 = vpop.f32.mrf.mxu0
  %2056 = vmatprep.mubr.f32.mxu0 0.0
  %2057 = vmatmul.mubr.f32.gmra.mxu0 %v1933
  %v2058 = vpop.f32.mrf.mxu0
  %v2059 = vadd.f32 %v42, %v2058
  %v2060 = vpop.f32.mrf.mxu0
  %2061 = vmatprep.mubr.f32.mxu0 0.0
  %2062 = vmatmul.mubr.f32.gmra.mxu0 %v1936
  %v2063 = vpop.f32.mrf.mxu0
  %v2064 = vadd.f32 %v43, %v2063
  %v2065 = vpop.f32.mrf.mxu0
  %2066 = vmatprep.mubr.f32.mxu0 0.0
  %2067 = vmatmul.mubr.f32.gmra.mxu0 %v1939
  %v2068 = vpop.f32.mrf.mxu0
  %v2069 = vadd.f32 %v44, %v2068
  %v2070 = vpop.f32.mrf.mxu0
  %2071 = vmatprep.mubr.f32.mxu0 0.0
  %2072 = vmatmul.mubr.f32.gmra.mxu0 %v1942
  %v2073 = vpop.f32.mrf.mxu0
  %v2074 = vadd.f32 %v45, %v2073
  %v2075 = vpop.f32.mrf.mxu0
  %2076 = vmatprep.mubr.f32.mxu0 0.0
  %2077 = vmatmul.mubr.f32.gmra.mxu0 %v1945
  %v2078 = vpop.f32.mrf.mxu0
  %v2079 = vadd.f32 %v46, %v2078
  %v2080 = vpop.f32.mrf.mxu0
  %2081 = vmatprep.mubr.f32.mxu0 0.0
  %2082 = vmatmul.mubr.f32.gmra.mxu0 %v1948
  %v2083 = vpop.f32.mrf.mxu0
  %v2084 = vadd.f32 %v47, %v2083
  %v2085 = vpop.f32.mrf.mxu0
  %2086 = vmatprep.mubr.f32.mxu0 0.0
  %2087 = vmatmul.mubr.f32.gmra.mxu0 %v1951
  %v2088 = vpop.f32.mrf.mxu0
  %v2089 = vadd.f32 %v48, %v2088
  %v2090 = vpop.f32.mrf.mxu0
  %2091 = vmatprep.mubr.f32.mxu0 0.0
  %2092 = vmatmul.mubr.f32.gmra.mxu0 %v1954
  %v2093 = vpop.f32.mrf.mxu0
  %v2094 = vadd.f32 %v49, %v2093
  %v2095 = vpop.f32.mrf.mxu0
  %2096 = vmatprep.mubr.f32.mxu0 0.0
  %2097 = vmatmul.mubr.f32.gmra.mxu0 %v1957
  %v2098 = vpop.f32.mrf.mxu0
  %v2099 = vadd.f32 %v50, %v2098
  %v2100 = vpop.f32.mrf.mxu0
  %2101 = vmatprep.mubr.f32.mxu0 0.0
  %2102 = vmatmul.mubr.f32.gmra.mxu0 %v1960
  %v2103 = vpop.f32.mrf.mxu0
  %v2104 = vadd.f32 %v51, %v2103
  %v2105 = vpop.f32.mrf.mxu0
  %2106 = vdwg.mxu0
  %2107 = vmax.xlane.f32.xlu0 %v2029
  %v2108 = vpop.xlane.xlu0 %2107
  %2109 = vmax.xlane.f32.xlu0 %v2034
  %v2110 = vpop.xlane.xlu0 %2109
  %2111 = vmax.xlane.f32.xlu0 %v2039
  %v2112 = vpop.xlane.xlu0 %2111
  %2113 = vmax.xlane.f32.xlu0 %v2044
  %v2114 = vpop.xlane.xlu0 %2113
  %2115 = vmax.xlane.f32.xlu0 %v2049
  %v2116 = vpop.xlane.xlu0 %2115
  %2117 = vmax.xlane.f32.xlu0 %v2054
  %v2118 = vpop.xlane.xlu0 %2117
  %2119 = vmax.xlane.f32.xlu0 %v2059
  %v2120 = vpop.xlane.xlu0 %2119
  %2121 = vmax.xlane.f32.xlu0 %v2064
  %v2122 = vpop.xlane.xlu0 %2121
  %2123 = vmax.xlane.f32.xlu0 %v2069
  %v2124 = vpop.xlane.xlu0 %2123
  %2125 = vmax.xlane.f32.xlu0 %v2074
  %v2126 = vpop.xlane.xlu0 %2125
  %2127 = vmax.xlane.f32.xlu0 %v2079
  %v2128 = vpop.xlane.xlu0 %2127
  %2129 = vmax.xlane.f32.xlu0 %v2084
  %v2130 = vpop.xlane.xlu0 %2129
  %2131 = vmax.xlane.f32.xlu0 %v2089
  %v2132 = vpop.xlane.xlu0 %2131
  %2133 = vmax.xlane.f32.xlu0 %v2094
  %v2134 = vpop.xlane.xlu0 %2133
  %2135 = vmax.xlane.f32.xlu0 %v2099
  %v2136 = vpop.xlane.xlu0 %2135
  %2137 = vmax.xlane.f32.xlu0 %v2104
  %v2138 = vpop.xlane.xlu0 %2137
  %v2139 = vsub.f32 %v2029, %v2108
  %v2140 = vsub.f32 %v2034, %v2110
  %v2141 = vsub.f32 %v2039, %v2112
  %v2142 = vsub.f32 %v2044, %v2114
  %v2143 = vsub.f32 %v2049, %v2116
  %v2144 = vsub.f32 %v2054, %v2118
  %v2145 = vsub.f32 %v2059, %v2120
  %v2146 = vsub.f32 %v2064, %v2122
  %v2147 = vsub.f32 %v2069, %v2124
  %v2148 = vsub.f32 %v2074, %v2126
  %v2149 = vsub.f32 %v2079, %v2128
  %v2150 = vsub.f32 %v2084, %v2130
  %v2151 = vsub.f32 %v2089, %v2132
  %v2152 = vsub.f32 %v2094, %v2134
  %v2153 = vsub.f32 %v2099, %v2136
  %v2154 = vsub.f32 %v2104, %v2138
  %v2155 = vmul.f32 %v2139, 1.442695
  %v2156 = vpow.pop %v2155
  %v2157 = vmul.f32 %v2140, 1.442695
  %v2158 = vpow.pop %v2157
  %v2159 = vmul.f32 %v2141, 1.442695
  %v2160 = vpow.pop %v2159
  %v2161 = vmul.f32 %v2142, 1.442695
  %v2162 = vpow.pop %v2161
  %v2163 = vmul.f32 %v2143, 1.442695
  %v2164 = vpow.pop %v2163
  %v2165 = vmul.f32 %v2144, 1.442695
  %v2166 = vpow.pop %v2165
  %v2167 = vmul.f32 %v2145, 1.442695
  %v2168 = vpow.pop %v2167
  %v2169 = vmul.f32 %v2146, 1.442695
  %v2170 = vpow.pop %v2169
  %v2171 = vmul.f32 %v2147, 1.442695
  %v2172 = vpow.pop %v2171
  %v2173 = vmul.f32 %v2148, 1.442695
  %v2174 = vpow.pop %v2173
  %v2175 = vmul.f32 %v2149, 1.442695
  %v2176 = vpow.pop %v2175
  %v2177 = vmul.f32 %v2150, 1.442695
  %v2178 = vpow.pop %v2177
  %v2179 = vmul.f32 %v2151, 1.442695
  %v2180 = vpow.pop %v2179
  %v2181 = vmul.f32 %v2152, 1.442695
  %v2182 = vpow.pop %v2181
  %v2183 = vmul.f32 %v2153, 1.442695
  %v2184 = vpow.pop %v2183
  %v2185 = vmul.f32 %v2154, 1.442695
  %v2186 = vpow.pop %v2185
  %2187 = vadd.xlane.f32.xlu0 %v2156
  %v2188 = vpop.xlane.xlu0 %2187
  %2189 = vadd.xlane.f32.xlu0 %v2158
  %v2190 = vpop.xlane.xlu0 %2189
  %2191 = vadd.xlane.f32.xlu0 %v2160
  %v2192 = vpop.xlane.xlu0 %2191
  %2193 = vadd.xlane.f32.xlu0 %v2162
  %v2194 = vpop.xlane.xlu0 %2193
  %2195 = vadd.xlane.f32.xlu0 %v2164
  %v2196 = vpop.xlane.xlu0 %2195
  %2197 = vadd.xlane.f32.xlu0 %v2166
  %v2198 = vpop.xlane.xlu0 %2197
  %2199 = vadd.xlane.f32.xlu0 %v2168
  %v2200 = vpop.xlane.xlu0 %2199
  %2201 = vadd.xlane.f32.xlu0 %v2170
  %v2202 = vpop.xlane.xlu0 %2201
  %2203 = vadd.xlane.f32.xlu0 %v2172
  %v2204 = vpop.xlane.xlu0 %2203
  %2205 = vadd.xlane.f32.xlu0 %v2174
  %v2206 = vpop.xlane.xlu0 %2205
  %2207 = vadd.xlane.f32.xlu0 %v2176
  %v2208 = vpop.xlane.xlu0 %2207
  %2209 = vadd.xlane.f32.xlu0 %v2178
  %v2210 = vpop.xlane.xlu0 %2209
  %2211 = vadd.xlane.f32.xlu0 %v2180
  %v2212 = vpop.xlane.xlu0 %2211
  %2213 = vadd.xlane.f32.xlu0 %v2182
  %v2214 = vpop.xlane.xlu0 %2213
  %2215 = vadd.xlane.f32.xlu0 %v2184
  %v2216 = vpop.xlane.xlu0 %2215
  %2217 = vadd.xlane.f32.xlu0 %v2186
  %v2218 = vpop.xlane.xlu0 %2217
  %v2219 = vrcp.pop %v2188
  %v2220 = vrcp.pop %v2190
  %v2221 = vrcp.pop %v2192
  %v2222 = vrcp.pop %v2194
  %v2223 = vrcp.pop %v2196
  %v2224 = vrcp.pop %v2198
  %v2225 = vrcp.pop %v2200
  %v2226 = vrcp.pop %v2202
  %v2227 = vrcp.pop %v2204
  %v2228 = vrcp.pop %v2206
  %v2229 = vrcp.pop %v2208
  %v2230 = vrcp.pop %v2210
  %v2231 = vrcp.pop %v2212
  %v2232 = vrcp.pop %v2214
  %v2233 = vrcp.pop %v2216
  %v2234 = vrcp.pop %v2218
  %v2235 = vmul.f32 %v2156, %v2219
  %v2236 = vmul.f32 %v2158, %v2220
  %v2237 = vmul.f32 %v2160, %v2221
  %v2238 = vmul.f32 %v2162, %v2222
  %v2239 = vmul.f32 %v2164, %v2223
  %v2240 = vmul.f32 %v2166, %v2224
  %v2241 = vmul.f32 %v2168, %v2225
  %v2242 = vmul.f32 %v2170, %v2226
  %v2243 = vmul.f32 %v2172, %v2227
  %v2244 = vmul.f32 %v2174, %v2228
  %v2245 = vmul.f32 %v2176, %v2229
  %v2246 = vmul.f32 %v2178, %v2230
  %v2247 = vmul.f32 %v2180, %v2231
  %v2248 = vmul.f32 %v2182, %v2232
  %v2249 = vmul.f32 %v2184, %v2233
  %v2250 = vmul.f32 %v2186, %v2234
  %2251 = vmatprep.subr.mxu0 0.0
  %2252 = vmatpush1.msra.mxu0 %v35
  %2253 = vmatprep.subr.mxu0 0.0
  %2254 = vmatpush1.msra.mxu0 %v34
  %2255 = vmatprep.subr.mxu0 0.0
  %2256 = vmatpush1.msra.mxu0 %v33
  %2257 = vmatprep.subr.mxu0 0.0
  %2258 = vmatpush1.msra.mxu0 %v32
  %2259 = vmatprep.subr.mxu0 0.0
  %2260 = vmatpush1.msra.mxu0 %v31
  %2261 = vmatprep.subr.mxu0 0.0
  %2262 = vmatpush1.msra.mxu0 %v30
  %2263 = vmatprep.subr.mxu0 0.0
  %2264 = vmatpush1.msra.mxu0 %v29
  %2265 = vmatprep.subr.mxu0 0.0
  %2266 = vmatpush1.msra.mxu0 %v28
  %2267 = vmatprep.subr.mxu0 0.0
  %2268 = vmatpush1.msra.mxu0 %v27
  %2269 = vmatprep.subr.mxu0 0.0
  %2270 = vmatpush1.msra.mxu0 %v26
  %2271 = vmatprep.subr.mxu0 0.0
  %2272 = vmatpush1.msra.mxu0 %v25
  %2273 = vmatprep.subr.mxu0 0.0
  %2274 = vmatpush1.msra.mxu0 %v24
  %2275 = vmatprep.subr.mxu0 0.0
  %2276 = vmatpush1.msra.mxu0 %v23
  %2277 = vmatprep.subr.mxu0 0.0
  %2278 = vmatpush1.msra.mxu0 %v22
  %2279 = vmatprep.subr.mxu0 0.0
  %2280 = vmatpush1.msra.mxu0 %v21
  %2281 = vmatprep.subr.mxu0 0.0
  %2282 = vmatpush1.msra.mxu0 %v20
  %2283 = vmatprep.subr.mxu0 0.0
  %2284 = vmatpush2.msra.mxu0 0.0
  %2285 = vmatprep.subr.mxu0 0.0
  %2286 = vmatpush2.msra.mxu0 0.0
  %2287 = vmatprep.subr.mxu0 0.0
  %2288 = vmatpush2.msra.mxu0 0.0
  %2289 = vmatprep.subr.mxu0 0.0
  %2290 = vmatpush2.msra.mxu0 0.0
  %2291 = vmatprep.subr.mxu0 0.0
  %2292 = vmatpush2.msra.mxu0 0.0
  %2293 = vmatprep.subr.mxu0 0.0
  %2294 = vmatpush2.msra.mxu0 0.0
  %2295 = vmatprep.subr.mxu0 0.0
  %2296 = vmatpush2.msra.mxu0 0.0
  %2297 = vmatprep.subr.mxu0 0.0
  %2298 = vmatpush2.msra.mxu0 0.0
  %2299 = vmatprep.subr.mxu0 0.0
  %2300 = vmatpush2.msra.mxu0 0.0
  %2301 = vmatprep.subr.mxu0 0.0
  %2302 = vmatpush2.msra.mxu0 0.0
  %2303 = vmatprep.subr.mxu0 0.0
  %2304 = vmatpush2.msra.mxu0 0.0
  %2305 = vmatprep.subr.mxu0 0.0
  %2306 = vmatpush2.msra.mxu0 0.0
  %2307 = vmatprep.subr.mxu0 0.0
  %2308 = vmatpush2.msra.mxu0 0.0
  %2309 = vmatprep.subr.mxu0 0.0
  %2310 = vmatpush2.msra.mxu0 0.0
  %2311 = vmatprep.subr.mxu0 0.0
  %2312 = vmatpush2.msra.mxu0 0.0
  %2313 = vmatprep.subr.mxu0 0.0
  %2314 = vmatpush2.msra.mxu0 0.0
  %2315 = vmatprep.mubr.f32.mxu0 0.0
  %2316 = vmatmul.mubr.f32.gmra.mxu0 %v2235
  %v2317 = vpop.f32.mrf.mxu0
  %v2318 = vadd.f32 0.0, %v2317
  %v2319 = vpop.f32.mrf.mxu0
  %2320 = vmatprep.mubr.f32.mxu0 0.0
  %2321 = vmatmul.mubr.f32.gmra.mxu0 %v2236
  %v2322 = vpop.f32.mrf.mxu0
  %v2323 = vadd.f32 0.0, %v2322
  %v2324 = vpop.f32.mrf.mxu0
  %2325 = vmatprep.mubr.f32.mxu0 0.0
  %2326 = vmatmul.mubr.f32.gmra.mxu0 %v2237
  %v2327 = vpop.f32.mrf.mxu0
  %v2328 = vadd.f32 0.0, %v2327
  %v2329 = vpop.f32.mrf.mxu0
  %2330 = vmatprep.mubr.f32.mxu0 0.0
  %2331 = vmatmul.mubr.f32.gmra.mxu0 %v2238
  %v2332 = vpop.f32.mrf.mxu0
  %v2333 = vadd.f32 0.0, %v2332
  %v2334 = vpop.f32.mrf.mxu0
  %2335 = vmatprep.mubr.f32.mxu0 0.0
  %2336 = vmatmul.mubr.f32.gmra.mxu0 %v2239
  %v2337 = vpop.f32.mrf.mxu0
  %v2338 = vadd.f32 0.0, %v2337
  %v2339 = vpop.f32.mrf.mxu0
  %2340 = vmatprep.mubr.f32.mxu0 0.0
  %2341 = vmatmul.mubr.f32.gmra.mxu0 %v2240
  %v2342 = vpop.f32.mrf.mxu0
  %v2343 = vadd.f32 0.0, %v2342
  %v2344 = vpop.f32.mrf.mxu0
  %2345 = vmatprep.mubr.f32.mxu0 0.0
  %2346 = vmatmul.mubr.f32.gmra.mxu0 %v2241
  %v2347 = vpop.f32.mrf.mxu0
  %v2348 = vadd.f32 0.0, %v2347
  %v2349 = vpop.f32.mrf.mxu0
  %2350 = vmatprep.mubr.f32.mxu0 0.0
  %2351 = vmatmul.mubr.f32.gmra.mxu0 %v2242
  %v2352 = vpop.f32.mrf.mxu0
  %v2353 = vadd.f32 0.0, %v2352
  %v2354 = vpop.f32.mrf.mxu0
  %2355 = vmatprep.mubr.f32.mxu0 0.0
  %2356 = vmatmul.mubr.f32.gmra.mxu0 %v2243
  %v2357 = vpop.f32.mrf.mxu0
  %v2358 = vadd.f32 0.0, %v2357
  %v2359 = vpop.f32.mrf.mxu0
  %2360 = vmatprep.mubr.f32.mxu0 0.0
  %2361 = vmatmul.mubr.f32.gmra.mxu0 %v2244
  %v2362 = vpop.f32.mrf.mxu0
  %v2363 = vadd.f32 0.0, %v2362
  %v2364 = vpop.f32.mrf.mxu0
  %2365 = vmatprep.mubr.f32.mxu0 0.0
  %2366 = vmatmul.mubr.f32.gmra.mxu0 %v2245
  %v2367 = vpop.f32.mrf.mxu0
  %v2368 = vadd.f32 0.0, %v2367
  %v2369 = vpop.f32.mrf.mxu0
  %2370 = vmatprep.mubr.f32.mxu0 0.0
  %2371 = vmatmul.mubr.f32.gmra.mxu0 %v2246
  %v2372 = vpop.f32.mrf.mxu0
  %v2373 = vadd.f32 0.0, %v2372
  %v2374 = vpop.f32.mrf.mxu0
  %2375 = vmatprep.mubr.f32.mxu0 0.0
  %2376 = vmatmul.mubr.f32.gmra.mxu0 %v2247
  %v2377 = vpop.f32.mrf.mxu0
  %v2378 = vadd.f32 0.0, %v2377
  %v2379 = vpop.f32.mrf.mxu0
  %2380 = vmatprep.mubr.f32.mxu0 0.0
  %2381 = vmatmul.mubr.f32.gmra.mxu0 %v2248
  %v2382 = vpop.f32.mrf.mxu0
  %v2383 = vadd.f32 0.0, %v2382
  %v2384 = vpop.f32.mrf.mxu0
  %2385 = vmatprep.mubr.f32.mxu0 0.0
  %2386 = vmatmul.mubr.f32.gmra.mxu0 %v2249
  %v2387 = vpop.f32.mrf.mxu0
  %v2388 = vadd.f32 0.0, %v2387
  %v2389 = vpop.f32.mrf.mxu0
  %2390 = vmatprep.mubr.f32.mxu0 0.0
  %2391 = vmatmul.mubr.f32.gmra.mxu0 %v2250
  %v2392 = vpop.f32.mrf.mxu0
  %v2393 = vadd.f32 0.0, %v2392
  %v2394 = vpop.f32.mrf.mxu0
  %2395 = vdwg.mxu0
  %s2396 = scalar_lea.vmem %s3, 80
  %v2397 = vld [vmem:[%s2396] sm:$0xff]
  %v2398 = vld [vmem:[%s2396 + $0x8] sm:$0xff]
  %v2399 = vld [vmem:[%s2396 + $0x10] sm:$0xff]
  %v2400 = vld [vmem:[%s2396 + $0x18] sm:$0xff]
  %v2401 = vld [vmem:[%s2396 + $0x20] sm:$0xff]
  %v2403 = vsel %vm57, %v2318, 0
  %v2406 = vsel %vm57, %v2323, 0
  %v2409 = vsel %vm57, %v2328, 0
  %v2412 = vsel %vm57, %v2333, 0
  %v2415 = vsel %vm57, %v2338, 0
  %v2418 = vsel %vm57, %v2343, 0
  %v2421 = vsel %vm57, %v2348, 0
  %v2424 = vsel %vm57, %v2353, 0
  %v2427 = vsel %vm57, %v2358, 0
  %v2430 = vsel %vm57, %v2363, 0
  %v2433 = vsel %vm57, %v2368, 0
  %v2436 = vsel %vm57, %v2373, 0
  %v2439 = vsel %vm57, %v2378, 0
  %v2442 = vsel %vm57, %v2383, 0
  %v2445 = vsel %vm57, %v2388, 0
  %v2448 = vsel %vm57, %v2393, 0
  %2450 = vmatprep.subr.mxu0 0.0
  %2451 = vmatpush1.msra.mxu0 0.0
  %2452 = vmatprep.subr.mxu0 0.0
  %2453 = vmatpush1.msra.mxu0 0.0
  %2454 = vmatprep.subr.mxu0 0.0
  %2455 = vmatpush1.msra.mxu0 0.0
  %2456 = vmatprep.subr.mxu0 0.0
  %2457 = vmatpush1.msra.mxu0 0.0
  %2458 = vmatprep.subr.mxu0 0.0
  %2459 = vmatpush1.msra.mxu0 0.0
  %2460 = vmatprep.subr.mxu0 0.0
  %2461 = vmatpush1.msra.mxu0 0.0
  %2462 = vmatprep.subr.mxu0 0.0
  %2463 = vmatpush1.msra.mxu0 0.0
  %2464 = vmatprep.subr.mxu0 0.0
  %2465 = vmatpush1.msra.mxu0 0.0
  %2466 = vmatprep.subr.mxu0 0.0
  %2467 = vmatpush1.msra.mxu0 0.0
  %2468 = vmatprep.subr.mxu0 0.0
  %2469 = vmatpush1.msra.mxu0 0.0
  %2470 = vmatprep.subr.mxu0 0.0
  %2471 = vmatpush1.msra.mxu0 0.0
  %2472 = vmatprep.subr.mxu0 0.0
  %2473 = vmatpush1.msra.mxu0 %v2401
  %2474 = vmatprep.subr.mxu0 0.0
  %2475 = vmatpush1.msra.mxu0 %v2400
  %2476 = vmatprep.subr.mxu0 0.0
  %2477 = vmatpush1.msra.mxu0 %v2399
  %2478 = vmatprep.subr.mxu0 0.0
  %2479 = vmatpush1.msra.mxu0 %v2398
  %2480 = vmatprep.subr.mxu0 0.0
  %2481 = vmatpush1.msra.mxu0 %v2397
  %2482 = vmatprep.subr.mxu0 0.0
  %2483 = vmatpush2.msra.mxu0 0.0
  %2484 = vmatprep.subr.mxu0 0.0
  %2485 = vmatpush2.msra.mxu0 0.0
  %2486 = vmatprep.subr.mxu0 0.0
  %2487 = vmatpush2.msra.mxu0 0.0
  %2488 = vmatprep.subr.mxu0 0.0
  %2489 = vmatpush2.msra.mxu0 0.0
  %2490 = vmatprep.subr.mxu0 0.0
  %2491 = vmatpush2.msra.mxu0 0.0
  %2492 = vmatprep.subr.mxu0 0.0
  %2493 = vmatpush2.msra.mxu0 0.0
  %2494 = vmatprep.subr.mxu0 0.0
  %2495 = vmatpush2.msra.mxu0 0.0
  %2496 = vmatprep.subr.mxu0 0.0
  %2497 = vmatpush2.msra.mxu0 0.0
  %2498 = vmatprep.subr.mxu0 0.0
  %2499 = vmatpush2.msra.mxu0 0.0
  %2500 = vmatprep.subr.mxu0 0.0
  %2501 = vmatpush2.msra.mxu0 0.0
  %2502 = vmatprep.subr.mxu0 0.0
  %2503 = vmatpush2.msra.mxu0 0.0
  %2504 = vmatprep.subr.mxu0 0.0
  %2505 = vmatpush2.msra.mxu0 0.0
  %2506 = vmatprep.subr.mxu0 0.0
  %2507 = vmatpush2.msra.mxu0 0.0
  %2508 = vmatprep.subr.mxu0 0.0
  %2509 = vmatpush2.msra.mxu0 0.0
  %2510 = vmatprep.subr.mxu0 0.0
  %2511 = vmatpush2.msra.mxu0 0.0
  %2512 = vmatprep.subr.mxu0 0.0
  %2513 = vmatpush2.msra.mxu0 0.0
  %2514 = vmatprep.mubr.f32.mxu0 0.0
  %2515 = vmatmul.mubr.f32.gmra.mxu0 %v2403
  %v2516 = vpop.f32.mrf.mxu0
  %v2517 = vadd.f32 0.0, %v2516
  %v2518 = vpop.f32.mrf.mxu0
  %2519 = vmatprep.mubr.f32.mxu0 0.0
  %2520 = vmatmul.mubr.f32.gmra.mxu0 %v2406
  %v2521 = vpop.f32.mrf.mxu0
  %v2522 = vadd.f32 0.0, %v2521
  %v2523 = vpop.f32.mrf.mxu0
  %2524 = vmatprep.mubr.f32.mxu0 0.0
  %2525 = vmatmul.mubr.f32.gmra.mxu0 %v2409
  %v2526 = vpop.f32.mrf.mxu0
  %v2527 = vadd.f32 0.0, %v2526
  %v2528 = vpop.f32.mrf.mxu0
  %2529 = vmatprep.mubr.f32.mxu0 0.0
  %2530 = vmatmul.mubr.f32.gmra.mxu0 %v2412
  %v2531 = vpop.f32.mrf.mxu0
  %v2532 = vadd.f32 0.0, %v2531
  %v2533 = vpop.f32.mrf.mxu0
  %2534 = vmatprep.mubr.f32.mxu0 0.0
  %2535 = vmatmul.mubr.f32.gmra.mxu0 %v2415
  %v2536 = vpop.f32.mrf.mxu0
  %v2537 = vadd.f32 0.0, %v2536
  %v2538 = vpop.f32.mrf.mxu0
  %2539 = vmatprep.mubr.f32.mxu0 0.0
  %2540 = vmatmul.mubr.f32.gmra.mxu0 %v2418
  %v2541 = vpop.f32.mrf.mxu0
  %v2542 = vadd.f32 0.0, %v2541
  %v2543 = vpop.f32.mrf.mxu0
  %2544 = vmatprep.mubr.f32.mxu0 0.0
  %2545 = vmatmul.mubr.f32.gmra.mxu0 %v2421
  %v2546 = vpop.f32.mrf.mxu0
  %v2547 = vadd.f32 0.0, %v2546
  %v2548 = vpop.f32.mrf.mxu0
  %2549 = vmatprep.mubr.f32.mxu0 0.0
  %2550 = vmatmul.mubr.f32.gmra.mxu0 %v2424
  %v2551 = vpop.f32.mrf.mxu0
  %v2552 = vadd.f32 0.0, %v2551
  %v2553 = vpop.f32.mrf.mxu0
  %2554 = vmatprep.mubr.f32.mxu0 0.0
  %2555 = vmatmul.mubr.f32.gmra.mxu0 %v2427
  %v2556 = vpop.f32.mrf.mxu0
  %v2557 = vadd.f32 0.0, %v2556
  %v2558 = vpop.f32.mrf.mxu0
  %2559 = vmatprep.mubr.f32.mxu0 0.0
  %2560 = vmatmul.mubr.f32.gmra.mxu0 %v2430
  %v2561 = vpop.f32.mrf.mxu0
  %v2562 = vadd.f32 0.0, %v2561
  %v2563 = vpop.f32.mrf.mxu0
  %2564 = vmatprep.mubr.f32.mxu0 0.0
  %2565 = vmatmul.mubr.f32.gmra.mxu0 %v2433
  %v2566 = vpop.f32.mrf.mxu0
  %v2567 = vadd.f32 0.0, %v2566
  %v2568 = vpop.f32.mrf.mxu0
  %2569 = vmatprep.mubr.f32.mxu0 0.0
  %2570 = vmatmul.mubr.f32.gmra.mxu0 %v2436
  %v2571 = vpop.f32.mrf.mxu0
  %v2572 = vadd.f32 0.0, %v2571
  %v2573 = vpop.f32.mrf.mxu0
  %2574 = vmatprep.mubr.f32.mxu0 0.0
  %2575 = vmatmul.mubr.f32.gmra.mxu0 %v2439
  %v2576 = vpop.f32.mrf.mxu0
  %v2577 = vadd.f32 0.0, %v2576
  %v2578 = vpop.f32.mrf.mxu0
  %2579 = vmatprep.mubr.f32.mxu0 0.0
  %2580 = vmatmul.mubr.f32.gmra.mxu0 %v2442
  %v2581 = vpop.f32.mrf.mxu0
  %v2582 = vadd.f32 0.0, %v2581
  %v2583 = vpop.f32.mrf.mxu0
  %2584 = vmatprep.mubr.f32.mxu0 0.0
  %2585 = vmatmul.mubr.f32.gmra.mxu0 %v2445
  %v2586 = vpop.f32.mrf.mxu0
  %v2587 = vadd.f32 0.0, %v2586
  %v2588 = vpop.f32.mrf.mxu0
  %2589 = vmatprep.mubr.f32.mxu0 0.0
  %2590 = vmatmul.mubr.f32.gmra.mxu0 %v2448
  %v2591 = vpop.f32.mrf.mxu0
  %v2592 = vadd.f32 0.0, %v2591
  %v2593 = vpop.f32.mrf.mxu0
  %2594 = vdwg.mxu0
  %v2595 = vadd.f32 %v1685, %v2517
  %v2596 = vadd.f32 %v1690, %v2522
  %v2597 = vadd.f32 %v1695, %v2527
  %v2598 = vadd.f32 %v1700, %v2532
  %v2599 = vadd.f32 %v1705, %v2537
  %v2600 = vadd.f32 %v1710, %v2542
  %v2601 = vadd.f32 %v1715, %v2547
  %v2602 = vadd.f32 %v1720, %v2552
  %v2603 = vadd.f32 %v1725, %v2557
  %v2604 = vadd.f32 %v1730, %v2562
  %v2605 = vadd.f32 %v1735, %v2567
  %v2606 = vadd.f32 %v1740, %v2572
  %v2607 = vadd.f32 %v1745, %v2577
  %v2608 = vadd.f32 %v1750, %v2582
  %v2609 = vadd.f32 %v1755, %v2587
  %v2610 = vadd.f32 %v1760, %v2592
  %s2611 = scalar_lea.vmem %s2, 120
  %v2612 = vld [vmem:[%s2611] sm:$0xff]
  %v2613 = vld [vmem:[%s2611 + $0x8] sm:$0xff]
  %v2614 = vld [vmem:[%s2611 + $0x10] sm:$0xff]
  %v2615 = vld [vmem:[%s2611 + $0x18] sm:$0xff]
  %v2616 = vld [vmem:[%s2611 + $0x20] sm:$0xff]
  %2617 = vmatprep.subr.mxu0 0.0
  %2618 = vmatpush1.msra.mxu0 0.0
  %2619 = vmatprep.subr.mxu0 0.0
  %2620 = vmatpush1.msra.mxu0 0.0
  %2621 = vmatprep.subr.mxu0 0.0
  %2622 = vmatpush1.msra.mxu0 0.0
  %2623 = vmatprep.subr.mxu0 0.0
  %2624 = vmatpush1.msra.mxu0 0.0
  %2625 = vmatprep.subr.mxu0 0.0
  %2626 = vmatpush1.msra.mxu0 0.0
  %2627 = vmatprep.subr.mxu0 0.0
  %2628 = vmatpush1.msra.mxu0 0.0
  %2629 = vmatprep.subr.mxu0 0.0
  %2630 = vmatpush1.msra.mxu0 0.0
  %2631 = vmatprep.subr.mxu0 0.0
  %2632 = vmatpush1.msra.mxu0 0.0
  %2633 = vmatprep.subr.mxu0 0.0
  %2634 = vmatpush1.msra.mxu0 0.0
  %2635 = vmatprep.subr.mxu0 0.0
  %2636 = vmatpush1.msra.mxu0 0.0
  %2637 = vmatprep.subr.mxu0 0.0
  %2638 = vmatpush1.msra.mxu0 0.0
  %2639 = vmatprep.subr.mxu0 0.0
  %2640 = vmatpush1.msra.mxu0 %v2616
  %2641 = vmatprep.subr.mxu0 0.0
  %2642 = vmatpush1.msra.mxu0 %v2615
  %2643 = vmatprep.subr.mxu0 0.0
  %2644 = vmatpush1.msra.mxu0 %v2614
  %2645 = vmatprep.subr.mxu0 0.0
  %2646 = vmatpush1.msra.mxu0 %v2613
  %2647 = vmatprep.subr.mxu0 0.0
  %2648 = vmatpush1.msra.mxu0 %v2612
  %2649 = vmatprep.subr.mxu0 0.0
  %2650 = vmatpush2.msra.mxu0 0.0
  %2651 = vmatprep.subr.mxu0 0.0
  %2652 = vmatpush2.msra.mxu0 0.0
  %2653 = vmatprep.subr.mxu0 0.0
  %2654 = vmatpush2.msra.mxu0 0.0
  %2655 = vmatprep.subr.mxu0 0.0
  %2656 = vmatpush2.msra.mxu0 0.0
  %2657 = vmatprep.subr.mxu0 0.0
  %2658 = vmatpush2.msra.mxu0 0.0
  %2659 = vmatprep.subr.mxu0 0.0
  %2660 = vmatpush2.msra.mxu0 0.0
  %2661 = vmatprep.subr.mxu0 0.0
  %2662 = vmatpush2.msra.mxu0 0.0
  %2663 = vmatprep.subr.mxu0 0.0
  %2664 = vmatpush2.msra.mxu0 0.0
  %2665 = vmatprep.subr.mxu0 0.0
  %2666 = vmatpush2.msra.mxu0 0.0
  %2667 = vmatprep.subr.mxu0 0.0
  %2668 = vmatpush2.msra.mxu0 0.0
  %2669 = vmatprep.subr.mxu0 0.0
  %2670 = vmatpush2.msra.mxu0 0.0
  %2671 = vmatprep.subr.mxu0 0.0
  %2672 = vmatpush2.msra.mxu0 0.0
  %2673 = vmatprep.subr.mxu0 0.0
  %2674 = vmatpush2.msra.mxu0 0.0
  %2675 = vmatprep.subr.mxu0 0.0
  %2676 = vmatpush2.msra.mxu0 0.0
  %2677 = vmatprep.subr.mxu0 0.0
  %2678 = vmatpush2.msra.mxu0 0.0
  %2679 = vmatprep.subr.mxu0 0.0
  %2680 = vmatpush2.msra.mxu0 0.0
  %2681 = vmatprep.mubr.f32.mxu0 0.0
  %2682 = vmatmul.mubr.f32.gmra.mxu0 %v59
  %v2683 = vpop.f32.mrf.mxu0
  %v2684 = vadd.f32 0.0, %v2683
  %v2685 = vpop.f32.mrf.mxu0
  %2686 = vmatprep.mubr.f32.mxu0 0.0
  %2687 = vmatmul.mubr.f32.gmra.mxu0 %v62
  %v2688 = vpop.f32.mrf.mxu0
  %v2689 = vadd.f32 0.0, %v2688
  %v2690 = vpop.f32.mrf.mxu0
  %2691 = vmatprep.mubr.f32.mxu0 0.0
  %2692 = vmatmul.mubr.f32.gmra.mxu0 %v65
  %v2693 = vpop.f32.mrf.mxu0
  %v2694 = vadd.f32 0.0, %v2693
  %v2695 = vpop.f32.mrf.mxu0
  %2696 = vmatprep.mubr.f32.mxu0 0.0
  %2697 = vmatmul.mubr.f32.gmra.mxu0 %v68
  %v2698 = vpop.f32.mrf.mxu0
  %v2699 = vadd.f32 0.0, %v2698
  %v2700 = vpop.f32.mrf.mxu0
  %2701 = vmatprep.mubr.f32.mxu0 0.0
  %2702 = vmatmul.mubr.f32.gmra.mxu0 %v71
  %v2703 = vpop.f32.mrf.mxu0
  %v2704 = vadd.f32 0.0, %v2703
  %v2705 = vpop.f32.mrf.mxu0
  %2706 = vmatprep.mubr.f32.mxu0 0.0
  %2707 = vmatmul.mubr.f32.gmra.mxu0 %v74
  %v2708 = vpop.f32.mrf.mxu0
  %v2709 = vadd.f32 0.0, %v2708
  %v2710 = vpop.f32.mrf.mxu0
  %2711 = vmatprep.mubr.f32.mxu0 0.0
  %2712 = vmatmul.mubr.f32.gmra.mxu0 %v77
  %v2713 = vpop.f32.mrf.mxu0
  %v2714 = vadd.f32 0.0, %v2713
  %v2715 = vpop.f32.mrf.mxu0
  %2716 = vmatprep.mubr.f32.mxu0 0.0
  %2717 = vmatmul.mubr.f32.gmra.mxu0 %v80
  %v2718 = vpop.f32.mrf.mxu0
  %v2719 = vadd.f32 0.0, %v2718
  %v2720 = vpop.f32.mrf.mxu0
  %2721 = vmatprep.mubr.f32.mxu0 0.0
  %2722 = vmatmul.mubr.f32.gmra.mxu0 %v83
  %v2723 = vpop.f32.mrf.mxu0
  %v2724 = vadd.f32 0.0, %v2723
  %v2725 = vpop.f32.mrf.mxu0
  %2726 = vmatprep.mubr.f32.mxu0 0.0
  %2727 = vmatmul.mubr.f32.gmra.mxu0 %v86
  %v2728 = vpop.f32.mrf.mxu0
  %v2729 = vadd.f32 0.0, %v2728
  %v2730 = vpop.f32.mrf.mxu0
  %2731 = vmatprep.mubr.f32.mxu0 0.0
  %2732 = vmatmul.mubr.f32.gmra.mxu0 %v89
  %v2733 = vpop.f32.mrf.mxu0
  %v2734 = vadd.f32 0.0, %v2733
  %v2735 = vpop.f32.mrf.mxu0
  %2736 = vmatprep.mubr.f32.mxu0 0.0
  %2737 = vmatmul.mubr.f32.gmra.mxu0 %v92
  %v2738 = vpop.f32.mrf.mxu0
  %v2739 = vadd.f32 0.0, %v2738
  %v2740 = vpop.f32.mrf.mxu0
  %2741 = vmatprep.mubr.f32.mxu0 0.0
  %2742 = vmatmul.mubr.f32.gmra.mxu0 %v95
  %v2743 = vpop.f32.mrf.mxu0
  %v2744 = vadd.f32 0.0, %v2743
  %v2745 = vpop.f32.mrf.mxu0
  %2746 = vmatprep.mubr.f32.mxu0 0.0
  %2747 = vmatmul.mubr.f32.gmra.mxu0 %v98
  %v2748 = vpop.f32.mrf.mxu0
  %v2749 = vadd.f32 0.0, %v2748
  %v2750 = vpop.f32.mrf.mxu0
  %2751 = vmatprep.mubr.f32.mxu0 0.0
  %2752 = vmatmul.mubr.f32.gmra.mxu0 %v101
  %v2753 = vpop.f32.mrf.mxu0
  %v2754 = vadd.f32 0.0, %v2753
  %v2755 = vpop.f32.mrf.mxu0
  %2756 = vmatprep.mubr.f32.mxu0 0.0
  %2757 = vmatmul.mubr.f32.gmra.mxu0 %v104
  %v2758 = vpop.f32.mrf.mxu0
  %v2759 = vadd.f32 0.0, %v2758
  %v2760 = vpop.f32.mrf.mxu0
  %2761 = vdwg.mxu0
  %v2763 = vsel %vm57, %v2684, 0
  %v2766 = vsel %vm57, %v2689, 0
  %v2769 = vsel %vm57, %v2694, 0
  %v2772 = vsel %vm57, %v2699, 0
  %v2775 = vsel %vm57, %v2704, 0
  %v2778 = vsel %vm57, %v2709, 0
  %v2781 = vsel %vm57, %v2714, 0
  %v2784 = vsel %vm57, %v2719, 0
  %v2787 = vsel %vm57, %v2724, 0
  %v2790 = vsel %vm57, %v2729, 0
  %v2793 = vsel %vm57, %v2734, 0
  %v2796 = vsel %vm57, %v2739, 0
  %v2799 = vsel %vm57, %v2744, 0
  %v2802 = vsel %vm57, %v2749, 0
  %v2805 = vsel %vm57, %v2754, 0
  %v2808 = vsel %vm57, %v2759, 0
  %2810 = vmatprep.subr.mxu0 0.0
  %2811 = vmatpush1.xpose.msra.mxu0 %v104
  %2812 = vmatprep.subr.mxu0 0.0
  %2813 = vmatpush1.xpose.msra.mxu0 %v101
  %2814 = vmatprep.subr.mxu0 0.0
  %2815 = vmatpush1.xpose.msra.mxu0 %v98
  %2816 = vmatprep.subr.mxu0 0.0
  %2817 = vmatpush1.xpose.msra.mxu0 %v95
  %2818 = vmatprep.subr.mxu0 0.0
  %2819 = vmatpush1.xpose.msra.mxu0 %v92
  %2820 = vmatprep.subr.mxu0 0.0
  %2821 = vmatpush1.xpose.msra.mxu0 %v89
  %2822 = vmatprep.subr.mxu0 0.0
  %2823 = vmatpush1.xpose.msra.mxu0 %v86
  %2824 = vmatprep.subr.mxu0 0.0
  %2825 = vmatpush1.xpose.msra.mxu0 %v83
  %2826 = vmatprep.subr.mxu0 0.0
  %2827 = vmatpush1.xpose.msra.mxu0 %v80
  %2828 = vmatprep.subr.mxu0 0.0
  %2829 = vmatpush1.xpose.msra.mxu0 %v77
  %2830 = vmatprep.subr.mxu0 0.0
  %2831 = vmatpush1.xpose.msra.mxu0 %v74
  %2832 = vmatprep.subr.mxu0 0.0
  %2833 = vmatpush1.xpose.msra.mxu0 %v71
  %2834 = vmatprep.subr.mxu0 0.0
  %2835 = vmatpush1.xpose.msra.mxu0 %v68
  %2836 = vmatprep.subr.mxu0 0.0
  %2837 = vmatpush1.xpose.msra.mxu0 %v65
  %2838 = vmatprep.subr.mxu0 0.0
  %2839 = vmatpush1.xpose.msra.mxu0 %v62
  %2840 = vmatprep.subr.mxu0 0.0
  %2841 = vmatpush1.xpose.msra.mxu0 %v59
  %2842 = vmatprep.subr.mxu0 0.0
  %2843 = vmatpush2.xpose.msra.mxu0 0.0
  %2844 = vmatprep.subr.mxu0 0.0
  %2845 = vmatpush2.xpose.msra.mxu0 0.0
  %2846 = vmatprep.subr.mxu0 0.0
  %2847 = vmatpush2.xpose.msra.mxu0 0.0
  %2848 = vmatprep.subr.mxu0 0.0
  %2849 = vmatpush2.xpose.msra.mxu0 0.0
  %2850 = vmatprep.subr.mxu0 0.0
  %2851 = vmatpush2.xpose.msra.mxu0 0.0
  %2852 = vmatprep.subr.mxu0 0.0
  %2853 = vmatpush2.xpose.msra.mxu0 0.0
  %2854 = vmatprep.subr.mxu0 0.0
  %2855 = vmatpush2.xpose.msra.mxu0 0.0
  %2856 = vmatprep.subr.mxu0 0.0
  %2857 = vmatpush2.xpose.msra.mxu0 0.0
  %2858 = vmatprep.subr.mxu0 0.0
  %2859 = vmatpush2.xpose.msra.mxu0 0.0
  %2860 = vmatprep.subr.mxu0 0.0
  %2861 = vmatpush2.xpose.msra.mxu0 0.0
  %2862 = vmatprep.subr.mxu0 0.0
  %2863 = vmatpush2.xpose.msra.mxu0 0.0
  %2864 = vmatprep.subr.mxu0 0.0
  %2865 = vmatpush2.xpose.msra.mxu0 0.0
  %2866 = vmatprep.subr.mxu0 0.0
  %2867 = vmatpush2.xpose.msra.mxu0 0.0
  %2868 = vmatprep.subr.mxu0 0.0
  %2869 = vmatpush2.xpose.msra.mxu0 0.0
  %2870 = vmatprep.subr.mxu0 0.0
  %2871 = vmatpush2.xpose.msra.mxu0 0.0
  %2872 = vmatprep.subr.mxu0 0.0
  %2873 = vmatpush2.xpose.msra.mxu0 0.0
  %2874 = vmatprep.mubr.f32.mxu0 0.0
  %2875 = vmatmul.mubr.f32.gmra.mxu0 %v2763
  %v2876 = vpop.f32.mrf.mxu0
  %v2877 = vadd.f32 %v36, %v2876
  %v2878 = vpop.f32.mrf.mxu0
  %2879 = vmatprep.mubr.f32.mxu0 0.0
  %2880 = vmatmul.mubr.f32.gmra.mxu0 %v2766
  %v2881 = vpop.f32.mrf.mxu0
  %v2882 = vadd.f32 %v37, %v2881
  %v2883 = vpop.f32.mrf.mxu0
  %2884 = vmatprep.mubr.f32.mxu0 0.0
  %2885 = vmatmul.mubr.f32.gmra.mxu0 %v2769
  %v2886 = vpop.f32.mrf.mxu0
  %v2887 = vadd.f32 %v38, %v2886
  %v2888 = vpop.f32.mrf.mxu0
  %2889 = vmatprep.mubr.f32.mxu0 0.0
  %2890 = vmatmul.mubr.f32.gmra.mxu0 %v2772
  %v2891 = vpop.f32.mrf.mxu0
  %v2892 = vadd.f32 %v39, %v2891
  %v2893 = vpop.f32.mrf.mxu0
  %2894 = vmatprep.mubr.f32.mxu0 0.0
  %2895 = vmatmul.mubr.f32.gmra.mxu0 %v2775
  %v2896 = vpop.f32.mrf.mxu0
  %v2897 = vadd.f32 %v40, %v2896
  %v2898 = vpop.f32.mrf.mxu0
  %2899 = vmatprep.mubr.f32.mxu0 0.0
  %2900 = vmatmul.mubr.f32.gmra.mxu0 %v2778
  %v2901 = vpop.f32.mrf.mxu0
  %v2902 = vadd.f32 %v41, %v2901
  %v2903 = vpop.f32.mrf.mxu0
  %2904 = vmatprep.mubr.f32.mxu0 0.0
  %2905 = vmatmul.mubr.f32.gmra.mxu0 %v2781
  %v2906 = vpop.f32.mrf.mxu0
  %v2907 = vadd.f32 %v42, %v2906
  %v2908 = vpop.f32.mrf.mxu0
  %2909 = vmatprep.mubr.f32.mxu0 0.0
  %2910 = vmatmul.mubr.f32.gmra.mxu0 %v2784
  %v2911 = vpop.f32.mrf.mxu0
  %v2912 = vadd.f32 %v43, %v2911
  %v2913 = vpop.f32.mrf.mxu0
  %2914 = vmatprep.mubr.f32.mxu0 0.0
  %2915 = vmatmul.mubr.f32.gmra.mxu0 %v2787
  %v2916 = vpop.f32.mrf.mxu0
  %v2917 = vadd.f32 %v44, %v2916
  %v2918 = vpop.f32.mrf.mxu0
  %2919 = vmatprep.mubr.f32.mxu0 0.0
  %2920 = vmatmul.mubr.f32.gmra.mxu0 %v2790
  %v2921 = vpop.f32.mrf.mxu0
  %v2922 = vadd.f32 %v45, %v2921
  %v2923 = vpop.f32.mrf.mxu0
  %2924 = vmatprep.mubr.f32.mxu0 0.0
  %2925 = vmatmul.mubr.f32.gmra.mxu0 %v2793
  %v2926 = vpop.f32.mrf.mxu0
  %v2927 = vadd.f32 %v46, %v2926
  %v2928 = vpop.f32.mrf.mxu0
  %2929 = vmatprep.mubr.f32.mxu0 0.0
  %2930 = vmatmul.mubr.f32.gmra.mxu0 %v2796
  %v2931 = vpop.f32.mrf.mxu0
  %v2932 = vadd.f32 %v47, %v2931
  %v2933 = vpop.f32.mrf.mxu0
  %2934 = vmatprep.mubr.f32.mxu0 0.0
  %2935 = vmatmul.mubr.f32.gmra.mxu0 %v2799
  %v2936 = vpop.f32.mrf.mxu0
  %v2937 = vadd.f32 %v48, %v2936
  %v2938 = vpop.f32.mrf.mxu0
  %2939 = vmatprep.mubr.f32.mxu0 0.0
  %2940 = vmatmul.mubr.f32.gmra.mxu0 %v2802
  %v2941 = vpop.f32.mrf.mxu0
  %v2942 = vadd.f32 %v49, %v2941
  %v2943 = vpop.f32.mrf.mxu0
  %2944 = vmatprep.mubr.f32.mxu0 0.0
  %2945 = vmatmul.mubr.f32.gmra.mxu0 %v2805
  %v2946 = vpop.f32.mrf.mxu0
  %v2947 = vadd.f32 %v50, %v2946
  %v2948 = vpop.f32.mrf.mxu0
  %2949 = vmatprep.mubr.f32.mxu0 0.0
  %2950 = vmatmul.mubr.f32.gmra.mxu0 %v2808
  %v2951 = vpop.f32.mrf.mxu0
  %v2952 = vadd.f32 %v51, %v2951
  %v2953 = vpop.f32.mrf.mxu0
  %2954 = vdwg.mxu0
  %2955 = vmax.xlane.f32.xlu0 %v2877
  %v2956 = vpop.xlane.xlu0 %2955
  %2957 = vmax.xlane.f32.xlu0 %v2882
  %v2958 = vpop.xlane.xlu0 %2957
  %2959 = vmax.xlane.f32.xlu0 %v2887
  %v2960 = vpop.xlane.xlu0 %2959
  %2961 = vmax.xlane.f32.xlu0 %v2892
  %v2962 = vpop.xlane.xlu0 %2961
  %2963 = vmax.xlane.f32.xlu0 %v2897
  %v2964 = vpop.xlane.xlu0 %2963
  %2965 = vmax.xlane.f32.xlu0 %v2902
  %v2966 = vpop.xlane.xlu0 %2965
  %2967 = vmax.xlane.f32.xlu0 %v2907
  %v2968 = vpop.xlane.xlu0 %2967
  %2969 = vmax.xlane.f32.xlu0 %v2912
  %v2970 = vpop.xlane.xlu0 %2969
  %2971 = vmax.xlane.f32.xlu0 %v2917
  %v2972 = vpop.xlane.xlu0 %2971
  %2973 = vmax.xlane.f32.xlu0 %v2922
  %v2974 = vpop.xlane.xlu0 %2973
  %2975 = vmax.xlane.f32.xlu0 %v2927
  %v2976 = vpop.xlane.xlu0 %2975
  %2977 = vmax.xlane.f32.xlu0 %v2932
  %v2978 = vpop.xlane.xlu0 %2977
  %2979 = vmax.xlane.f32.xlu0 %v2937
  %v2980 = vpop.xlane.xlu0 %2979
  %2981 = vmax.xlane.f32.xlu0 %v2942
  %v2982 = vpop.xlane.xlu0 %2981
  %2983 = vmax.xlane.f32.xlu0 %v2947
  %v2984 = vpop.xlane.xlu0 %2983
  %2985 = vmax.xlane.f32.xlu0 %v2952
  %v2986 = vpop.xlane.xlu0 %2985
  %v2987 = vsub.f32 %v2877, %v2956
  %v2988 = vsub.f32 %v2882, %v2958
  %v2989 = vsub.f32 %v2887, %v2960
  %v2990 = vsub.f32 %v2892, %v2962
  %v2991 = vsub.f32 %v2897, %v2964
  %v2992 = vsub.f32 %v2902, %v2966
  %v2993 = vsub.f32 %v2907, %v2968
  %v2994 = vsub.f32 %v2912, %v2970
  %v2995 = vsub.f32 %v2917, %v2972
  %v2996 = vsub.f32 %v2922, %v2974
  %v2997 = vsub.f32 %v2927, %v2976
  %v2998 = vsub.f32 %v2932, %v2978
  %v2999 = vsub.f32 %v2937, %v2980
  %v3000 = vsub.f32 %v2942, %v2982
  %v3001 = vsub.f32 %v2947, %v2984
  %v3002 = vsub.f32 %v2952, %v2986
  %v3003 = vmul.f32 %v2987, 1.442695
  %v3004 = vpow.pop %v3003
  %v3005 = vmul.f32 %v2988, 1.442695
  %v3006 = vpow.pop %v3005
  %v3007 = vmul.f32 %v2989, 1.442695
  %v3008 = vpow.pop %v3007
  %v3009 = vmul.f32 %v2990, 1.442695
  %v3010 = vpow.pop %v3009
  %v3011 = vmul.f32 %v2991, 1.442695
  %v3012 = vpow.pop %v3011
  %v3013 = vmul.f32 %v2992, 1.442695
  %v3014 = vpow.pop %v3013
  %v3015 = vmul.f32 %v2993, 1.442695
  %v3016 = vpow.pop %v3015
  %v3017 = vmul.f32 %v2994, 1.442695
  %v3018 = vpow.pop %v3017
  %v3019 = vmul.f32 %v2995, 1.442695
  %v3020 = vpow.pop %v3019
  %v3021 = vmul.f32 %v2996, 1.442695
  %v3022 = vpow.pop %v3021
  %v3023 = vmul.f32 %v2997, 1.442695
  %v3024 = vpow.pop %v3023
  %v3025 = vmul.f32 %v2998, 1.442695
  %v3026 = vpow.pop %v3025
  %v3027 = vmul.f32 %v2999, 1.442695
  %v3028 = vpow.pop %v3027
  %v3029 = vmul.f32 %v3000, 1.442695
  %v3030 = vpow.pop %v3029
  %v3031 = vmul.f32 %v3001, 1.442695
  %v3032 = vpow.pop %v3031
  %v3033 = vmul.f32 %v3002, 1.442695
  %v3034 = vpow.pop %v3033
  %3035 = vadd.xlane.f32.xlu0 %v3004
  %v3036 = vpop.xlane.xlu0 %3035
  %3037 = vadd.xlane.f32.xlu0 %v3006
  %v3038 = vpop.xlane.xlu0 %3037
  %3039 = vadd.xlane.f32.xlu0 %v3008
  %v3040 = vpop.xlane.xlu0 %3039
  %3041 = vadd.xlane.f32.xlu0 %v3010
  %v3042 = vpop.xlane.xlu0 %3041
  %3043 = vadd.xlane.f32.xlu0 %v3012
  %v3044 = vpop.xlane.xlu0 %3043
  %3045 = vadd.xlane.f32.xlu0 %v3014
  %v3046 = vpop.xlane.xlu0 %3045
  %3047 = vadd.xlane.f32.xlu0 %v3016
  %v3048 = vpop.xlane.xlu0 %3047
  %3049 = vadd.xlane.f32.xlu0 %v3018
  %v3050 = vpop.xlane.xlu0 %3049
  %3051 = vadd.xlane.f32.xlu0 %v3020
  %v3052 = vpop.xlane.xlu0 %3051
  %3053 = vadd.xlane.f32.xlu0 %v3022
  %v3054 = vpop.xlane.xlu0 %3053
  %3055 = vadd.xlane.f32.xlu0 %v3024
  %v3056 = vpop.xlane.xlu0 %3055
  %3057 = vadd.xlane.f32.xlu0 %v3026
  %v3058 = vpop.xlane.xlu0 %3057
  %3059 = vadd.xlane.f32.xlu0 %v3028
  %v3060 = vpop.xlane.xlu0 %3059
  %3061 = vadd.xlane.f32.xlu0 %v3030
  %v3062 = vpop.xlane.xlu0 %3061
  %3063 = vadd.xlane.f32.xlu0 %v3032
  %v3064 = vpop.xlane.xlu0 %3063
  %3065 = vadd.xlane.f32.xlu0 %v3034
  %v3066 = vpop.xlane.xlu0 %3065
  %v3067 = vrcp.pop %v3036
  %v3068 = vrcp.pop %v3038
  %v3069 = vrcp.pop %v3040
  %v3070 = vrcp.pop %v3042
  %v3071 = vrcp.pop %v3044
  %v3072 = vrcp.pop %v3046
  %v3073 = vrcp.pop %v3048
  %v3074 = vrcp.pop %v3050
  %v3075 = vrcp.pop %v3052
  %v3076 = vrcp.pop %v3054
  %v3077 = vrcp.pop %v3056
  %v3078 = vrcp.pop %v3058
  %v3079 = vrcp.pop %v3060
  %v3080 = vrcp.pop %v3062
  %v3081 = vrcp.pop %v3064
  %v3082 = vrcp.pop %v3066
  %v3083 = vmul.f32 %v3004, %v3067
  %v3084 = vmul.f32 %v3006, %v3068
  %v3085 = vmul.f32 %v3008, %v3069
  %v3086 = vmul.f32 %v3010, %v3070
  %v3087 = vmul.f32 %v3012, %v3071
  %v3088 = vmul.f32 %v3014, %v3072
  %v3089 = vmul.f32 %v3016, %v3073
  %v3090 = vmul.f32 %v3018, %v3074
  %v3091 = vmul.f32 %v3020, %v3075
  %v3092 = vmul.f32 %v3022, %v3076
  %v3093 = vmul.f32 %v3024, %v3077
  %v3094 = vmul.f32 %v3026, %v3078
  %v3095 = vmul.f32 %v3028, %v3079
  %v3096 = vmul.f32 %v3030, %v3080
  %v3097 = vmul.f32 %v3032, %v3081
  %v3098 = vmul.f32 %v3034, %v3082
  %3099 = vmatprep.subr.mxu0 0.0
  %3100 = vmatpush1.msra.mxu0 %v35
  %3101 = vmatprep.subr.mxu0 0.0
  %3102 = vmatpush1.msra.mxu0 %v34
  %3103 = vmatprep.subr.mxu0 0.0
  %3104 = vmatpush1.msra.mxu0 %v33
  %3105 = vmatprep.subr.mxu0 0.0
  %3106 = vmatpush1.msra.mxu0 %v32
  %3107 = vmatprep.subr.mxu0 0.0
  %3108 = vmatpush1.msra.mxu0 %v31
  %3109 = vmatprep.subr.mxu0 0.0
  %3110 = vmatpush1.msra.mxu0 %v30
  %3111 = vmatprep.subr.mxu0 0.0
  %3112 = vmatpush1.msra.mxu0 %v29
  %3113 = vmatprep.subr.mxu0 0.0
  %3114 = vmatpush1.msra.mxu0 %v28
  %3115 = vmatprep.subr.mxu0 0.0
  %3116 = vmatpush1.msra.mxu0 %v27
  %3117 = vmatprep.subr.mxu0 0.0
  %3118 = vmatpush1.msra.mxu0 %v26
  %3119 = vmatprep.subr.mxu0 0.0
  %3120 = vmatpush1.msra.mxu0 %v25
  %3121 = vmatprep.subr.mxu0 0.0
  %3122 = vmatpush1.msra.mxu0 %v24
  %3123 = vmatprep.subr.mxu0 0.0
  %3124 = vmatpush1.msra.mxu0 %v23
  %3125 = vmatprep.subr.mxu0 0.0
  %3126 = vmatpush1.msra.mxu0 %v22
  %3127 = vmatprep.subr.mxu0 0.0
  %3128 = vmatpush1.msra.mxu0 %v21
  %3129 = vmatprep.subr.mxu0 0.0
  %3130 = vmatpush1.msra.mxu0 %v20
  %3131 = vmatprep.subr.mxu0 0.0
  %3132 = vmatpush2.msra.mxu0 0.0
  %3133 = vmatprep.subr.mxu0 0.0
  %3134 = vmatpush2.msra.mxu0 0.0
  %3135 = vmatprep.subr.mxu0 0.0
  %3136 = vmatpush2.msra.mxu0 0.0
  %3137 = vmatprep.subr.mxu0 0.0
  %3138 = vmatpush2.msra.mxu0 0.0
  %3139 = vmatprep.subr.mxu0 0.0
  %3140 = vmatpush2.msra.mxu0 0.0
  %3141 = vmatprep.subr.mxu0 0.0
  %3142 = vmatpush2.msra.mxu0 0.0
  %3143 = vmatprep.subr.mxu0 0.0
  %3144 = vmatpush2.msra.mxu0 0.0
  %3145 = vmatprep.subr.mxu0 0.0
  %3146 = vmatpush2.msra.mxu0 0.0
  %3147 = vmatprep.subr.mxu0 0.0
  %3148 = vmatpush2.msra.mxu0 0.0
  %3149 = vmatprep.subr.mxu0 0.0
  %3150 = vmatpush2.msra.mxu0 0.0
  %3151 = vmatprep.subr.mxu0 0.0
  %3152 = vmatpush2.msra.mxu0 0.0
  %3153 = vmatprep.subr.mxu0 0.0
  %3154 = vmatpush2.msra.mxu0 0.0
  %3155 = vmatprep.subr.mxu0 0.0
  %3156 = vmatpush2.msra.mxu0 0.0
  %3157 = vmatprep.subr.mxu0 0.0
  %3158 = vmatpush2.msra.mxu0 0.0
  %3159 = vmatprep.subr.mxu0 0.0
  %3160 = vmatpush2.msra.mxu0 0.0
  %3161 = vmatprep.subr.mxu0 0.0
  %3162 = vmatpush2.msra.mxu0 0.0
  %3163 = vmatprep.mubr.f32.mxu0 0.0
  %3164 = vmatmul.mubr.f32.gmra.mxu0 %v3083
  %v3165 = vpop.f32.mrf.mxu0
  %v3166 = vadd.f32 0.0, %v3165
  %v3167 = vpop.f32.mrf.mxu0
  %3168 = vmatprep.mubr.f32.mxu0 0.0
  %3169 = vmatmul.mubr.f32.gmra.mxu0 %v3084
  %v3170 = vpop.f32.mrf.mxu0
  %v3171 = vadd.f32 0.0, %v3170
  %v3172 = vpop.f32.mrf.mxu0
  %3173 = vmatprep.mubr.f32.mxu0 0.0
  %3174 = vmatmul.mubr.f32.gmra.mxu0 %v3085
  %v3175 = vpop.f32.mrf.mxu0
  %v3176 = vadd.f32 0.0, %v3175
  %v3177 = vpop.f32.mrf.mxu0
  %3178 = vmatprep.mubr.f32.mxu0 0.0
  %3179 = vmatmul.mubr.f32.gmra.mxu0 %v3086
  %v3180 = vpop.f32.mrf.mxu0
  %v3181 = vadd.f32 0.0, %v3180
  %v3182 = vpop.f32.mrf.mxu0
  %3183 = vmatprep.mubr.f32.mxu0 0.0
  %3184 = vmatmul.mubr.f32.gmra.mxu0 %v3087
  %v3185 = vpop.f32.mrf.mxu0
  %v3186 = vadd.f32 0.0, %v3185
  %v3187 = vpop.f32.mrf.mxu0
  %3188 = vmatprep.mubr.f32.mxu0 0.0
  %3189 = vmatmul.mubr.f32.gmra.mxu0 %v3088
  %v3190 = vpop.f32.mrf.mxu0
  %v3191 = vadd.f32 0.0, %v3190
  %v3192 = vpop.f32.mrf.mxu0
  %3193 = vmatprep.mubr.f32.mxu0 0.0
  %3194 = vmatmul.mubr.f32.gmra.mxu0 %v3089
  %v3195 = vpop.f32.mrf.mxu0
  %v3196 = vadd.f32 0.0, %v3195
  %v3197 = vpop.f32.mrf.mxu0
  %3198 = vmatprep.mubr.f32.mxu0 0.0
  %3199 = vmatmul.mubr.f32.gmra.mxu0 %v3090
  %v3200 = vpop.f32.mrf.mxu0
  %v3201 = vadd.f32 0.0, %v3200
  %v3202 = vpop.f32.mrf.mxu0
  %3203 = vmatprep.mubr.f32.mxu0 0.0
  %3204 = vmatmul.mubr.f32.gmra.mxu0 %v3091
  %v3205 = vpop.f32.mrf.mxu0
  %v3206 = vadd.f32 0.0, %v3205
  %v3207 = vpop.f32.mrf.mxu0
  %3208 = vmatprep.mubr.f32.mxu0 0.0
  %3209 = vmatmul.mubr.f32.gmra.mxu0 %v3092
  %v3210 = vpop.f32.mrf.mxu0
  %v3211 = vadd.f32 0.0, %v3210
  %v3212 = vpop.f32.mrf.mxu0
  %3213 = vmatprep.mubr.f32.mxu0 0.0
  %3214 = vmatmul.mubr.f32.gmra.mxu0 %v3093
  %v3215 = vpop.f32.mrf.mxu0
  %v3216 = vadd.f32 0.0, %v3215
  %v3217 = vpop.f32.mrf.mxu0
  %3218 = vmatprep.mubr.f32.mxu0 0.0
  %3219 = vmatmul.mubr.f32.gmra.mxu0 %v3094
  %v3220 = vpop.f32.mrf.mxu0
  %v3221 = vadd.f32 0.0, %v3220
  %v3222 = vpop.f32.mrf.mxu0
  %3223 = vmatprep.mubr.f32.mxu0 0.0
  %3224 = vmatmul.mubr.f32.gmra.mxu0 %v3095
  %v3225 = vpop.f32.mrf.mxu0
  %v3226 = vadd.f32 0.0, %v3225
  %v3227 = vpop.f32.mrf.mxu0
  %3228 = vmatprep.mubr.f32.mxu0 0.0
  %3229 = vmatmul.mubr.f32.gmra.mxu0 %v3096
  %v3230 = vpop.f32.mrf.mxu0
  %v3231 = vadd.f32 0.0, %v3230
  %v3232 = vpop.f32.mrf.mxu0
  %3233 = vmatprep.mubr.f32.mxu0 0.0
  %3234 = vmatmul.mubr.f32.gmra.mxu0 %v3097
  %v3235 = vpop.f32.mrf.mxu0
  %v3236 = vadd.f32 0.0, %v3235
  %v3237 = vpop.f32.mrf.mxu0
  %3238 = vmatprep.mubr.f32.mxu0 0.0
  %3239 = vmatmul.mubr.f32.gmra.mxu0 %v3098
  %v3240 = vpop.f32.mrf.mxu0
  %v3241 = vadd.f32 0.0, %v3240
  %v3242 = vpop.f32.mrf.mxu0
  %3243 = vdwg.mxu0
  %s3244 = scalar_lea.vmem %s3, 120
  %v3245 = vld [vmem:[%s3244] sm:$0xff]
  %v3246 = vld [vmem:[%s3244 + $0x8] sm:$0xff]
  %v3247 = vld [vmem:[%s3244 + $0x10] sm:$0xff]
  %v3248 = vld [vmem:[%s3244 + $0x18] sm:$0xff]
  %v3249 = vld [vmem:[%s3244 + $0x20] sm:$0xff]
  %v3251 = vsel %vm57, %v3166, 0
  %v3254 = vsel %vm57, %v3171, 0
  %v3257 = vsel %vm57, %v3176, 0
  %v3260 = vsel %vm57, %v3181, 0
  %v3263 = vsel %vm57, %v3186, 0
  %v3266 = vsel %vm57, %v3191, 0
  %v3269 = vsel %vm57, %v3196, 0
  %v3272 = vsel %vm57, %v3201, 0
  %v3275 = vsel %vm57, %v3206, 0
  %v3278 = vsel %vm57, %v3211, 0
  %v3281 = vsel %vm57, %v3216, 0
  %v3284 = vsel %vm57, %v3221, 0
  %v3287 = vsel %vm57, %v3226, 0
  %v3290 = vsel %vm57, %v3231, 0
  %v3293 = vsel %vm57, %v3236, 0
  %v3296 = vsel %vm57, %v3241, 0
  %3298 = vmatprep.subr.mxu0 0.0
  %3299 = vmatpush1.msra.mxu0 0.0
  %3300 = vmatprep.subr.mxu0 0.0
  %3301 = vmatpush1.msra.mxu0 0.0
  %3302 = vmatprep.subr.mxu0 0.0
  %3303 = vmatpush1.msra.mxu0 0.0
  %3304 = vmatprep.subr.mxu0 0.0
  %3305 = vmatpush1.msra.mxu0 0.0
  %3306 = vmatprep.subr.mxu0 0.0
  %3307 = vmatpush1.msra.mxu0 0.0
  %3308 = vmatprep.subr.mxu0 0.0
  %3309 = vmatpush1.msra.mxu0 0.0
  %3310 = vmatprep.subr.mxu0 0.0
  %3311 = vmatpush1.msra.mxu0 0.0
  %3312 = vmatprep.subr.mxu0 0.0
  %3313 = vmatpush1.msra.mxu0 0.0
  %3314 = vmatprep.subr.mxu0 0.0
  %3315 = vmatpush1.msra.mxu0 0.0
  %3316 = vmatprep.subr.mxu0 0.0
  %3317 = vmatpush1.msra.mxu0 0.0
  %3318 = vmatprep.subr.mxu0 0.0
  %3319 = vmatpush1.msra.mxu0 0.0
  %3320 = vmatprep.subr.mxu0 0.0
  %3321 = vmatpush1.msra.mxu0 %v3249
  %3322 = vmatprep.subr.mxu0 0.0
  %3323 = vmatpush1.msra.mxu0 %v3248
  %3324 = vmatprep.subr.mxu0 0.0
  %3325 = vmatpush1.msra.mxu0 %v3247
  %3326 = vmatprep.subr.mxu0 0.0
  %3327 = vmatpush1.msra.mxu0 %v3246
  %3328 = vmatprep.subr.mxu0 0.0
  %3329 = vmatpush1.msra.mxu0 %v3245
  %3330 = vmatprep.subr.mxu0 0.0
  %3331 = vmatpush2.msra.mxu0 0.0
  %3332 = vmatprep.subr.mxu0 0.0
  %3333 = vmatpush2.msra.mxu0 0.0
  %3334 = vmatprep.subr.mxu0 0.0
  %3335 = vmatpush2.msra.mxu0 0.0
  %3336 = vmatprep.subr.mxu0 0.0
  %3337 = vmatpush2.msra.mxu0 0.0
  %3338 = vmatprep.subr.mxu0 0.0
  %3339 = vmatpush2.msra.mxu0 0.0
  %3340 = vmatprep.subr.mxu0 0.0
  %3341 = vmatpush2.msra.mxu0 0.0
  %3342 = vmatprep.subr.mxu0 0.0
  %3343 = vmatpush2.msra.mxu0 0.0
  %3344 = vmatprep.subr.mxu0 0.0
  %3345 = vmatpush2.msra.mxu0 0.0
  %3346 = vmatprep.subr.mxu0 0.0
  %3347 = vmatpush2.msra.mxu0 0.0
  %3348 = vmatprep.subr.mxu0 0.0
  %3349 = vmatpush2.msra.mxu0 0.0
  %3350 = vmatprep.subr.mxu0 0.0
  %3351 = vmatpush2.msra.mxu0 0.0
  %3352 = vmatprep.subr.mxu0 0.0
  %3353 = vmatpush2.msra.mxu0 0.0
  %3354 = vmatprep.subr.mxu0 0.0
  %3355 = vmatpush2.msra.mxu0 0.0
  %3356 = vmatprep.subr.mxu0 0.0
  %3357 = vmatpush2.msra.mxu0 0.0
  %3358 = vmatprep.subr.mxu0 0.0
  %3359 = vmatpush2.msra.mxu0 0.0
  %3360 = vmatprep.subr.mxu0 0.0
  %3361 = vmatpush2.msra.mxu0 0.0
  %3362 = vmatprep.mubr.f32.mxu0 0.0
  %3363 = vmatmul.mubr.f32.gmra.mxu0 %v3251
  %v3364 = vpop.f32.mrf.mxu0
  %v3365 = vadd.f32 0.0, %v3364
  %v3366 = vpop.f32.mrf.mxu0
  %3367 = vmatprep.mubr.f32.mxu0 0.0
  %3368 = vmatmul.mubr.f32.gmra.mxu0 %v3254
  %v3369 = vpop.f32.mrf.mxu0
  %v3370 = vadd.f32 0.0, %v3369
  %v3371 = vpop.f32.mrf.mxu0
  %3372 = vmatprep.mubr.f32.mxu0 0.0
  %3373 = vmatmul.mubr.f32.gmra.mxu0 %v3257
  %v3374 = vpop.f32.mrf.mxu0
  %v3375 = vadd.f32 0.0, %v3374
  %v3376 = vpop.f32.mrf.mxu0
  %3377 = vmatprep.mubr.f32.mxu0 0.0
  %3378 = vmatmul.mubr.f32.gmra.mxu0 %v3260
  %v3379 = vpop.f32.mrf.mxu0
  %v3380 = vadd.f32 0.0, %v3379
  %v3381 = vpop.f32.mrf.mxu0
  %3382 = vmatprep.mubr.f32.mxu0 0.0
  %3383 = vmatmul.mubr.f32.gmra.mxu0 %v3263
  %v3384 = vpop.f32.mrf.mxu0
  %v3385 = vadd.f32 0.0, %v3384
  %v3386 = vpop.f32.mrf.mxu0
  %3387 = vmatprep.mubr.f32.mxu0 0.0
  %3388 = vmatmul.mubr.f32.gmra.mxu0 %v3266
  %v3389 = vpop.f32.mrf.mxu0
  %v3390 = vadd.f32 0.0, %v3389
  %v3391 = vpop.f32.mrf.mxu0
  %3392 = vmatprep.mubr.f32.mxu0 0.0
  %3393 = vmatmul.mubr.f32.gmra.mxu0 %v3269
  %v3394 = vpop.f32.mrf.mxu0
  %v3395 = vadd.f32 0.0, %v3394
  %v3396 = vpop.f32.mrf.mxu0
  %3397 = vmatprep.mubr.f32.mxu0 0.0
  %3398 = vmatmul.mubr.f32.gmra.mxu0 %v3272
  %v3399 = vpop.f32.mrf.mxu0
  %v3400 = vadd.f32 0.0, %v3399
  %v3401 = vpop.f32.mrf.mxu0
  %3402 = vmatprep.mubr.f32.mxu0 0.0
  %3403 = vmatmul.mubr.f32.gmra.mxu0 %v3275
  %v3404 = vpop.f32.mrf.mxu0
  %v3405 = vadd.f32 0.0, %v3404
  %v3406 = vpop.f32.mrf.mxu0
  %3407 = vmatprep.mubr.f32.mxu0 0.0
  %3408 = vmatmul.mubr.f32.gmra.mxu0 %v3278
  %v3409 = vpop.f32.mrf.mxu0
  %v3410 = vadd.f32 0.0, %v3409
  %v3411 = vpop.f32.mrf.mxu0
  %3412 = vmatprep.mubr.f32.mxu0 0.0
  %3413 = vmatmul.mubr.f32.gmra.mxu0 %v3281
  %v3414 = vpop.f32.mrf.mxu0
  %v3415 = vadd.f32 0.0, %v3414
  %v3416 = vpop.f32.mrf.mxu0
  %3417 = vmatprep.mubr.f32.mxu0 0.0
  %3418 = vmatmul.mubr.f32.gmra.mxu0 %v3284
  %v3419 = vpop.f32.mrf.mxu0
  %v3420 = vadd.f32 0.0, %v3419
  %v3421 = vpop.f32.mrf.mxu0
  %3422 = vmatprep.mubr.f32.mxu0 0.0
  %3423 = vmatmul.mubr.f32.gmra.mxu0 %v3287
  %v3424 = vpop.f32.mrf.mxu0
  %v3425 = vadd.f32 0.0, %v3424
  %v3426 = vpop.f32.mrf.mxu0
  %3427 = vmatprep.mubr.f32.mxu0 0.0
  %3428 = vmatmul.mubr.f32.gmra.mxu0 %v3290
  %v3429 = vpop.f32.mrf.mxu0
  %v3430 = vadd.f32 0.0, %v3429
  %v3431 = vpop.f32.mrf.mxu0
  %3432 = vmatprep.mubr.f32.mxu0 0.0
  %3433 = vmatmul.mubr.f32.gmra.mxu0 %v3293
  %v3434 = vpop.f32.mrf.mxu0
  %v3435 = vadd.f32 0.0, %v3434
  %v3436 = vpop.f32.mrf.mxu0
  %3437 = vmatprep.mubr.f32.mxu0 0.0
  %3438 = vmatmul.mubr.f32.gmra.mxu0 %v3296
  %v3439 = vpop.f32.mrf.mxu0
  %v3440 = vadd.f32 0.0, %v3439
  %v3441 = vpop.f32.mrf.mxu0
  %3442 = vdwg.mxu0
  %v3443 = vadd.f32 %v2595, %v3365
  %v3444 = vadd.f32 %v2596, %v3370
  %v3445 = vadd.f32 %v2597, %v3375
  %v3446 = vadd.f32 %v2598, %v3380
  %v3447 = vadd.f32 %v2599, %v3385
  %v3448 = vadd.f32 %v2600, %v3390
  %v3449 = vadd.f32 %v2601, %v3395
  %v3450 = vadd.f32 %v2602, %v3400
  %v3451 = vadd.f32 %v2603, %v3405
  %v3452 = vadd.f32 %v2604, %v3410
  %v3453 = vadd.f32 %v2605, %v3415
  %v3454 = vadd.f32 %v2606, %v3420
  %v3455 = vadd.f32 %v2607, %v3425
  %v3456 = vadd.f32 %v2608, %v3430
  %v3457 = vadd.f32 %v2609, %v3435
  %v3458 = vadd.f32 %v2610, %v3440
  %v3459 = vld [vmem:[%s4] sm:$0x1]
  %v3461 = vlaneseq
  %v3462 = vshrl.u32 %v3461, 7
  %v3463 = vsub.s32 0, %v3462
  %v3464 = vrot.slane %v3459, %v3463
  %v3466 = vadd.f32 %v3443, %v3464
  %v3467 = vadd.f32 %v3444, %v3464
  %v3468 = vadd.f32 %v3445, %v3464
  %v3469 = vadd.f32 %v3446, %v3464
  %v3470 = vadd.f32 %v3447, %v3464
  %v3471 = vadd.f32 %v3448, %v3464
  %v3472 = vadd.f32 %v3449, %v3464
  %v3473 = vadd.f32 %v3450, %v3464
  %v3474 = vadd.f32 %v3451, %v3464
  %v3475 = vadd.f32 %v3452, %v3464
  %v3476 = vadd.f32 %v3453, %v3464
  %v3477 = vadd.f32 %v3454, %v3464
  %v3478 = vadd.f32 %v3455, %v3464
  %v3479 = vadd.f32 %v3456, %v3464
  %v3480 = vadd.f32 %v3457, %v3464
  %v3481 = vadd.f32 %v3458, %v3464
  %vm3482 = vcmask 261120
  %3483 = vst.msk [vmem:[%s5] sm:$0xff] %vm3482, %v3466
  %3484 = vst.msk [vmem:[%s5 + $0x8] sm:$0xff] %vm3482, %v3467
  %3485 = vst.msk [vmem:[%s5 + $0x10] sm:$0xff] %vm3482, %v3468
  %3486 = vst.msk [vmem:[%s5 + $0x18] sm:$0xff] %vm3482, %v3469
  %3487 = vst.msk [vmem:[%s5 + $0x20] sm:$0xff] %vm3482, %v3470
  %3488 = vst.msk [vmem:[%s5 + $0x28] sm:$0xff] %vm3482, %v3471
  %3489 = vst.msk [vmem:[%s5 + $0x30] sm:$0xff] %vm3482, %v3472
  %3490 = vst.msk [vmem:[%s5 + $0x38] sm:$0xff] %vm3482, %v3473
  %3491 = vst.msk [vmem:[%s5 + $0x40] sm:$0xff] %vm3482, %v3474
  %3492 = vst.msk [vmem:[%s5 + $0x48] sm:$0xff] %vm3482, %v3475
  %3493 = vst.msk [vmem:[%s5 + $0x50] sm:$0xff] %vm3482, %v3476
  %3494 = vst.msk [vmem:[%s5 + $0x58] sm:$0xff] %vm3482, %v3477
  %3495 = vst.msk [vmem:[%s5 + $0x60] sm:$0xff] %vm3482, %v3478
  %3496 = vst.msk [vmem:[%s5 + $0x68] sm:$0xff] %vm3482, %v3479
  %3497 = vst.msk [vmem:[%s5 + $0x70] sm:$0xff] %vm3482, %v3480
  %3498 = vst.msk [vmem:[%s5 + $0x78] sm:$0xff] %vm3482, %v3481
  // Predicated region
  $region22: #{apply.1} parent=0 // pred_check
    _
  $region23: #{apply.1} parent=0 // pred_check_branch
    %3500 = sbr.rel (0) target = $region25
  $region24: #{apply.1} parent=0 // pred_region
    _
  $region25: #{apply.1} parent=0 // pred_fallthru
    _
  // Predicated region
  $region26: #{apply.1} parent=0 // pred_check
    _
  $region27: #{apply.1} parent=0 // pred_check_branch
    %3502 = sbr.rel (0) target = $region29
  $region28: #{apply.1} parent=0 // pred_region
    _
  $region29: #{apply.1} parent=0 // pred_fallthru
    _

</llo_original>
